<compile_context>
chip_gen: v7x
topology: tpu7x:2x2x1
jax: 0.10.0
libtpu: 0.0.40
codegen_flags: <defaults>
</compile_context>

<pallas_src>
import functools

import jax
import jax.numpy as jnp
from jax import lax
from jax.experimental import pallas as pl
from jax.experimental.pallas import tpu as pltpu


# Packed parameter order (all grid-invariant, placed whole in VMEM):
PACKED_ORDER = (
    "vecs",       # (9, D)  f32: ln_sa g/b, ln_ca g/b, ln_ff g/b, bo_sa, bo_ca, b2
    "mask_sa",    # (Tb, Tb) f32 additive causal mask (0 / -1e30), built once on host
    "w_qkv_sa",   # (D, 3D) bf16 fused q|k|v self-attn weights (q pre-scaled by 1/sqrt(dh))
    "b_qkv_sa",   # (1, 3D) f32  fused q|k|v self-attn biases (q pre-scaled)
    "wo_sa",      # (D, D)  bf16 self-attn output projection
    "w_q_ca",     # (D, D)  bf16 cross-attn q weight (pre-scaled)
    "w_kv_ca",    # (D, 2D) bf16 fused k|v cross-attn weights
    "b_ca",       # (1, 3D) f32  q|k|v cross-attn biases (q pre-scaled)
    "wo_ca",      # (D, D)  bf16 cross-attn output projection
    "w1",         # (D, F)  bf16
    "b1",         # (1, F)  f32
    "w2",         # (F, D)  bf16
)


# ----------------------------- in-kernel math ------------------------------ #

def _layernorm(x, g, b, eps=1e-5):
    # x: (T, D) f32, g/b: (1, D) f32 -- statistics kept in f32.
    mu = jnp.mean(x, axis=-1, keepdims=True)
    xc = x - mu
    var = jnp.mean(xc * xc, axis=-1, keepdims=True)
    return xc * lax.rsqrt(var + eps) * g + b


def _attention_core(q, k, v, w_o, b_o, num_heads, mask, recip):
    """Head-batched softmax attention + single full-width output projection.

    q/k/v: (T*, D) f32, already projected (q already scaled by 1/sqrt(dh)).
    w_o:   (D, D) bf16, b_o: (1, D) f32.
    """
    Tq, D = q.shape
    Tk = k.shape[0]
    dh = D // num_heads

    # Split heads: (T, D) -> (H, T, dh) (sublane re-layout only, lanes stay dh).
    qh = q.astype(jnp.bfloat16).reshape(Tq, num_heads, dh).transpose(1, 0, 2)
    kh = k.astype(jnp.bfloat16).reshape(Tk, num_heads, dh).transpose(1, 0, 2)
    vh = v.astype(jnp.bfloat16).reshape(Tk, num_heads, dh).transpose(1, 0, 2)

    # Scores: (H, Tq, dh) x (H, Tk, dh) -> (H, Tq, Tk); f32 accumulate on MXU.
    # TODO(synk): verify with pl.lower_as_mlir that Mosaic takes the
    # transposed-RHS matmul path here rather than an XLU transpose of k.
    s = jnp.einsum("hqe,hke->hqk", qh, kh, preferred_element_type=jnp.float32)
    if mask is not None:
        s = s + mask                    # (Tq, Tk) additive mask, broadcast over heads

    s = s - jnp.max(s, axis=-1, keepdims=True)
    p = jnp.exp(s)
    p = p * recip(jnp.sum(p, axis=-1, keepdims=True))

    # Context: (H, Tq, Tk) x (H, Tk, dh) -> (H, Tq, dh).
    o = jnp.einsum("hqk,hke->hqe", p.astype(jnp.bfloat16), vh,
                   preferred_element_type=jnp.float32)
    # Concatenate heads on the lane axis; ONE (Tq, D) @ (D, D) output projection.
    o_flat = o.transpose(1, 0, 2).reshape(Tq, D).astype(jnp.bfloat16)
    return jnp.dot(o_flat, w_o, preferred_element_type=jnp.float32) + b_o


def _decoder_block_math(x, cond, pk, *, num_heads, recip):
    # x: (T, D) f32, cond: (S, D) f32; pk: packed params (see pack_params).
    vecs = pk["vecs"]
    T, D = x.shape

    # --- sublayer 1: causal self-attention (fused QKV projection) ---
    xn = _layernorm(x, vecs[0:1], vecs[1:2])
    qkv = jnp.dot(xn.astype(jnp.bfloat16), pk["w_qkv_sa"],
                  preferred_element_type=jnp.float32) + pk["b_qkv_sa"]
    x = x + _attention_core(qkv[:, :D], qkv[:, D:2 * D], qkv[:, 2 * D:],
                            pk["wo_sa"], vecs[6:7], num_heads,
                            mask=pk["mask_sa"][:T, :T], recip=recip)

    # --- sublayer 2: cross-attention (kv = raw cond; fused KV projection) ---
    xn = _layernorm(x, vecs[2:3], vecs[3:4])
    b_ca = pk["b_ca"]
    q = jnp.dot(xn.astype(jnp.bfloat16), pk["w_q_ca"],
                preferred_element_type=jnp.float32) + b_ca[:, :D]
    kv = jnp.dot(cond.astype(jnp.bfloat16), pk["w_kv_ca"],
                 preferred_element_type=jnp.float32) + b_ca[:, D:]
    x = x + _attention_core(q, kv[:, :D], kv[:, D:], pk["wo_ca"], vecs[7:8],
                            num_heads, mask=None, recip=recip)

    # --- sublayer 3: positionwise feed-forward ---
    xn = _layernorm(x, vecs[4:5], vecs[5:6])
    h = jnp.dot(xn.astype(jnp.bfloat16), pk["w1"],
                preferred_element_type=jnp.float32) + pk["b1"]
    h = jax.nn.gelu(h, approximate=True)
    x = x + (jnp.dot(h.astype(jnp.bfloat16), pk["w2"],
                     preferred_element_type=jnp.float32) + vecs[8:9])
    return x


# ------------------------------- Pallas kernel ----------------------------- #

def _decoder_block_kernel(x_ref, cond_ref, *refs, num_heads):
    param_refs, o_ref = refs[:-1], refs[-1]
    pk = {name: r[...] for name, r in zip(PACKED_ORDER, param_refs)}
    o_ref[0] = _decoder_block_math(
        x_ref[0], cond_ref[0], pk, num_heads=num_heads,
        recip=lambda d: pl.reciprocal(d, approx=True))


def _vmem_limit_bytes(T, S, D, F, H, param_bytes):
    """Explicit scoped-VMEM budget: pipelined activation blocks (x2 buffers),
    single-copy params, projection / score / FFN temporaries, with 2x margin."""
    f32 = 4
    act = 2 * f32 * (2 * T * D + S * D)          # x, out, cond blocks, double-buffered
    proj = f32 * 3 * (T + S) * D                 # fused projection outputs
    heads = 2 * 2 * 3 * (T + S) * D              # bf16 head-split copies, both attns
    scores = 4 * f32 * H * T * max(T, S)         # scores / probs / softmax temporaries
    ffn = 2 * f32 * T * F                        # FFN hidden + gelu
    est = 2 * (act + proj + heads + scores + ffn + param_bytes) + (4 << 20)
    return int(max(16 << 20, min(64 << 20, est)))   # clamp to v7x per-core VMEM


def decoder_block(x, cond, pk, num_heads):
    """x: (B, T, D) f32, cond: (B, S, D) f32 -> (B, T, D) f32."""
    B, T, D = x.shape
    S = cond.shape[1]
    F = pk["w1"].shape[1]
    param_list = [pk[k] for k in PACKED_ORDER]
    param_bytes = sum(int(p.size) * p.dtype.itemsize for p in param_list)

    in_specs = [
        pl.BlockSpec((1, T, D), lambda b: (b, 0, 0)),
        pl.BlockSpec((1, S, D), lambda b: (b, 0, 0)),
    ] + [
        # Grid-invariant parameters: whole array resident in VMEM once
        # (no double-buffering, no per-step DMA bookkeeping).
        pl.BlockSpec(memory_space=pltpu.MemorySpace.VMEM)
        for _ in param_list
    ]
    out_spec = pl.BlockSpec((1, T, D), lambda b: (b, 0, 0))

    # Advisory cost estimate for the XLA scheduler.
    flops = B * (
        8 * T * D * D + 4 * T * T * D                     # self-attn proj + core
        + 4 * T * D * D + 4 * S * D * D + 4 * T * S * D   # cross-attn proj + core
        + 4 * T * D * F                                   # feed-forward
    )
    transcendentals = B * (num_heads * T * (T + S) + T * F)
    bytes_accessed = int(2 * x.size * x.dtype.itemsize
                         + cond.size * cond.dtype.itemsize + param_bytes)

    kernel = functools.partial(_decoder_block_kernel, num_heads=num_heads)
    return pl.pallas_call(
        kernel,
        out_shape=jax.ShapeDtypeStruct((B, T, D), jnp.float32),
        # B=2 -> two "parallel" steps; on v7x one batch maps to each TensorCore.
        grid=(B,),
        in_specs=in_specs,
        out_specs=out_spec,
        compiler_params=pltpu.CompilerParams(
            dimension_semantics=("parallel",),
            vmem_limit_bytes=_vmem_limit_bytes(T, S, D, F, num_heads,
                                               param_bytes)),
        cost_estimate=pl.CostEstimate(
            flops=int(flops), transcendentals=int(transcendentals),
            bytes_accessed=bytes_accessed),
    )(x, cond, *param_list)


# ------------------------------ params / packing --------------------------- #

def init_params(key, dim_embed, dim_ff):
    keys = iter(jax.random.split(key, 64))

    def w(din, dout, scale=0.02):
        return jax.random.normal(next(keys), (din, dout), jnp.float32) * scale

    def b(dout, scale=0.01):
        return jax.random.normal(next(keys), (1, dout), jnp.float32) * scale

    def ln():
        g = 1.0 + 0.01 * jax.random.normal(next(keys), (1, dim_embed), jnp.float32)
        bb = 0.01 * jax.random.normal(next(keys), (1, dim_embed), jnp.float32)
        return g, bb

    p = {}
    p["ln_sa_g"], p["ln_sa_b"] = ln()
    for pre in ("q", "k", "v", "o"):
        p[f"w{pre}_sa"] = w(dim_embed, dim_embed)
        p[f"b{pre}_sa"] = b(dim_embed)
    p["ln_ca_g"], p["ln_ca_b"] = ln()
    for pre in ("q", "k", "v", "o"):
        p[f"w{pre}_ca"] = w(dim_embed, dim_embed)
        p[f"b{pre}_ca"] = b(dim_embed)
    p["ln_ff_g"], p["ln_ff_b"] = ln()
    p["w1"] = w(dim_embed, dim_ff)
    p["b1"] = b(dim_ff)
    p["w2"] = w(dim_ff, dim_embed)
    p["b2"] = b(dim_embed)
    return p


def pack_params(params, num_heads, block_size):
    """Consolidate the 26 raw tensors into 12 lane-dense arrays.

    * Q/K/V weights fused along the output (lane) axis; 1/sqrt(dh) folded
      into the Q weight/bias.  Head h occupies columns [h*dh:(h+1)*dh] of
      each D-wide chunk, matching the in-kernel head split / concat.
    * MXU weights in bf16; LN params / biases / mask stay f32.
    """
    D = params["wq_sa"].shape[0]
    dh = D // num_heads
    scale = 1.0 / float(dh) ** 0.5

    w_qkv_sa = jnp.concatenate(
        [params["wq_sa"] * scale, params["wk_sa"], params["wv_sa"]], axis=1)
    b_qkv_sa = jnp.concatenate(
        [params["bq_sa"] * scale, params["bk_sa"], params["bv_sa"]], axis=1)
    w_q_ca = params["wq_ca"] * scale
    w_kv_ca = jnp.concatenate([params["wk_ca"], params["wv_ca"]], axis=1)
    b_ca = jnp.concatenate(
        [params["bq_ca"] * scale, params["bk_ca"], params["bv_ca"]], axis=1)

    vecs = jnp.concatenate([
        params["ln_sa_g"], params["ln_sa_b"],
        params["ln_ca_g"], params["ln_ca_b"],
        params["ln_ff_g"], params["ln_ff_b"],
        params["bo_sa"], params["bo_ca"], params["b2"],
    ], axis=0)  # (9, D) f32

    # Additive causal mask, built once (hoisted out of the kernel hot path).
    row = jnp.arange(block_size)[:, None]
    col = jnp.arange(block_size)[None, :]
    mask_sa = jnp.where(row >= col, 0.0, -1e30).astype(jnp.float32)

    return dict(
        vecs=vecs,
        mask_sa=mask_sa,
        w_qkv_sa=w_qkv_sa.astype(jnp.bfloat16), b_qkv_sa=b_qkv_sa,
        wo_sa=params["wo_sa"].astype(jnp.bfloat16),
        w_q_ca=w_q_ca.astype(jnp.bfloat16),
        w_kv_ca=w_kv_ca.astype(jnp.bfloat16), b_ca=b_ca,
        wo_ca=params["wo_ca"].astype(jnp.bfloat16),
        w1=params["w1"].astype(jnp.bfloat16), b1=params["b1"],
        w2=params["w2"].astype(jnp.bfloat16),
    )


def reference(x, cond, pk, num_heads):
    f = lambda xb, cb: _decoder_block_math(
        xb, cb, pk, num_heads=num_heads, recip=lambda d: 1.0 / d)
    return jax.vmap(f)(x, cond)


# ----------------------------------- main ----------------------------------- #

if __name__ == "__main__":
    num_heads, dim_embed, block_size, dim_ff = 4, 32, 8, 64
    B, T, S = 2, 8, 16

    key = jax.random.PRNGKey(0)
    kx, kc, kp = jax.random.split(key, 3)
    x = jax.random.normal(kx, (B, T, dim_embed), jnp.float32)
    cond = jax.random.normal(kc, (B, S, dim_embed), jnp.float32)
    params = init_params(kp, dim_embed, dim_ff)
    pk = pack_params(params, num_heads, block_size)

    out = jax.block_until_ready(decoder_block(x, cond, pk, num_heads))
    ref = jax.block_until_ready(reference(x, cond, pk, num_heads))

    assert out.shape == (B, T, dim_embed)
    max_err = jnp.max(jnp.abs(out - ref))
    assert jnp.allclose(out, ref, atol=2e-3, rtol=2e-3), \
        f"max abs err = {max_err}"

    print("KERNEL_OK")
</pallas_src>

<mosaic_0001>
module attributes {stable_mosaic.version = 11 : i64} {
  func.func @_decoder_block_kernel(%arg0: i32, %arg1: memref<1x8x32xf32, #tpu.memory_space<vmem>>, %arg2: memref<1x16x32xf32, #tpu.memory_space<vmem>>, %arg3: memref<9x32xf32, #tpu.memory_space<vmem>>, %arg4: memref<8x8xf32, #tpu.memory_space<vmem>>, %arg5: memref<32x96xbf16, #tpu.memory_space<vmem>>, %arg6: memref<1x96xf32, #tpu.memory_space<vmem>>, %arg7: memref<32x32xbf16, #tpu.memory_space<vmem>>, %arg8: memref<32x32xbf16, #tpu.memory_space<vmem>>, %arg9: memref<32x64xbf16, #tpu.memory_space<vmem>>, %arg10: memref<1x96xf32, #tpu.memory_space<vmem>>, %arg11: memref<32x32xbf16, #tpu.memory_space<vmem>>, %arg12: memref<32x64xbf16, #tpu.memory_space<vmem>>, %arg13: memref<1x64xf32, #tpu.memory_space<vmem>>, %arg14: memref<64x32xbf16, #tpu.memory_space<vmem>>, %arg15: memref<1x8x32xf32, #tpu.memory_space<vmem>>) attributes {dimension_semantics = [#tpu.dimension_semantics<parallel>], iteration_bounds = array<i64: 2>, scalar_prefetch = 0 : i64, scratch_operands = 0 : i64, tpu.core_type = #tpu.core_type<tc>, window_params = [{transform_indices = @transform_0, window_bounds = array<i64: 1, 8, 32>}, {transform_indices = @transform_1, window_bounds = array<i64: 1, 16, 32>}, {pipeline_mode = #tpu.pipeline_mode<synchronous>, transform_indices = @transform_2, window_bounds = array<i64: 9, 32>}, {pipeline_mode = #tpu.pipeline_mode<synchronous>, transform_indices = @transform_3, window_bounds = array<i64: 8, 8>}, {pipeline_mode = #tpu.pipeline_mode<synchronous>, transform_indices = @transform_4, window_bounds = array<i64: 32, 96>}, {pipeline_mode = #tpu.pipeline_mode<synchronous>, transform_indices = @transform_5, window_bounds = array<i64: 1, 96>}, {pipeline_mode = #tpu.pipeline_mode<synchronous>, transform_indices = @transform_6, window_bounds = array<i64: 32, 32>}, {pipeline_mode = #tpu.pipeline_mode<synchronous>, transform_indices = @transform_7, window_bounds = array<i64: 32, 32>}, {pipeline_mode = #tpu.pipeline_mode<synchronous>, transform_indices = @transform_8, window_bounds = array<i64: 32, 64>}, {pipeline_mode = #tpu.pipeline_mode<synchronous>, transform_indices = @transform_9, window_bounds = array<i64: 1, 96>}, {pipeline_mode = #tpu.pipeline_mode<synchronous>, transform_indices = @transform_10, window_bounds = array<i64: 32, 32>}, {pipeline_mode = #tpu.pipeline_mode<synchronous>, transform_indices = @transform_11, window_bounds = array<i64: 32, 64>}, {pipeline_mode = #tpu.pipeline_mode<synchronous>, transform_indices = @transform_12, window_bounds = array<i64: 1, 64>}, {pipeline_mode = #tpu.pipeline_mode<synchronous>, transform_indices = @transform_13, window_bounds = array<i64: 64, 32>}, {transform_indices = @transform_14, window_bounds = array<i64: 1, 8, 32>}]} {
    %c0 = arith.constant 0 : index
    %c0_0 = arith.constant 0 : index
    %0 = vector.load %arg3[%c0, %c0_0] : memref<9x32xf32, #tpu.memory_space<vmem>>, vector<9x32xf32>
    %c0_1 = arith.constant 0 : index
    %c0_2 = arith.constant 0 : index
    %1 = vector.load %arg4[%c0_1, %c0_2] : memref<8x8xf32, #tpu.memory_space<vmem>>, vector<8x8xf32>
    %c0_3 = arith.constant 0 : index
    %c0_4 = arith.constant 0 : index
    %2 = vector.load %arg5[%c0_3, %c0_4] : memref<32x96xbf16, #tpu.memory_space<vmem>>, vector<32x96xbf16>
    %c0_5 = arith.constant 0 : index
    %c0_6 = arith.constant 0 : index
    %3 = vector.load %arg6[%c0_5, %c0_6] : memref<1x96xf32, #tpu.memory_space<vmem>>, vector<1x96xf32>
    %c0_7 = arith.constant 0 : index
    %c0_8 = arith.constant 0 : index
    %4 = vector.load %arg7[%c0_7, %c0_8] : memref<32x32xbf16, #tpu.memory_space<vmem>>, vector<32x32xbf16>
    %c0_9 = arith.constant 0 : index
    %c0_10 = arith.constant 0 : index
    %5 = vector.load %arg8[%c0_9, %c0_10] : memref<32x32xbf16, #tpu.memory_space<vmem>>, vector<32x32xbf16>
    %c0_11 = arith.constant 0 : index
    %c0_12 = arith.constant 0 : index
    %6 = vector.load %arg9[%c0_11, %c0_12] : memref<32x64xbf16, #tpu.memory_space<vmem>>, vector<32x64xbf16>
    %c0_13 = arith.constant 0 : index
    %c0_14 = arith.constant 0 : index
    %7 = vector.load %arg10[%c0_13, %c0_14] : memref<1x96xf32, #tpu.memory_space<vmem>>, vector<1x96xf32>
    %c0_15 = arith.constant 0 : index
    %c0_16 = arith.constant 0 : index
    %8 = vector.load %arg11[%c0_15, %c0_16] : memref<32x32xbf16, #tpu.memory_space<vmem>>, vector<32x32xbf16>
    %c0_17 = arith.constant 0 : index
    %c0_18 = arith.constant 0 : index
    %9 = vector.load %arg12[%c0_17, %c0_18] : memref<32x64xbf16, #tpu.memory_space<vmem>>, vector<32x64xbf16>
    %c0_19 = arith.constant 0 : index
    %c0_20 = arith.constant 0 : index
    %10 = vector.load %arg13[%c0_19, %c0_20] : memref<1x64xf32, #tpu.memory_space<vmem>>, vector<1x64xf32>
    %c0_21 = arith.constant 0 : index
    %c0_22 = arith.constant 0 : index
    %11 = vector.load %arg14[%c0_21, %c0_22] : memref<64x32xbf16, #tpu.memory_space<vmem>>, vector<64x32xbf16>
    %c0_23 = arith.constant 0 : index
    %c0_24 = arith.constant 0 : index
    %c0_25 = arith.constant 0 : index
    %12 = vector.load %arg1[%c0_23, %c0_24, %c0_25] : memref<1x8x32xf32, #tpu.memory_space<vmem>>, vector<1x8x32xf32>
    %13 = vector.shape_cast %12 : vector<1x8x32xf32> to vector<8x32xf32>
    %c0_26 = arith.constant 0 : index
    %c0_27 = arith.constant 0 : index
    %c0_28 = arith.constant 0 : index
    %14 = vector.load %arg2[%c0_26, %c0_27, %c0_28] : memref<1x16x32xf32, #tpu.memory_space<vmem>>, vector<1x16x32xf32>
    %15 = vector.shape_cast %14 : vector<1x16x32xf32> to vector<16x32xf32>
    %16 = vector.extract_strided_slice %0 {offsets = [0, 0], sizes = [1, 32], strides = [1, 1]} : vector<9x32xf32> to vector<1x32xf32>
    %17 = vector.extract_strided_slice %0 {offsets = [1, 0], sizes = [1, 32], strides = [1, 1]} : vector<9x32xf32> to vector<1x32xf32>
    %cst = arith.constant dense<0.000000e+00> : vector<8xf32>
    %18 = vector.multi_reduction <add>, %13, %cst [1] : vector<8x32xf32> to vector<8xf32>
    %19 = vector.shape_cast %18 : vector<8xf32> to vector<8x1xf32>
    %cst_29 = arith.constant 3.200000e+01 : f32
    %20 = vector.broadcast %cst_29 : f32 to vector<8x1xf32>
    %21 = arith.divf %19, %20 : vector<8x1xf32>
    %22 = vector.broadcast %21 : vector<8x1xf32> to vector<8x32xf32>
    %23 = arith.subf %13, %22 : vector<8x32xf32>
    %24 = arith.mulf %23, %23 : vector<8x32xf32>
    %cst_30 = arith.constant dense<0.000000e+00> : vector<8xf32>
    %25 = vector.multi_reduction <add>, %24, %cst_30 [1] : vector<8x32xf32> to vector<8xf32>
    %26 = vector.shape_cast %25 : vector<8xf32> to vector<8x1xf32>
    %cst_31 = arith.constant 3.200000e+01 : f32
    %27 = vector.broadcast %cst_31 : f32 to vector<8x1xf32>
    %28 = arith.divf %26, %27 : vector<8x1xf32>
    %cst_32 = arith.constant 9.99999974E-6 : f32
    %29 = vector.broadcast %cst_32 : f32 to vector<8x1xf32>
    %30 = arith.addf %28, %29 : vector<8x1xf32>
    %31 = math.rsqrt %30 : vector<8x1xf32>
    %32 = vector.broadcast %31 : vector<8x1xf32> to vector<8x32xf32>
    %33 = arith.mulf %23, %32 : vector<8x32xf32>
    %34 = vector.broadcast %16 : vector<1x32xf32> to vector<8x32xf32>
    %35 = arith.mulf %33, %34 : vector<8x32xf32>
    %36 = vector.broadcast %17 : vector<1x32xf32> to vector<8x32xf32>
    %37 = arith.addf %35, %36 : vector<8x32xf32>
    %38 = arith.truncf %37 : vector<8x32xf32> to vector<8x32xbf16>
    %cst_33 = arith.constant dense<0.000000e+00> : vector<8x96xf32>
    %39 = tpu.matmul %38, %2, %cst_33 {dimension_numbers = #tpu.dot_dimension_numbers<[1], [0], [0], [1], [0, 0, 1, 1], [], []>} : vector<8x32xbf16>, vector<32x96xbf16>, vector<8x96xf32> -> vector<8x96xf32>
    %40 = vector.broadcast %3 : vector<1x96xf32> to vector<8x96xf32>
    %41 = arith.addf %39, %40 : vector<8x96xf32>
    %42 = vector.extract_strided_slice %41 {offsets = [0, 0], sizes = [8, 32], strides = [1, 1]} : vector<8x96xf32> to vector<8x32xf32>
    %43 = vector.extract_strided_slice %41 {offsets = [0, 32], sizes = [8, 32], strides = [1, 1]} : vector<8x96xf32> to vector<8x32xf32>
    %44 = vector.extract_strided_slice %41 {offsets = [0, 64], sizes = [8, 32], strides = [1, 1]} : vector<8x96xf32> to vector<8x32xf32>
    %45 = vector.extract_strided_slice %0 {offsets = [6, 0], sizes = [1, 32], strides = [1, 1]} : vector<9x32xf32> to vector<1x32xf32>
    %46 = arith.truncf %42 : vector<8x32xf32> to vector<8x32xbf16>
    %47 = vector.shape_cast %46 : vector<8x32xbf16> to vector<8x4x8xbf16>
    %48 = tpu.transpose %47, [1, 0, 2] : vector<8x4x8xbf16> -> vector<4x8x8xbf16>
    %49 = arith.truncf %43 : vector<8x32xf32> to vector<8x32xbf16>
    %50 = vector.shape_cast %49 : vector<8x32xbf16> to vector<8x4x8xbf16>
    %51 = tpu.transpose %50, [1, 0, 2] : vector<8x4x8xbf16> -> vector<4x8x8xbf16>
    %52 = arith.truncf %44 : vector<8x32xf32> to vector<8x32xbf16>
    %53 = vector.shape_cast %52 : vector<8x32xbf16> to vector<8x4x8xbf16>
    %54 = tpu.transpose %53, [1, 0, 2] : vector<8x4x8xbf16> -> vector<4x8x8xbf16>
    "tpu.trace_start"() <{level = 10 : i32, message = "hqe,hke->hqk"}> : () -> ()
    %cst_34 = arith.constant dense<0.000000e+00> : vector<4x8x8xf32>
    %55 = tpu.matmul %48, %51, %cst_34 {dimension_numbers = #tpu.dot_dimension_numbers<[2], [2], [1], [1], [0, 0, 0, 1, 1, 1], [0], [0]>} : vector<4x8x8xbf16>, vector<4x8x8xbf16>, vector<4x8x8xf32> -> vector<4x8x8xf32>
    "tpu.trace_stop"() : () -> ()
    %56 = vector.shape_cast %1 : vector<8x8xf32> to vector<1x8x8xf32>
    %57 = vector.broadcast %56 : vector<1x8x8xf32> to vector<4x8x8xf32>
    %58 = arith.addf %55, %57 : vector<4x8x8xf32>
    %cst_35 = arith.constant dense<0xFF800000> : vector<4x8xf32>
    %59 = vector.multi_reduction <maximumf>, %58, %cst_35 [2] : vector<4x8x8xf32> to vector<4x8xf32>
    %60 = vector.shape_cast %59 : vector<4x8xf32> to vector<4x8x1xf32>
    %61 = vector.broadcast %60 : vector<4x8x1xf32> to vector<4x8x8xf32>
    %62 = arith.subf %58, %61 : vector<4x8x8xf32>
    %63 = math.exp %62 : vector<4x8x8xf32>
    %cst_36 = arith.constant dense<0.000000e+00> : vector<4x8xf32>
    %64 = vector.multi_reduction <add>, %63, %cst_36 [2] : vector<4x8x8xf32> to vector<4x8xf32>
    %65 = vector.shape_cast %64 : vector<4x8xf32> to vector<4x8x1xf32>
    %66 = tpu.reciprocal %65 {approx = true} : vector<4x8x1xf32> -> vector<4x8x1xf32>
    %67 = vector.broadcast %66 : vector<4x8x1xf32> to vector<4x8x8xf32>
    %68 = arith.mulf %63, %67 : vector<4x8x8xf32>
    %69 = arith.truncf %68 : vector<4x8x8xf32> to vector<4x8x8xbf16>
    "tpu.trace_start"() <{level = 10 : i32, message = "hqk,hke->hqe"}> : () -> ()
    %cst_37 = arith.constant dense<0.000000e+00> : vector<4x8x8xf32>
    %70 = tpu.matmul %69, %54, %cst_37 {dimension_numbers = #tpu.dot_dimension_numbers<[2], [1], [1], [2], [0, 0, 0, 1, 1, 2], [0], [0]>} : vector<4x8x8xbf16>, vector<4x8x8xbf16>, vector<4x8x8xf32> -> vector<4x8x8xf32>
    "tpu.trace_stop"() : () -> ()
    %71 = tpu.transpose %70, [1, 0, 2] : vector<4x8x8xf32> -> vector<8x4x8xf32>
    %72 = vector.shape_cast %71 : vector<8x4x8xf32> to vector<8x32xf32>
    %73 = arith.truncf %72 : vector<8x32xf32> to vector<8x32xbf16>
    %cst_38 = arith.constant dense<0.000000e+00> : vector<8x32xf32>
    %74 = tpu.matmul %73, %4, %cst_38 {dimension_numbers = #tpu.dot_dimension_numbers<[1], [0], [0], [1], [0, 0, 1, 1], [], []>} : vector<8x32xbf16>, vector<32x32xbf16>, vector<8x32xf32> -> vector<8x32xf32>
    %75 = vector.broadcast %45 : vector<1x32xf32> to vector<8x32xf32>
    %76 = arith.addf %74, %75 : vector<8x32xf32>
    %77 = arith.addf %13, %76 : vector<8x32xf32>
    %78 = vector.extract_strided_slice %0 {offsets = [2, 0], sizes = [1, 32], strides = [1, 1]} : vector<9x32xf32> to vector<1x32xf32>
    %79 = vector.extract_strided_slice %0 {offsets = [3, 0], sizes = [1, 32], strides = [1, 1]} : vector<9x32xf32> to vector<1x32xf32>
    %cst_39 = arith.constant dense<0.000000e+00> : vector<8xf32>
    %80 = vector.multi_reduction <add>, %77, %cst_39 [1] : vector<8x32xf32> to vector<8xf32>
    %81 = vector.shape_cast %80 : vector<8xf32> to vector<8x1xf32>
    %cst_40 = arith.constant 3.200000e+01 : f32
    %82 = vector.broadcast %cst_40 : f32 to vector<8x1xf32>
    %83 = arith.divf %81, %82 : vector<8x1xf32>
    %84 = vector.broadcast %83 : vector<8x1xf32> to vector<8x32xf32>
    %85 = arith.subf %77, %84 : vector<8x32xf32>
    %86 = arith.mulf %85, %85 : vector<8x32xf32>
    %cst_41 = arith.constant dense<0.000000e+00> : vector<8xf32>
    %87 = vector.multi_reduction <add>, %86, %cst_41 [1] : vector<8x32xf32> to vector<8xf32>
    %88 = vector.shape_cast %87 : vector<8xf32> to vector<8x1xf32>
    %cst_42 = arith.constant 3.200000e+01 : f32
    %89 = vector.broadcast %cst_42 : f32 to vector<8x1xf32>
    %90 = arith.divf %88, %89 : vector<8x1xf32>
    %cst_43 = arith.constant 9.99999974E-6 : f32
    %91 = vector.broadcast %cst_43 : f32 to vector<8x1xf32>
    %92 = arith.addf %90, %91 : vector<8x1xf32>
    %93 = math.rsqrt %92 : vector<8x1xf32>
    %94 = vector.broadcast %93 : vector<8x1xf32> to vector<8x32xf32>
    %95 = arith.mulf %85, %94 : vector<8x32xf32>
    %96 = vector.broadcast %78 : vector<1x32xf32> to vector<8x32xf32>
    %97 = arith.mulf %95, %96 : vector<8x32xf32>
    %98 = vector.broadcast %79 : vector<1x32xf32> to vector<8x32xf32>
    %99 = arith.addf %97, %98 : vector<8x32xf32>
    %100 = arith.truncf %99 : vector<8x32xf32> to vector<8x32xbf16>
    %cst_44 = arith.constant dense<0.000000e+00> : vector<8x32xf32>
    %101 = tpu.matmul %100, %5, %cst_44 {dimension_numbers = #tpu.dot_dimension_numbers<[1], [0], [0], [1], [0, 0, 1, 1], [], []>} : vector<8x32xbf16>, vector<32x32xbf16>, vector<8x32xf32> -> vector<8x32xf32>
    %102 = vector.extract_strided_slice %7 {offsets = [0, 0], sizes = [1, 32], strides = [1, 1]} : vector<1x96xf32> to vector<1x32xf32>
    %103 = vector.broadcast %102 : vector<1x32xf32> to vector<8x32xf32>
    %104 = arith.addf %101, %103 : vector<8x32xf32>
    %105 = arith.truncf %15 : vector<16x32xf32> to vector<16x32xbf16>
    %cst_45 = arith.constant dense<0.000000e+00> : vector<16x64xf32>
    %106 = tpu.matmul %105, %6, %cst_45 {dimension_numbers = #tpu.dot_dimension_numbers<[1], [0], [0], [1], [0, 0, 1, 1], [], []>} : vector<16x32xbf16>, vector<32x64xbf16>, vector<16x64xf32> -> vector<16x64xf32>
    %107 = vector.extract_strided_slice %7 {offsets = [0, 32], sizes = [1, 64], strides = [1, 1]} : vector<1x96xf32> to vector<1x64xf32>
    %108 = vector.broadcast %107 : vector<1x64xf32> to vector<16x64xf32>
    %109 = arith.addf %106, %108 : vector<16x64xf32>
    %110 = vector.extract_strided_slice %109 {offsets = [0, 0], sizes = [16, 32], strides = [1, 1]} : vector<16x64xf32> to vector<16x32xf32>
    %111 = vector.extract_strided_slice %109 {offsets = [0, 32], sizes = [16, 32], strides = [1, 1]} : vector<16x64xf32> to vector<16x32xf32>
    %112 = vector.extract_strided_slice %0 {offsets = [7, 0], sizes = [1, 32], strides = [1, 1]} : vector<9x32xf32> to vector<1x32xf32>
    %113 = arith.truncf %104 : vector<8x32xf32> to vector<8x32xbf16>
    %114 = vector.shape_cast %113 : vector<8x32xbf16> to vector<8x4x8xbf16>
    %115 = tpu.transpose %114, [1, 0, 2] : vector<8x4x8xbf16> -> vector<4x8x8xbf16>
    %116 = arith.truncf %110 : vector<16x32xf32> to vector<16x32xbf16>
    %117 = vector.shape_cast %116 : vector<16x32xbf16> to vector<16x4x8xbf16>
    %118 = tpu.transpose %117, [1, 0, 2] : vector<16x4x8xbf16> -> vector<4x16x8xbf16>
    %119 = arith.truncf %111 : vector<16x32xf32> to vector<16x32xbf16>
    %120 = vector.shape_cast %119 : vector<16x32xbf16> to vector<16x4x8xbf16>
    %121 = tpu.transpose %120, [1, 0, 2] : vector<16x4x8xbf16> -> vector<4x16x8xbf16>
    "tpu.trace_start"() <{level = 10 : i32, message = "hqe,hke->hqk"}> : () -> ()
    %cst_46 = arith.constant dense<0.000000e+00> : vector<4x8x16xf32>
    %122 = tpu.matmul %115, %118, %cst_46 {dimension_numbers = #tpu.dot_dimension_numbers<[2], [2], [1], [1], [0, 0, 0, 1, 1, 1], [0], [0]>} : vector<4x8x8xbf16>, vector<4x16x8xbf16>, vector<4x8x16xf32> -> vector<4x8x16xf32>
    "tpu.trace_stop"() : () -> ()
    %cst_47 = arith.constant dense<0xFF800000> : vector<4x8xf32>
    %123 = vector.multi_reduction <maximumf>, %122, %cst_47 [2] : vector<4x8x16xf32> to vector<4x8xf32>
    %124 = vector.shape_cast %123 : vector<4x8xf32> to vector<4x8x1xf32>
    %125 = vector.broadcast %124 : vector<4x8x1xf32> to vector<4x8x16xf32>
    %126 = arith.subf %122, %125 : vector<4x8x16xf32>
    %127 = math.exp %126 : vector<4x8x16xf32>
    %cst_48 = arith.constant dense<0.000000e+00> : vector<4x8xf32>
    %128 = vector.multi_reduction <add>, %127, %cst_48 [2] : vector<4x8x16xf32> to vector<4x8xf32>
    %129 = vector.shape_cast %128 : vector<4x8xf32> to vector<4x8x1xf32>
    %130 = tpu.reciprocal %129 {approx = true} : vector<4x8x1xf32> -> vector<4x8x1xf32>
    %131 = vector.broadcast %130 : vector<4x8x1xf32> to vector<4x8x16xf32>
    %132 = arith.mulf %127, %131 : vector<4x8x16xf32>
    %133 = arith.truncf %132 : vector<4x8x16xf32> to vector<4x8x16xbf16>
    "tpu.trace_start"() <{level = 10 : i32, message = "hqk,hke->hqe"}> : () -> ()
    %cst_49 = arith.constant dense<0.000000e+00> : vector<4x8x8xf32>
    %134 = tpu.matmul %133, %121, %cst_49 {dimension_numbers = #tpu.dot_dimension_numbers<[2], [1], [1], [2], [0, 0, 0, 1, 1, 2], [0], [0]>} : vector<4x8x16xbf16>, vector<4x16x8xbf16>, vector<4x8x8xf32> -> vector<4x8x8xf32>
    "tpu.trace_stop"() : () -> ()
    %135 = tpu.transpose %134, [1, 0, 2] : vector<4x8x8xf32> -> vector<8x4x8xf32>
    %136 = vector.shape_cast %135 : vector<8x4x8xf32> to vector<8x32xf32>
    %137 = arith.truncf %136 : vector<8x32xf32> to vector<8x32xbf16>
    %cst_50 = arith.constant dense<0.000000e+00> : vector<8x32xf32>
    %138 = tpu.matmul %137, %8, %cst_50 {dimension_numbers = #tpu.dot_dimension_numbers<[1], [0], [0], [1], [0, 0, 1, 1], [], []>} : vector<8x32xbf16>, vector<32x32xbf16>, vector<8x32xf32> -> vector<8x32xf32>
    %139 = vector.broadcast %112 : vector<1x32xf32> to vector<8x32xf32>
    %140 = arith.addf %138, %139 : vector<8x32xf32>
    %141 = arith.addf %77, %140 : vector<8x32xf32>
    %142 = vector.extract_strided_slice %0 {offsets = [4, 0], sizes = [1, 32], strides = [1, 1]} : vector<9x32xf32> to vector<1x32xf32>
    %143 = vector.extract_strided_slice %0 {offsets = [5, 0], sizes = [1, 32], strides = [1, 1]} : vector<9x32xf32> to vector<1x32xf32>
    %cst_51 = arith.constant dense<0.000000e+00> : vector<8xf32>
    %144 = vector.multi_reduction <add>, %141, %cst_51 [1] : vector<8x32xf32> to vector<8xf32>
    %145 = vector.shape_cast %144 : vector<8xf32> to vector<8x1xf32>
    %cst_52 = arith.constant 3.200000e+01 : f32
    %146 = vector.broadcast %cst_52 : f32 to vector<8x1xf32>
    %147 = arith.divf %145, %146 : vector<8x1xf32>
    %148 = vector.broadcast %147 : vector<8x1xf32> to vector<8x32xf32>
    %149 = arith.subf %141, %148 : vector<8x32xf32>
    %150 = arith.mulf %149, %149 : vector<8x32xf32>
    %cst_53 = arith.constant dense<0.000000e+00> : vector<8xf32>
    %151 = vector.multi_reduction <add>, %150, %cst_53 [1] : vector<8x32xf32> to vector<8xf32>
    %152 = vector.shape_cast %151 : vector<8xf32> to vector<8x1xf32>
    %cst_54 = arith.constant 3.200000e+01 : f32
    %153 = vector.broadcast %cst_54 : f32 to vector<8x1xf32>
    %154 = arith.divf %152, %153 : vector<8x1xf32>
    %cst_55 = arith.constant 9.99999974E-6 : f32
    %155 = vector.broadcast %cst_55 : f32 to vector<8x1xf32>
    %156 = arith.addf %154, %155 : vector<8x1xf32>
    %157 = math.rsqrt %156 : vector<8x1xf32>
    %158 = vector.broadcast %157 : vector<8x1xf32> to vector<8x32xf32>
    %159 = arith.mulf %149, %158 : vector<8x32xf32>
    %160 = vector.broadcast %142 : vector<1x32xf32> to vector<8x32xf32>
    %161 = arith.mulf %159, %160 : vector<8x32xf32>
    %162 = vector.broadcast %143 : vector<1x32xf32> to vector<8x32xf32>
    %163 = arith.addf %161, %162 : vector<8x32xf32>
    %164 = arith.truncf %163 : vector<8x32xf32> to vector<8x32xbf16>
    %cst_56 = arith.constant dense<0.000000e+00> : vector<8x64xf32>
    %165 = tpu.matmul %164, %9, %cst_56 {dimension_numbers = #tpu.dot_dimension_numbers<[1], [0], [0], [1], [0, 0, 1, 1], [], []>} : vector<8x32xbf16>, vector<32x64xbf16>, vector<8x64xf32> -> vector<8x64xf32>
    %166 = vector.broadcast %10 : vector<1x64xf32> to vector<8x64xf32>
    %167 = arith.addf %165, %166 : vector<8x64xf32>
    %168 = arith.mulf %167, %167 : vector<8x64xf32>
    %169 = arith.mulf %167, %168 : vector<8x64xf32>
    %cst_57 = arith.constant 4.471500e-02 : f32
    %170 = vector.broadcast %cst_57 : f32 to vector<8x64xf32>
    %171 = arith.mulf %170, %169 : vector<8x64xf32>
    %172 = arith.addf %167, %171 : vector<8x64xf32>
    %cst_58 = arith.constant 0.797884583 : f32
    %173 = vector.broadcast %cst_58 : f32 to vector<8x64xf32>
    %174 = arith.mulf %173, %172 : vector<8x64xf32>
    %175 = math.tanh %174 : vector<8x64xf32>
    %cst_59 = arith.constant 1.000000e+00 : f32
    %176 = vector.broadcast %cst_59 : f32 to vector<8x64xf32>
    %177 = arith.addf %176, %175 : vector<8x64xf32>
    %cst_60 = arith.constant 5.000000e-01 : f32
    %178 = vector.broadcast %cst_60 : f32 to vector<8x64xf32>
    %179 = arith.mulf %178, %177 : vector<8x64xf32>
    %180 = arith.mulf %167, %179 : vector<8x64xf32>
    %181 = arith.truncf %180 : vector<8x64xf32> to vector<8x64xbf16>
    %cst_61 = arith.constant dense<0.000000e+00> : vector<8x32xf32>
    %182 = tpu.matmul %181, %11, %cst_61 {dimension_numbers = #tpu.dot_dimension_numbers<[1], [0], [0], [1], [0, 0, 1, 1], [], []>} : vector<8x64xbf16>, vector<64x32xbf16>, vector<8x32xf32> -> vector<8x32xf32>
    %183 = vector.extract_strided_slice %0 {offsets = [8, 0], sizes = [1, 32], strides = [1, 1]} : vector<9x32xf32> to vector<1x32xf32>
    %184 = vector.broadcast %183 : vector<1x32xf32> to vector<8x32xf32>
    %185 = arith.addf %182, %184 : vector<8x32xf32>
    %186 = arith.addf %141, %185 : vector<8x32xf32>
    %c0_62 = arith.constant 0 : index
    %c0_63 = arith.constant 0 : index
    %c0_64 = arith.constant 0 : index
    %187 = vector.load %arg15[%c0_62, %c0_63, %c0_64] : memref<1x8x32xf32, #tpu.memory_space<vmem>>, vector<1x8x32xf32>
    %188 = vector.shape_cast %187 : vector<1x8x32xf32> to vector<8x32xf32>
    %189 = vector.shape_cast %186 : vector<8x32xf32> to vector<1x8x32xf32>
    tpu.vector_store %arg15[%c0_62, %c0_63, %c0_64], %189 {strides = array<i32>} : memref<1x8x32xf32, #tpu.memory_space<vmem>>, vector<1x8x32xf32>,
    return
  }
  func.func @transform_0(%arg0: i32) -> (i32, i32, i32) {
    %c0_i32 = arith.constant 0 : i32
    %c0_i32_0 = arith.constant 0 : i32
    %c0_i32_1 = arith.constant 0 : i32
    return %arg0, %c0_i32, %c0_i32_0 : i32, i32, i32
  }
  func.func @transform_1(%arg0: i32) -> (i32, i32, i32) {
    %c0_i32 = arith.constant 0 : i32
    %c0_i32_0 = arith.constant 0 : i32
    %c0_i32_1 = arith.constant 0 : i32
    return %arg0, %c0_i32, %c0_i32_0 : i32, i32, i32
  }
  func.func @transform_2(%arg0: i32) -> (i32, i32) {
    %c0_i32 = arith.constant 0 : i32
    %c0_i32_0 = arith.constant 0 : i32
    %c0_i32_1 = arith.constant 0 : i32
    return %c0_i32, %c0_i32_0 : i32, i32
  }
  func.func @transform_3(%arg0: i32) -> (i32, i32) {
    %c0_i32 = arith.constant 0 : i32
    %c0_i32_0 = arith.constant 0 : i32
    %c0_i32_1 = arith.constant 0 : i32
    return %c0_i32, %c0_i32_0 : i32, i32
  }
  func.func @transform_4(%arg0: i32) -> (i32, i32) {
    %c0_i32 = arith.constant 0 : i32
    %c0_i32_0 = arith.constant 0 : i32
    %c0_i32_1 = arith.constant 0 : i32
    return %c0_i32, %c0_i32_0 : i32, i32
  }
  func.func @transform_5(%arg0: i32) -> (i32, i32) {
    %c0_i32 = arith.constant 0 : i32
    %c0_i32_0 = arith.constant 0 : i32
    %c0_i32_1 = arith.constant 0 : i32
    return %c0_i32, %c0_i32_0 : i32, i32
  }
  func.func @transform_6(%arg0: i32) -> (i32, i32) {
    %c0_i32 = arith.constant 0 : i32
    %c0_i32_0 = arith.constant 0 : i32
    %c0_i32_1 = arith.constant 0 : i32
    return %c0_i32, %c0_i32_0 : i32, i32
  }
  func.func @transform_7(%arg0: i32) -> (i32, i32) {
    %c0_i32 = arith.constant 0 : i32
    %c0_i32_0 = arith.constant 0 : i32
    %c0_i32_1 = arith.constant 0 : i32
    return %c0_i32, %c0_i32_0 : i32, i32
  }
  func.func @transform_8(%arg0: i32) -> (i32, i32) {
    %c0_i32 = arith.constant 0 : i32
    %c0_i32_0 = arith.constant 0 : i32
    %c0_i32_1 = arith.constant 0 : i32
    return %c0_i32, %c0_i32_0 : i32, i32
  }
  func.func @transform_9(%arg0: i32) -> (i32, i32) {
    %c0_i32 = arith.constant 0 : i32
    %c0_i32_0 = arith.constant 0 : i32
    %c0_i32_1 = arith.constant 0 : i32
    return %c0_i32, %c0_i32_0 : i32, i32
  }
  func.func @transform_10(%arg0: i32) -> (i32, i32) {
    %c0_i32 = arith.constant 0 : i32
    %c0_i32_0 = arith.constant 0 : i32
    %c0_i32_1 = arith.constant 0 : i32
    return %c0_i32, %c0_i32_0 : i32, i32
  }
  func.func @transform_11(%arg0: i32) -> (i32, i32) {
    %c0_i32 = arith.constant 0 : i32
    %c0_i32_0 = arith.constant 0 : i32
    %c0_i32_1 = arith.constant 0 : i32
    return %c0_i32, %c0_i32_0 : i32, i32
  }
  func.func @transform_12(%arg0: i32) -> (i32, i32) {
    %c0_i32 = arith.constant 0 : i32
    %c0_i32_0 = arith.constant 0 : i32
    %c0_i32_1 = arith.constant 0 : i32
    return %c0_i32, %c0_i32_0 : i32, i32
  }
  func.func @transform_13(%arg0: i32) -> (i32, i32) {
    %c0_i32 = arith.constant 0 : i32
    %c0_i32_0 = arith.constant 0 : i32
    %c0_i32_1 = arith.constant 0 : i32
    return %c0_i32, %c0_i32_0 : i32, i32
  }
  func.func @transform_14(%arg0: i32) -> (i32, i32, i32) {
    %c0_i32 = arith.constant 0 : i32
    %c0_i32_0 = arith.constant 0 : i32
    %c0_i32_1 = arith.constant 0 : i32
    return %arg0, %c0_i32, %c0_i32_0 : i32, i32, i32
  }
}

</mosaic_0001>

<llo_original>
// kernel: tpu_custom_call.1
$region0: #{tpu_custom_call.1}
  #allocation0 [shape = 'u32[]', space=smem, size = 0x4, offset = 0x4, fixed_abs, tag = 'smem constant byte address 0x4 - core index']
  #allocation1 [shape = 'u32[144,128]{1,0:T(1,128)}', space=vmem, size = 0x12000, scoped, tag = 'internal scratch']
  %s0 = inlined_call_operand.vmem [shape: f32[2,8,32], index: 0, kind: input, shape index: {}]
  %s1 = inlined_call_operand.vmem [shape: f32[2,16,32], index: 1, kind: input, shape index: {}]
  %s2 = inlined_call_operand.hbm [shape: f32[9,32], index: 2, kind: input, shape index: {}]
  %s3 = inlined_call_operand.hbm [shape: f32[8,8], index: 3, kind: input, shape index: {}]
  %s4 = inlined_call_operand.hbm [shape: bf16[32,96], index: 4, kind: input, shape index: {}]
  %s5 = inlined_call_operand.vmem [shape: f32[1,96], index: 5, kind: input, shape index: {}]
  %s6 = inlined_call_operand.hbm [shape: bf16[32,32], index: 6, kind: input, shape index: {}]
  %s7 = inlined_call_operand.hbm [shape: bf16[32,32], index: 7, kind: input, shape index: {}]
  %s8 = inlined_call_operand.hbm [shape: bf16[32,64], index: 8, kind: input, shape index: {}]
  %s9 = inlined_call_operand.vmem [shape: f32[1,96], index: 9, kind: input, shape index: {}]
  %s10 = inlined_call_operand.vmem [shape: bf16[32,32], index: 10, kind: input, shape index: {}]
  %s11 = inlined_call_operand.hbm [shape: bf16[32,64], index: 11, kind: input, shape index: {}]
  %s12 = inlined_call_operand.vmem [shape: f32[1,64], index: 12, kind: input, shape index: {}]
  %s13 = inlined_call_operand.vmem [shape: bf16[64,32], index: 13, kind: input, shape index: {}]
  %s14 = inlined_call_operand.hbm [shape: f32[2,8,32], index: 14, kind: output, shape index: {}]
  %s15 = sld [smem:[#allocation0]]
  $region117: #{tpu_custom_call.1} parent=0
    _
  %s17 = ssub.s32 1, %s15
  %s18 = scalar_select 0, %s17, %s15
  $region1: #{tpu_custom_call.1} parent=0
    #allocation2 [shape = 'u8[8192]{0}', space=vmem, size = 0x2000, scoped, tag = 'input window, operand 2, single buffered']
    #allocation3 [shape = 's32[2]{0}', space=sflag, size = 0x8, scoped, tag = 'scoped memory for tpu_custom_call.1']
    #allocation4 [shape = 's32[2]{0}', space=sflag, size = 0x8, scoped, tag = 'scoped memory for tpu_custom_call.1']
    #allocation5 [shape = 'u8[4096]{0}', space=vmem, size = 0x1000, scoped, tag = 'input window, operand 3, single buffered']
    #allocation6 [shape = 's32[1]{0}', space=sflag, size = 0x4, scoped, tag = 'scoped memory for tpu_custom_call.1']
    #allocation7 [shape = 'u8[8192]{0}', space=vmem, size = 0x2000, scoped, tag = 'input window, operand 4, single buffered']
    #allocation8 [shape = 'u8[8192]{0}', space=vmem, size = 0x2000, scoped, tag = 'input window, operand 6, single buffered']
    #allocation9 [shape = 's32[1]{0}', space=sflag, size = 0x4, scoped, tag = 'scoped memory for tpu_custom_call.1']
    #allocation10 [shape = 'u8[8192]{0}', space=vmem, size = 0x2000, scoped, tag = 'input window, operand 7, single buffered']
    #allocation11 [shape = 'u8[8192]{0}', space=vmem, size = 0x2000, scoped, tag = 'input window, operand 8, single buffered']
    #allocation12 [shape = 's32[1]{0}', space=sflag, size = 0x4, scoped, tag = 'scoped memory for tpu_custom_call.1']
    #allocation13 [shape = 'u8[8192]{0}', space=vmem, size = 0x2000, scoped, tag = 'input window, operand 11, single buffered']
    #allocation14 [shape = 'u8[8192]{0}', space=vmem, size = 0x2000, scoped, tag = 'output window, operand 0']
    %19 = vsyncpa [#allocation3], 0
    %20 = vsyncpa [#allocation6], 0
    %21 = vsyncpa [#allocation9], 0
    %22 = vsyncpa [#allocation12], 0
    %23 = vsyncpa [#allocation4], 0
    %s24 = scalar_lea.sflag [#allocation4], 1
    %25 = vsyncpa %s24, 0
    loop: start=0, step=1, limit=4
    $region2: #{tpu_custom_call.1} parent=1 // loop_pre_header
      _
    $region3: #{tpu_custom_call.1} parent=1 // loop_header
      %s27 = sphi 0, %s31
      %p28 = scmp.ge.s32.totalorder %s27, 4
      %s37 = sphi 0, %s39
      %s40 = sphi 0, %s37
      %s41 = sphi 0, %s40
      %s57 = sphi 0, %s41
      %s63 = sphi 0, %s65
      %s66 = sphi 0, %s63
      %s67 = sphi 0, %s66
      %s83 = sphi 0, %s67
      %s87 = sphi 0, %s87
      %s89 = sphi 0, %s87
      %s90 = sphi 0, %s89
      %s104 = sphi 0, %s90
      %s108 = sphi 0, %s108
      %s110 = sphi 0, %s108
      %s111 = sphi 0, %s110
      %s125 = sphi 0, %s111
      %s129 = sphi 0, %s129
      %s131 = sphi 0, %s129
      %s132 = sphi 0, %s131
      %s146 = sphi 0, %s132
      %s150 = sphi 0, %s150
      %s152 = sphi 0, %s150
      %s153 = sphi 0, %s152
      %s167 = sphi 0, %s153
      %s171 = sphi 0, %s171
      %s173 = sphi 0, %s171
      %s174 = sphi 0, %s173
      %s188 = sphi 0, %s174
      %s192 = sphi 0, %s192
      %s194 = sphi 0, %s192
      %s195 = sphi 0, %s194
      %s209 = sphi 0, %s195
      %s213 = sphi 0, %s213
      %s215 = sphi 0, %s213
      %s216 = sphi 0, %s215
      %s230 = sphi 0, %s216
      %s234 = sphi 0, %s234
      %s236 = sphi 0, %s234
      %s237 = sphi 0, %s236
      %s251 = sphi 0, %s237
      %s255 = sphi 0, %s255
      %s257 = sphi 0, %s255
      %s258 = sphi 0, %s257
      %s272 = sphi 0, %s258
      %s276 = sphi 0, %s276
      %s278 = sphi 0, %s276
      %s279 = sphi 0, %s278
      %s293 = sphi 0, %s279
      %s297 = sphi 0, %s297
      %s299 = sphi 0, %s297
      %s300 = sphi 0, %s299
      %s314 = sphi 0, %s300
      %s318 = sphi 0, %s318
      %s320 = sphi 0, %s318
      %s321 = sphi 0, %s320
      %s335 = sphi 0, %s321
      %s341 = sphi 0, %s343
      %s344 = sphi 0, %s341
      %s345 = sphi 0, %s344
      %s361 = sphi 0, %s345
    $region4: #{tpu_custom_call.1} parent=1 // loop_header_branch
      %30 = sbr.rel (%p28) target = $region8
    $region5: #{tpu_custom_call.1} parent=1 // loop_body
      %s32 = ssub.s32 %s27, 1
      %s33 = ssub.s32 %s27, 2
      %s34 = sadd.s32 %s27, 1
      %s35 = ssub.s32 %s27, %s34
      %p36 = scmp.eq.s32.totalorder %s35, 0
      %s38 = sadd.s32 %s37, 1
      %s39 = scalar_select %p36, %s37, %s38
      %p42 = pneg %p36
      %p43 = scmp.eq.s32.totalorder %s27, 1
      %p44 = por %p42, %p43
      %p45 = scmp.ne.s32.totalorder %s37, %s40
      %p46 = scmp.eq.s32.totalorder %s27, 0
      %p47 = por %p45, %p46
      %p48 = scmp.ne.s32.totalorder %s37, %s40
      %p49 = scmp.eq.s32.totalorder %s32, 1
      %p50 = por %p48, %p49
      %p51 = scmp.ne.s32.totalorder %s40, %s41
      %p52 = scmp.eq.s32.totalorder %s32, 0
      %p53 = por %p51, %p52
      %p54 = scmp.ne.s32.totalorder %s40, %s41
      %p55 = scmp.eq.s32.totalorder %s33, 1
      %p56 = por %p54, %p55
      %p58 = scmp.ne.s32.totalorder %s41, %s57
      %p59 = scmp.eq.s32.totalorder %s33, 0
      %p60 = por %p58, %p59
      %s61 = ssub.s32 %s27, %s34
      %p62 = scmp.eq.s32.totalorder %s61, 0
      %s64 = sadd.s32 %s63, 1
      %s65 = scalar_select %p62, %s63, %s64
      %p68 = pneg %p62
      %p69 = scmp.eq.s32.totalorder %s27, 1
      %p70 = por %p68, %p69
      %p71 = scmp.ne.s32.totalorder %s63, %s66
      %p72 = scmp.eq.s32.totalorder %s27, 0
      %p73 = por %p71, %p72
      %p74 = scmp.ne.s32.totalorder %s63, %s66
      %p75 = scmp.eq.s32.totalorder %s32, 1
      %p76 = por %p74, %p75
      %p77 = scmp.ne.s32.totalorder %s66, %s67
      %p78 = scmp.eq.s32.totalorder %s32, 0
      %p79 = por %p77, %p78
      %p80 = scmp.ne.s32.totalorder %s66, %s67
      %p81 = scmp.eq.s32.totalorder %s33, 1
      %p82 = por %p80, %p81
      %p84 = scmp.ne.s32.totalorder %s67, %s83
      %p85 = scmp.eq.s32.totalorder %s33, 0
      %p86 = por %p84, %p85
      %s88 = sadd.s32 %s87, 1
      %p91 = scmp.eq.s32.totalorder %s27, 1
      %p92 = scmp.ne.s32.totalorder %s87, %s89
      %p93 = scmp.eq.s32.totalorder %s27, 0
      %p94 = por %p92, %p93
      %p95 = scmp.ne.s32.totalorder %s87, %s89
      %p96 = scmp.eq.s32.totalorder %s32, 1
      %p97 = por %p95, %p96
      %p98 = scmp.ne.s32.totalorder %s89, %s90
      %p99 = scmp.eq.s32.totalorder %s32, 0
      %p100 = por %p98, %p99
      %p101 = scmp.ne.s32.totalorder %s89, %s90
      %p102 = scmp.eq.s32.totalorder %s33, 1
      %p103 = por %p101, %p102
      %p105 = scmp.ne.s32.totalorder %s90, %s104
      %p106 = scmp.eq.s32.totalorder %s33, 0
      %p107 = por %p105, %p106
      %s109 = sadd.s32 %s108, 1
      %p112 = scmp.eq.s32.totalorder %s27, 1
      %p113 = scmp.ne.s32.totalorder %s108, %s110
      %p114 = scmp.eq.s32.totalorder %s27, 0
      %p115 = por %p113, %p114
      %p116 = scmp.ne.s32.totalorder %s108, %s110
      %p117 = scmp.eq.s32.totalorder %s32, 1
      %p118 = por %p116, %p117
      %p119 = scmp.ne.s32.totalorder %s110, %s111
      %p120 = scmp.eq.s32.totalorder %s32, 0
      %p121 = por %p119, %p120
      %p122 = scmp.ne.s32.totalorder %s110, %s111
      %p123 = scmp.eq.s32.totalorder %s33, 1
      %p124 = por %p122, %p123
      %p126 = scmp.ne.s32.totalorder %s111, %s125
      %p127 = scmp.eq.s32.totalorder %s33, 0
      %p128 = por %p126, %p127
      %s130 = sadd.s32 %s129, 1
      %p133 = scmp.eq.s32.totalorder %s27, 1
      %p134 = scmp.ne.s32.totalorder %s129, %s131
      %p135 = scmp.eq.s32.totalorder %s27, 0
      %p136 = por %p134, %p135
      %p137 = scmp.ne.s32.totalorder %s129, %s131
      %p138 = scmp.eq.s32.totalorder %s32, 1
      %p139 = por %p137, %p138
      %p140 = scmp.ne.s32.totalorder %s131, %s132
      %p141 = scmp.eq.s32.totalorder %s32, 0
      %p142 = por %p140, %p141
      %p143 = scmp.ne.s32.totalorder %s131, %s132
      %p144 = scmp.eq.s32.totalorder %s33, 1
      %p145 = por %p143, %p144
      %p147 = scmp.ne.s32.totalorder %s132, %s146
      %p148 = scmp.eq.s32.totalorder %s33, 0
      %p149 = por %p147, %p148
      %s151 = sadd.s32 %s150, 1
      %p154 = scmp.eq.s32.totalorder %s27, 1
      %p155 = scmp.ne.s32.totalorder %s150, %s152
      %p156 = scmp.eq.s32.totalorder %s27, 0
      %p157 = por %p155, %p156
      %p158 = scmp.ne.s32.totalorder %s150, %s152
      %p159 = scmp.eq.s32.totalorder %s32, 1
      %p160 = por %p158, %p159
      %p161 = scmp.ne.s32.totalorder %s152, %s153
      %p162 = scmp.eq.s32.totalorder %s32, 0
      %p163 = por %p161, %p162
      %p164 = scmp.ne.s32.totalorder %s152, %s153
      %p165 = scmp.eq.s32.totalorder %s33, 1
      %p166 = por %p164, %p165
      %p168 = scmp.ne.s32.totalorder %s153, %s167
      %p169 = scmp.eq.s32.totalorder %s33, 0
      %p170 = por %p168, %p169
      %s172 = sadd.s32 %s171, 1
      %p175 = scmp.eq.s32.totalorder %s27, 1
      %p176 = scmp.ne.s32.totalorder %s171, %s173
      %p177 = scmp.eq.s32.totalorder %s27, 0
      %p178 = por %p176, %p177
      %p179 = scmp.ne.s32.totalorder %s171, %s173
      %p180 = scmp.eq.s32.totalorder %s32, 1
      %p181 = por %p179, %p180
      %p182 = scmp.ne.s32.totalorder %s173, %s174
      %p183 = scmp.eq.s32.totalorder %s32, 0
      %p184 = por %p182, %p183
      %p185 = scmp.ne.s32.totalorder %s173, %s174
      %p186 = scmp.eq.s32.totalorder %s33, 1
      %p187 = por %p185, %p186
      %p189 = scmp.ne.s32.totalorder %s174, %s188
      %p190 = scmp.eq.s32.totalorder %s33, 0
      %p191 = por %p189, %p190
      %s193 = sadd.s32 %s192, 1
      %p196 = scmp.eq.s32.totalorder %s27, 1
      %p197 = scmp.ne.s32.totalorder %s192, %s194
      %p198 = scmp.eq.s32.totalorder %s27, 0
      %p199 = por %p197, %p198
      %p200 = scmp.ne.s32.totalorder %s192, %s194
      %p201 = scmp.eq.s32.totalorder %s32, 1
      %p202 = por %p200, %p201
      %p203 = scmp.ne.s32.totalorder %s194, %s195
      %p204 = scmp.eq.s32.totalorder %s32, 0
      %p205 = por %p203, %p204
      %p206 = scmp.ne.s32.totalorder %s194, %s195
      %p207 = scmp.eq.s32.totalorder %s33, 1
      %p208 = por %p206, %p207
      %p210 = scmp.ne.s32.totalorder %s195, %s209
      %p211 = scmp.eq.s32.totalorder %s33, 0
      %p212 = por %p210, %p211
      %s214 = sadd.s32 %s213, 1
      %p217 = scmp.eq.s32.totalorder %s27, 1
      %p218 = scmp.ne.s32.totalorder %s213, %s215
      %p219 = scmp.eq.s32.totalorder %s27, 0
      %p220 = por %p218, %p219
      %p221 = scmp.ne.s32.totalorder %s213, %s215
      %p222 = scmp.eq.s32.totalorder %s32, 1
      %p223 = por %p221, %p222
      %p224 = scmp.ne.s32.totalorder %s215, %s216
      %p225 = scmp.eq.s32.totalorder %s32, 0
      %p226 = por %p224, %p225
      %p227 = scmp.ne.s32.totalorder %s215, %s216
      %p228 = scmp.eq.s32.totalorder %s33, 1
      %p229 = por %p227, %p228
      %p231 = scmp.ne.s32.totalorder %s216, %s230
      %p232 = scmp.eq.s32.totalorder %s33, 0
      %p233 = por %p231, %p232
      %s235 = sadd.s32 %s234, 1
      %p238 = scmp.eq.s32.totalorder %s27, 1
      %p239 = scmp.ne.s32.totalorder %s234, %s236
      %p240 = scmp.eq.s32.totalorder %s27, 0
      %p241 = por %p239, %p240
      %p242 = scmp.ne.s32.totalorder %s234, %s236
      %p243 = scmp.eq.s32.totalorder %s32, 1
      %p244 = por %p242, %p243
      %p245 = scmp.ne.s32.totalorder %s236, %s237
      %p246 = scmp.eq.s32.totalorder %s32, 0
      %p247 = por %p245, %p246
      %p248 = scmp.ne.s32.totalorder %s236, %s237
      %p249 = scmp.eq.s32.totalorder %s33, 1
      %p250 = por %p248, %p249
      %p252 = scmp.ne.s32.totalorder %s237, %s251
      %p253 = scmp.eq.s32.totalorder %s33, 0
      %p254 = por %p252, %p253
      %s256 = sadd.s32 %s255, 1
      %p259 = scmp.eq.s32.totalorder %s27, 1
      %p260 = scmp.ne.s32.totalorder %s255, %s257
      %p261 = scmp.eq.s32.totalorder %s27, 0
      %p262 = por %p260, %p261
      %p263 = scmp.ne.s32.totalorder %s255, %s257
      %p264 = scmp.eq.s32.totalorder %s32, 1
      %p265 = por %p263, %p264
      %p266 = scmp.ne.s32.totalorder %s257, %s258
      %p267 = scmp.eq.s32.totalorder %s32, 0
      %p268 = por %p266, %p267
      %p269 = scmp.ne.s32.totalorder %s257, %s258
      %p270 = scmp.eq.s32.totalorder %s33, 1
      %p271 = por %p269, %p270
      %p273 = scmp.ne.s32.totalorder %s258, %s272
      %p274 = scmp.eq.s32.totalorder %s33, 0
      %p275 = por %p273, %p274
      %s277 = sadd.s32 %s276, 1
      %p280 = scmp.eq.s32.totalorder %s27, 1
      %p281 = scmp.ne.s32.totalorder %s276, %s278
      %p282 = scmp.eq.s32.totalorder %s27, 0
      %p283 = por %p281, %p282
      %p284 = scmp.ne.s32.totalorder %s276, %s278
      %p285 = scmp.eq.s32.totalorder %s32, 1
      %p286 = por %p284, %p285
      %p287 = scmp.ne.s32.totalorder %s278, %s279
      %p288 = scmp.eq.s32.totalorder %s32, 0
      %p289 = por %p287, %p288
      %p290 = scmp.ne.s32.totalorder %s278, %s279
      %p291 = scmp.eq.s32.totalorder %s33, 1
      %p292 = por %p290, %p291
      %p294 = scmp.ne.s32.totalorder %s279, %s293
      %p295 = scmp.eq.s32.totalorder %s33, 0
      %p296 = por %p294, %p295
      %s298 = sadd.s32 %s297, 1
      %p301 = scmp.eq.s32.totalorder %s27, 1
      %p302 = scmp.ne.s32.totalorder %s297, %s299
      %p303 = scmp.eq.s32.totalorder %s27, 0
      %p304 = por %p302, %p303
      %p305 = scmp.ne.s32.totalorder %s297, %s299
      %p306 = scmp.eq.s32.totalorder %s32, 1
      %p307 = por %p305, %p306
      %p308 = scmp.ne.s32.totalorder %s299, %s300
      %p309 = scmp.eq.s32.totalorder %s32, 0
      %p310 = por %p308, %p309
      %p311 = scmp.ne.s32.totalorder %s299, %s300
      %p312 = scmp.eq.s32.totalorder %s33, 1
      %p313 = por %p311, %p312
      %p315 = scmp.ne.s32.totalorder %s300, %s314
      %p316 = scmp.eq.s32.totalorder %s33, 0
      %p317 = por %p315, %p316
      %s319 = sadd.s32 %s318, 1
      %p322 = scmp.eq.s32.totalorder %s27, 1
      %p323 = scmp.ne.s32.totalorder %s318, %s320
      %p324 = scmp.eq.s32.totalorder %s27, 0
      %p325 = por %p323, %p324
      %p326 = scmp.ne.s32.totalorder %s318, %s320
      %p327 = scmp.eq.s32.totalorder %s32, 1
      %p328 = por %p326, %p327
      %p329 = scmp.ne.s32.totalorder %s320, %s321
      %p330 = scmp.eq.s32.totalorder %s32, 0
      %p331 = por %p329, %p330
      %p332 = scmp.ne.s32.totalorder %s320, %s321
      %p333 = scmp.eq.s32.totalorder %s33, 1
      %p334 = por %p332, %p333
      %p336 = scmp.ne.s32.totalorder %s321, %s335
      %p337 = scmp.eq.s32.totalorder %s33, 0
      %p338 = por %p336, %p337
      %s339 = ssub.s32 %s27, %s34
      %p340 = scmp.eq.s32.totalorder %s339, 0
      %s342 = sadd.s32 %s341, 1
      %s343 = scalar_select %p340, %s341, %s342
      %p346 = pneg %p340
      %p347 = scmp.eq.s32.totalorder %s27, 1
      %p348 = por %p346, %p347
      %p349 = scmp.ne.s32.totalorder %s341, %s344
      %p350 = scmp.eq.s32.totalorder %s27, 0
      %p351 = por %p349, %p350
      %p352 = scmp.ne.s32.totalorder %s341, %s344
      %p353 = scmp.eq.s32.totalorder %s32, 1
      %p354 = por %p352, %p353
      %p355 = scmp.ne.s32.totalorder %s344, %s345
      %p356 = scmp.eq.s32.totalorder %s32, 0
      %p357 = por %p355, %p356
      %p358 = scmp.ne.s32.totalorder %s344, %s345
      %p359 = scmp.eq.s32.totalorder %s33, 1
      %p360 = por %p358, %p359
      %p362 = scmp.ne.s32.totalorder %s345, %s361
      %p363 = scmp.eq.s32.totalorder %s33, 0
      %p364 = por %p362, %p363
      %p365 = scmp.le.s32.totalorder 1, %s27
      %p366 = scmp.lt.s32.totalorder %s27, 3
      %p367 = pnand %p365, %p366
      %p368 = pneg %p367
      // Predicated region
      $region9: #{tpu_custom_call.1} parent=5 // pred_check
        _
      $region10: #{tpu_custom_call.1} parent=5 // pred_check_branch
        %370 = sbr.rel (%p367) target = $region12
      $region11: #{tpu_custom_call.1} parent=5 // pred_region
        %s371 = ssub.s32 %s27, 1
        // Predicated region
        $region13: #{tpu_custom_call.1} parent=11 // pred_check
          %p372 = pneg %p100
        $region14: #{tpu_custom_call.1} parent=11 // pred_check_branch
          %374 = sbr.rel (%p372) target = $region16
        $region15: #{tpu_custom_call.1} parent=11 // pred_region
          %s376 = ssub.s32 256, 256
          %377 = vsyncadd [#allocation3], %s376
          %s378 = sshll.u32 [#allocation2], 4
          %s379 = int_to_ptr.vmem [resolvable:$true] %s378
          %384 = dma.hbm_to_vmem [thread:$0]  %s2, 256, %s379, [#allocation3], 128, 128, 8
        $region16: #{tpu_custom_call.1} parent=11 // pred_fallthru
          _
        // Predicated region
        $region17: #{tpu_custom_call.1} parent=11 // pred_check
          %p385 = pneg %p121
        $region18: #{tpu_custom_call.1} parent=11 // pred_check_branch
          %387 = sbr.rel (%p385) target = $region20
        $region19: #{tpu_custom_call.1} parent=11 // pred_region
          %s389 = ssub.s32 128, 128
          %390 = vsyncadd [#allocation6], %s389
          %s392 = sshll.u32 [#allocation5], 4
          %s393 = int_to_ptr.vmem [resolvable:$true] %s392
          %395 = dma.hbm_to_vmem [thread:$0]  %s3, 128, %s393, [#allocation6]
        $region20: #{tpu_custom_call.1} parent=11 // pred_fallthru
          _
        // Predicated region
        $region21: #{tpu_custom_call.1} parent=11 // pred_check
          %p396 = pneg %p142
        $region22: #{tpu_custom_call.1} parent=11 // pred_check_branch
          %398 = sbr.rel (%p396) target = $region24
        $region23: #{tpu_custom_call.1} parent=11 // pred_region
          %s400 = ssub.s32 256, 256
          %401 = vsyncadd [#allocation6], %s400
          %s402 = sshll.u32 [#allocation7], 4
          %s403 = int_to_ptr.vmem [resolvable:$true] %s402
          %408 = dma.hbm_to_vmem [thread:$0]  %s4, 256, %s403, [#allocation6], 64, 64, 4
        $region24: #{tpu_custom_call.1} parent=11 // pred_fallthru
          _
        // Predicated region
        $region25: #{tpu_custom_call.1} parent=11 // pred_check
          %p409 = pneg %p163
        $region26: #{tpu_custom_call.1} parent=11 // pred_check_branch
          %411 = sbr.rel (%p409) target = $region28
        $region27: #{tpu_custom_call.1} parent=11 // pred_region
          _
        $region28: #{tpu_custom_call.1} parent=11 // pred_fallthru
          _
        // Predicated region
        $region29: #{tpu_custom_call.1} parent=11 // pred_check
          %p412 = pneg %p184
        $region30: #{tpu_custom_call.1} parent=11 // pred_check_branch
          %414 = sbr.rel (%p412) target = $region32
        $region31: #{tpu_custom_call.1} parent=11 // pred_region
          %s416 = ssub.s32 256, 256
          %417 = vsyncadd [#allocation9], %s416
          %s418 = sshll.u32 [#allocation8], 4
          %s419 = int_to_ptr.vmem [resolvable:$true] %s418
          %424 = dma.hbm_to_vmem [thread:$0]  %s6, 256, %s419, [#allocation9], 64, 64, 4
        $region32: #{tpu_custom_call.1} parent=11 // pred_fallthru
          _
        // Predicated region
        $region33: #{tpu_custom_call.1} parent=11 // pred_check
          %p425 = pneg %p205
        $region34: #{tpu_custom_call.1} parent=11 // pred_check_branch
          %427 = sbr.rel (%p425) target = $region36
        $region35: #{tpu_custom_call.1} parent=11 // pred_region
          %s429 = ssub.s32 256, 256
          %430 = vsyncadd [#allocation9], %s429
          %s431 = sshll.u32 [#allocation10], 4
          %s432 = int_to_ptr.vmem [resolvable:$true] %s431
          %437 = dma.hbm_to_vmem [thread:$0]  %s7, 256, %s432, [#allocation9], 64, 64, 4
        $region36: #{tpu_custom_call.1} parent=11 // pred_fallthru
          _
        // Predicated region
        $region37: #{tpu_custom_call.1} parent=11 // pred_check
          %p438 = pneg %p226
        $region38: #{tpu_custom_call.1} parent=11 // pred_check_branch
          %440 = sbr.rel (%p438) target = $region40
        $region39: #{tpu_custom_call.1} parent=11 // pred_region
          %s442 = ssub.s32 256, 256
          %443 = vsyncadd [#allocation12], %s442
          %s444 = sshll.u32 [#allocation11], 4
          %s445 = int_to_ptr.vmem [resolvable:$true] %s444
          %450 = dma.hbm_to_vmem [thread:$0]  %s8, 256, %s445, [#allocation12], 64, 64, 4
        $region40: #{tpu_custom_call.1} parent=11 // pred_fallthru
          _
        // Predicated region
        $region41: #{tpu_custom_call.1} parent=11 // pred_check
          %p451 = pneg %p247
        $region42: #{tpu_custom_call.1} parent=11 // pred_check_branch
          %453 = sbr.rel (%p451) target = $region44
        $region43: #{tpu_custom_call.1} parent=11 // pred_region
          _
        $region44: #{tpu_custom_call.1} parent=11 // pred_fallthru
          _
        // Predicated region
        $region45: #{tpu_custom_call.1} parent=11 // pred_check
          %p454 = pneg %p268
        $region46: #{tpu_custom_call.1} parent=11 // pred_check_branch
          %456 = sbr.rel (%p454) target = $region48
        $region47: #{tpu_custom_call.1} parent=11 // pred_region
          _
        $region48: #{tpu_custom_call.1} parent=11 // pred_fallthru
          _
        // Predicated region
        $region49: #{tpu_custom_call.1} parent=11 // pred_check
          %p457 = pneg %p289
        $region50: #{tpu_custom_call.1} parent=11 // pred_check_branch
          %459 = sbr.rel (%p457) target = $region52
        $region51: #{tpu_custom_call.1} parent=11 // pred_region
          %s461 = ssub.s32 256, 256
          %462 = vsyncadd [#allocation12], %s461
          %s463 = sshll.u32 [#allocation13], 4
          %s464 = int_to_ptr.vmem [resolvable:$true] %s463
          %469 = dma.hbm_to_vmem [thread:$0]  %s11, 256, %s464, [#allocation12], 64, 64, 4
        $region52: #{tpu_custom_call.1} parent=11 // pred_fallthru
          _
        // Predicated region
        $region53: #{tpu_custom_call.1} parent=11 // pred_check
          %p470 = pneg %p310
        $region54: #{tpu_custom_call.1} parent=11 // pred_check_branch
          %472 = sbr.rel (%p470) target = $region56
        $region55: #{tpu_custom_call.1} parent=11 // pred_region
          _
        $region56: #{tpu_custom_call.1} parent=11 // pred_fallthru
          _
        // Predicated region
        $region57: #{tpu_custom_call.1} parent=11 // pred_check
          %p473 = pneg %p331
        $region58: #{tpu_custom_call.1} parent=11 // pred_check_branch
          %475 = sbr.rel (%p473) target = $region60
        $region59: #{tpu_custom_call.1} parent=11 // pred_region
          _
        $region60: #{tpu_custom_call.1} parent=11 // pred_fallthru
          _
      $region12: #{tpu_custom_call.1} parent=5 // pred_fallthru
        _
      %p476 = scmp.lt.s32.totalorder %s27, 2
      // Predicated region
      $region61: #{tpu_custom_call.1} parent=5 // pred_check
        %p477 = pneg %p476
      $region62: #{tpu_custom_call.1} parent=5 // pred_check_branch
        %479 = sbr.rel (%p477) target = $region64
      $region63: #{tpu_custom_call.1} parent=5 // pred_region
        // Predicated region
        $region65: #{tpu_custom_call.1} parent=63 // pred_check
          %p480 = pneg %p47
        $region66: #{tpu_custom_call.1} parent=63 // pred_check_branch
          %482 = sbr.rel (%p480) target = $region68
        $region67: #{tpu_custom_call.1} parent=63 // pred_region
          %p483 = scmp.lt.s32.totalorder %s27, 1
          %s484 = scalar_select %p483, %s27, 1
          %s485 = smul.addr %s484, 8
          %s486 = scalar_lea.vmem %s0, %s485
        $region68: #{tpu_custom_call.1} parent=63 // pred_fallthru
          _
        // Predicated region
        $region69: #{tpu_custom_call.1} parent=63 // pred_check
          %p487 = pneg %p73
        $region70: #{tpu_custom_call.1} parent=63 // pred_check_branch
          %489 = sbr.rel (%p487) target = $region72
        $region71: #{tpu_custom_call.1} parent=63 // pred_region
          %p490 = scmp.lt.s32.totalorder %s27, 1
          %s491 = scalar_select %p490, %s27, 1
          %s492 = smul.addr %s491, 2
          %s493 = smul.addr %s492, 8
          %s494 = scalar_lea.vmem %s1, %s493
        $region72: #{tpu_custom_call.1} parent=63 // pred_fallthru
          _
      $region64: #{tpu_custom_call.1} parent=5 // pred_fallthru
        _
      %p495 = scmp.le.s32.totalorder 1, %s27
      %p496 = scmp.lt.s32.totalorder %s27, 3
      %p497 = pnand %p495, %p496
      %p498 = pneg %p497
      // Predicated region
      $region73: #{tpu_custom_call.1} parent=5 // pred_check
        _
      $region74: #{tpu_custom_call.1} parent=5 // pred_check_branch
        %500 = sbr.rel (%p497) target = $region76
      $region75: #{tpu_custom_call.1} parent=5 // pred_region
        %s501 = ssub.s32 %s27, 1
        // Predicated region
        $region77: #{tpu_custom_call.1} parent=75 // pred_check
          %p502 = pneg %p100
        $region78: #{tpu_custom_call.1} parent=75 // pred_check_branch
          %504 = sbr.rel (%p502) target = $region80
        $region79: #{tpu_custom_call.1} parent=75 // pred_region
          %505 = dma.done [#allocation3], 256
        $region80: #{tpu_custom_call.1} parent=75 // pred_fallthru
          _
        // Predicated region
        $region81: #{tpu_custom_call.1} parent=75 // pred_check
          %p506 = pneg %p121
        $region82: #{tpu_custom_call.1} parent=75 // pred_check_branch
          %508 = sbr.rel (%p506) target = $region84
        $region83: #{tpu_custom_call.1} parent=75 // pred_region
          %509 = dma.done [#allocation6], 128
        $region84: #{tpu_custom_call.1} parent=75 // pred_fallthru
          _
        // Predicated region
        $region85: #{tpu_custom_call.1} parent=75 // pred_check
          %p510 = pneg %p142
        $region86: #{tpu_custom_call.1} parent=75 // pred_check_branch
          %512 = sbr.rel (%p510) target = $region88
        $region87: #{tpu_custom_call.1} parent=75 // pred_region
          %513 = dma.done [#allocation6], 256
        $region88: #{tpu_custom_call.1} parent=75 // pred_fallthru
          _
        // Predicated region
        $region89: #{tpu_custom_call.1} parent=75 // pred_check
          %p514 = pneg %p184
        $region90: #{tpu_custom_call.1} parent=75 // pred_check_branch
          %516 = sbr.rel (%p514) target = $region92
        $region91: #{tpu_custom_call.1} parent=75 // pred_region
          %517 = dma.done [#allocation9], 256
        $region92: #{tpu_custom_call.1} parent=75 // pred_fallthru
          _
        // Predicated region
        $region93: #{tpu_custom_call.1} parent=75 // pred_check
          %p518 = pneg %p205
        $region94: #{tpu_custom_call.1} parent=75 // pred_check_branch
          %520 = sbr.rel (%p518) target = $region96
        $region95: #{tpu_custom_call.1} parent=75 // pred_region
          %521 = dma.done [#allocation9], 256
        $region96: #{tpu_custom_call.1} parent=75 // pred_fallthru
          _
        // Predicated region
        $region97: #{tpu_custom_call.1} parent=75 // pred_check
          %p522 = pneg %p226
        $region98: #{tpu_custom_call.1} parent=75 // pred_check_branch
          %524 = sbr.rel (%p522) target = $region100
        $region99: #{tpu_custom_call.1} parent=75 // pred_region
          %525 = dma.done [#allocation12], 256
        $region100: #{tpu_custom_call.1} parent=75 // pred_fallthru
          _
        // Predicated region
        $region101: #{tpu_custom_call.1} parent=75 // pred_check
          %p526 = pneg %p289
        $region102: #{tpu_custom_call.1} parent=75 // pred_check_branch
          %528 = sbr.rel (%p526) target = $region104
        $region103: #{tpu_custom_call.1} parent=75 // pred_region
          %529 = dma.done [#allocation12], 256
        $region104: #{tpu_custom_call.1} parent=75 // pred_fallthru
          _
        %p530 = scmp.lt.s32.totalorder %s32, 1
        %s531 = scalar_select %p530, %s32, 1
        %s532 = smul.addr %s531, 8
        %s533 = scalar_lea.vmem %s0, %s532
        %p534 = pneg %p53
        %p535 = pneg %p50
        %p536 = scmp.lt.s32.totalorder %s32, 1
        %s537 = scalar_select %p536, %s32, 1
        %s538 = smul.addr %s537, 2
        %s539 = smul.addr %s538, 8
        %s540 = scalar_lea.vmem %s1, %s539
        %p541 = pneg %p79
        %p542 = pneg %p76
        %p543 = pneg %p100
        %p544 = pneg %p97
        %p545 = pneg %p121
        %p546 = pneg %p118
        %p547 = pneg %p142
        %p548 = pneg %p139
        %p549 = pneg %p163
        %p550 = pneg %p160
        %p551 = pneg %p184
        %p552 = pneg %p181
        %p553 = pneg %p205
        %p554 = pneg %p202
        %p555 = pneg %p226
        %p556 = pneg %p223
        %p557 = pneg %p247
        %p558 = pneg %p244
        %p559 = pneg %p268
        %p560 = pneg %p265
        %p561 = pneg %p289
        %p562 = pneg %p286
        %p563 = pneg %p310
        %p564 = pneg %p307
        %p565 = pneg %p331
        %p566 = pneg %p328
        %p567 = pneg %p357
        %p568 = pneg %p354
        %s569 = sand.u32 %s344, 1
        %s570 = scalar_lea.sflag [#allocation4], %s569
        %s571 = sand.u32 %s344, 1
        %s572 = smul.addr %s571, 8
        %s573 = scalar_lea.vmem [#allocation14], %s572
        %p574 = scmp.lt.s32.totalorder %s32, 1
        %s575 = scalar_select %p574, %s32, 1
        %s576 = smul.addr %s575, 8
        %s577 = scalar_lea.vmem %s0, %s576
        %p578 = scmp.lt.s32.totalorder %s32, 1
        %s579 = scalar_select %p578, %s32, 1
        %s580 = smul.addr %s579, 2
        %s581 = smul.addr %s580, 8
        %s582 = scalar_lea.vmem %s1, %s581
        %v584 = vld [vmem:[#allocation2] sm:$0xff]
        %v585 = vld [vmem:[#allocation2 + $0x8] sm:$0x1]
        %v586 = vld [vmem:[#allocation5] sm:$0xff]
        %v587 = vld [vmem:[#allocation7] sm:$0xf]
        %v588 = vld [vmem:[#allocation7 + $0x4] sm:$0xf]
        %v589 = vld [vmem:[#allocation7 + $0x8] sm:$0xf]
        %v590 = vld [vmem:[#allocation7 + $0xc] sm:$0xf]
        %v591 = vld [vmem:[%s5] sm:$0x1]
        %v592 = vld [vmem:[#allocation8] sm:$0xf]
        %v593 = vld [vmem:[#allocation8 + $0x4] sm:$0xf]
        %v594 = vld [vmem:[#allocation8 + $0x8] sm:$0xf]
        %v595 = vld [vmem:[#allocation8 + $0xc] sm:$0xf]
        %v596 = vld [vmem:[#allocation10] sm:$0xf]
        %v597 = vld [vmem:[#allocation10 + $0x4] sm:$0xf]
        %v598 = vld [vmem:[#allocation10 + $0x8] sm:$0xf]
        %v599 = vld [vmem:[#allocation10 + $0xc] sm:$0xf]
        %v600 = vld [vmem:[#allocation11] sm:$0xf]
        %v601 = vld [vmem:[#allocation11 + $0x4] sm:$0xf]
        %v602 = vld [vmem:[#allocation11 + $0x8] sm:$0xf]
        %v603 = vld [vmem:[#allocation11 + $0xc] sm:$0xf]
        %v604 = vld [vmem:[%s9] sm:$0x1]
        %v605 = vld [vmem:[%s10] sm:$0xf]
        %v606 = vld [vmem:[%s10 + $0x4] sm:$0xf]
        %v607 = vld [vmem:[%s10 + $0x8] sm:$0xf]
        %v608 = vld [vmem:[%s10 + $0xc] sm:$0xf]
        %v609 = vld [vmem:[#allocation13] sm:$0xf]
        %v610 = vld [vmem:[#allocation13 + $0x4] sm:$0xf]
        %v611 = vld [vmem:[#allocation13 + $0x8] sm:$0xf]
        %v612 = vld [vmem:[#allocation13 + $0xc] sm:$0xf]
        %v613 = vld [vmem:[%s12] sm:$0x1]
        %v614 = vld [vmem:[%s13] sm:$0xf]
        %v615 = vld [vmem:[%s13 + $0x4] sm:$0xf]
        %v616 = vld [vmem:[%s13 + $0x8] sm:$0xf]
        %v617 = vld [vmem:[%s13 + $0xc] sm:$0xf]
        %v618 = vld [vmem:[%s13 + $0x10] sm:$0xf]
        %v619 = vld [vmem:[%s13 + $0x14] sm:$0xf]
        %v620 = vld [vmem:[%s13 + $0x18] sm:$0xf]
        %v621 = vld [vmem:[%s13 + $0x1c] sm:$0xf]
        %v622 = vld [vmem:[%s577] sm:$0xff]
        %v623 = vld [vmem:[%s582] sm:$0xff]
        %v624 = vld [vmem:[%s582 + $0x8] sm:$0xff]
        %vm625 = vcmask 261120
        %v626 = vsel %vm625, %v622, 0.0
        %627 = vadd.xlane.f32.xlu0 %v626
        %v628 = vpop.xlane.xlu0 %627
        %v629 = vrcp.pop 32.0
        %v630 = vmul.f32 %v628, %v629
        %v631 = vsub.f32 %v622, %v630
        %v632 = vmul.f32 %v631, %v631
        %v633 = vsel %vm625, %v632, 0.0
        %634 = vadd.xlane.f32.xlu0 %v633
        %v635 = vpop.xlane.xlu0 %634
        %v636 = vmul.f32 %v635, %v629
        %v637 = vadd.f32 %v636, 1e-05
        %v638 = vrsqrt.pop %v637
        %v639 = vmul.f32 %v631, %v638
        %v640 = vlaneseq
        %v641 = vshrl.u32 %v640, 7
        %v642 = vsub.s32 0, %v641
        %v643 = vrot.slane %v584, %v642
        %v644 = vmul.f32 %v639, %v643
        %v645 = vlaneseq
        %v646 = vshrl.u32 %v645, 7
        %v647 = vsub.s32 1, %v646
        %v648 = vrot.slane %v584, %v647
        %v649 = vadd.f32 %v644, %v648
        %v650 = vpack.c.bf16 %v649, %v649
        %v652 = vlaneseq
        %v653 = vshrl.u32 %v652, 7
        %v654 = vsub.s32 0, %v653
        %v655 = vrot.slane %v591, %v654
        %v661 = vunpack.c.l.b16 %v587
        %v662 = vunpack.c.l.b16 %v588
        %v663 = vunpack.c.l.b16 %v589
        %v664 = vunpack.c.l.b16 %v590
        %v665 = vpack.c.b16 %v662, %v661
        %v666 = vpack.c.b16 %v664, %v663
        %v670 = vsel %vm625, %v650, 0
        %672 = vmatprep.subr.bf16.mxu0 0
        %673 = vmatpush1.bf16.msra.mxu0 %v665
        %674 = vmatprep.subr.bf16.mxu0 0
        %675 = vmatpush1.bf16.msra.mxu0 %v666
        %676 = vmatprep.subr.bf16.mxu0 0
        %677 = vmatpush1.bf16.msra.mxu0 0
        %678 = vmatprep.subr.bf16.mxu0 0
        %679 = vmatpush1.bf16.msra.mxu0 0
        %680 = vmatprep.subr.bf16.mxu0 0
        %681 = vmatpush1.bf16.msra.mxu0 0
        %682 = vmatprep.subr.bf16.mxu0 0
        %683 = vmatpush1.bf16.msra.mxu0 0
        %684 = vmatprep.subr.bf16.mxu0 0
        %685 = vmatpush1.bf16.msra.mxu0 0
        %686 = vmatprep.subr.bf16.mxu0 0
        %687 = vmatpush1.bf16.msra.mxu0 0
        %688 = vmatprep.subr.bf16.mxu0 0
        %689 = vmatpush1.bf16.msra.mxu0 0
        %690 = vmatprep.subr.bf16.mxu0 0
        %691 = vmatpush1.bf16.msra.mxu0 0
        %692 = vmatprep.subr.bf16.mxu0 0
        %693 = vmatpush1.bf16.msra.mxu0 0
        %694 = vmatprep.subr.bf16.mxu0 0
        %695 = vmatpush1.bf16.msra.mxu0 0
        %696 = vmatprep.subr.bf16.mxu0 0
        %697 = vmatpush1.bf16.msra.mxu0 0
        %698 = vmatprep.subr.bf16.mxu0 0
        %699 = vmatpush1.bf16.msra.mxu0 0
        %700 = vmatprep.subr.bf16.mxu0 0
        %701 = vmatpush1.bf16.msra.mxu0 0
        %702 = vmatprep.subr.bf16.mxu0 0
        %703 = vmatpush1.bf16.msra.mxu0 0
        %704 = vmatprep.mubr.bf16.mxu0 0
        %705 = vmatmul.mubr.bf16.gmra.mrb[0].mxu0 %v670
        %v706 = vpop.f32.mrb[0].mxu0
        %v707 = vadd.f32 %v655, %v706
        %v708 = vpop.f32.mrb[0].mxu0
        %v709 = vpop.f32.mrb[0].mxu0
        %v710 = vpop.f32.mrb[0].mxu0
        %711 = vdwg.mxu0
        %v712 = vpack.c.bf16 %v707, %v707
        %714 = vrot.lane.b32.xlu0 %v712, 120
        %v715 = vpop.permute.xlu0 %714
        %716 = vrot.lane.b32.xlu0 %v712, 112
        %v717 = vpop.permute.xlu0 %716
        %718 = vrot.lane.b32.xlu0 %v712, 104
        %v719 = vpop.permute.xlu0 %718
        %v721 = vunpack.c.l.s4 1983009808
        %v722 = vunpack.c.0.s8 %v721
        %v723 = vlaneseq
        %v724 = vshrl.u32 %v723, 7
        %v725 = vsub.s32 %v722, %v724
        %v726 = vrot.slane %v712, %v725
        %v729 = vunpack.c.l.s4 1983009808
        %v730 = vunpack.c.0.s8 %v729
        %v731 = vlaneseq
        %v732 = vshrl.u32 %v731, 7
        %v733 = vsub.s32 %v730, %v732
        %v734 = vrot.slane %v717, %v733
        %v735 = vcombine.low %v726, %v734
        %v736 = vcombine.high %v726, %v734
        %v738 = vunpack.c.l.s4 1934713408
        %v739 = vunpack.c.0.s8 %v738
        %v740 = vlaneseq
        %v741 = vshrl.u32 %v740, 7
        %v742 = vsub.s32 %v739, %v741
        %v743 = vrot.slane %v735, %v742
        %v745 = vunpack.c.l.s4 1934713408
        %v746 = vunpack.c.0.s8 %v745
        %v747 = vlaneseq
        %v748 = vshrl.u32 %v747, 7
        %v749 = vsub.s32 %v746, %v748
        %v750 = vrot.slane %v736, %v749
        %v751 = vcombine.high %v743, 0
        %v752 = vcombine.high %v750, 0
        %v755 = vunpack.c.l.s4 1983009808
        %v756 = vunpack.c.0.s8 %v755
        %v757 = vlaneseq
        %v758 = vshrl.u32 %v757, 7
        %v759 = vsub.s32 %v756, %v758
        %v760 = vrot.slane %v715, %v759
        %v763 = vunpack.c.l.s4 1983009808
        %v764 = vunpack.c.0.s8 %v763
        %v765 = vlaneseq
        %v766 = vshrl.u32 %v765, 7
        %v767 = vsub.s32 %v764, %v766
        %v768 = vrot.slane %v719, %v767
        %v769 = vcombine.low %v760, %v768
        %v770 = vcombine.high %v760, %v768
        %v772 = vunpack.c.l.s4 1934713408
        %v773 = vunpack.c.0.s8 %v772
        %v774 = vlaneseq
        %v775 = vshrl.u32 %v774, 7
        %v776 = vsub.s32 %v773, %v775
        %v777 = vrot.slane %v769, %v776
        %v779 = vunpack.c.l.s4 1934713408
        %v780 = vunpack.c.0.s8 %v779
        %v781 = vlaneseq
        %v782 = vshrl.u32 %v781, 7
        %v783 = vsub.s32 %v780, %v782
        %v784 = vrot.slane %v770, %v783
        %v785 = vcombine.high %v777, 0
        %v786 = vcombine.high %v784, 0
        %v789 = vpack.i.b16 %v777, %v743
        %v791 = vshrl.u32 %v743, 16
        %v792 = vshrl.u32 %v777, 16
        %v793 = vpack.i.b16 %v792, %v791
        %v797 = vpack.i.b16 %v785, %v751
        %v799 = vshrl.u32 %v751, 16
        %v800 = vshrl.u32 %v785, 16
        %v801 = vpack.i.b16 %v800, %v799
        %v805 = vpack.i.b16 %v784, %v750
        %v807 = vshrl.u32 %v750, 16
        %v808 = vshrl.u32 %v784, 16
        %v809 = vpack.i.b16 %v808, %v807
        %v813 = vpack.i.b16 %v786, %v752
        %v815 = vshrl.u32 %v752, 16
        %v816 = vshrl.u32 %v786, 16
        %v817 = vpack.i.b16 %v816, %v815
        %v819 = vcombine.low %v789, %v805
        %v821 = vunpack.c.l.s4 1983009808
        %v822 = vunpack.c.0.s8 %v821
        %v823 = vlaneseq
        %v824 = vshrl.u32 %v823, 7
        %v825 = vsub.s32 %v822, %v824
        %v826 = vrot.slane %v819, %v825
        %v827 = vcombine.low %v797, %v813
        %v829 = vunpack.c.l.s4 1983009808
        %v830 = vunpack.c.0.s8 %v829
        %v831 = vlaneseq
        %v832 = vshrl.u32 %v831, 7
        %v833 = vsub.s32 %v830, %v832
        %v834 = vrot.slane %v827, %v833
        %v835 = vcombine.low %v826, %v834
        %v837 = vunpack.c.l.s4 1934713408
        %v838 = vunpack.c.0.s8 %v837
        %v839 = vlaneseq
        %v840 = vshrl.u32 %v839, 7
        %v841 = vsub.s32 %v838, %v840
        %v842 = vrot.slane %v835, %v841
        %v843 = vcombine.high %v842, 0
        %v844 = vcombine.low %v793, %v809
        %v846 = vunpack.c.l.s4 1983009808
        %v847 = vunpack.c.0.s8 %v846
        %v848 = vlaneseq
        %v849 = vshrl.u32 %v848, 7
        %v850 = vsub.s32 %v847, %v849
        %v851 = vrot.slane %v844, %v850
        %v852 = vcombine.low %v801, %v817
        %v854 = vunpack.c.l.s4 1983009808
        %v855 = vunpack.c.0.s8 %v854
        %v856 = vlaneseq
        %v857 = vshrl.u32 %v856, 7
        %v858 = vsub.s32 %v855, %v857
        %v859 = vrot.slane %v852, %v858
        %v860 = vcombine.low %v851, %v859
        %v862 = vunpack.c.l.s4 1934713408
        %v863 = vunpack.c.0.s8 %v862
        %v864 = vlaneseq
        %v865 = vshrl.u32 %v864, 7
        %v866 = vsub.s32 %v863, %v865
        %v867 = vrot.slane %v860, %v866
        %v868 = vcombine.high %v867, 0
        %v871 = vpack.i.b16 %v867, %v842
        %v872 = vshrl.u32 %v842, 16
        %v873 = vshrl.u32 %v867, 16
        %v874 = vpack.i.b16 %v873, %v872
        %v877 = vpack.i.b16 %v868, %v843
        %v878 = vshrl.u32 %v843, 16
        %v879 = vshrl.u32 %v868, 16
        %v880 = vpack.i.b16 %v879, %v878
        %881 = vrot.lane.b32.xlu0 %v712, 96
        %v882 = vpop.permute.xlu0 %881
        %883 = vrot.lane.b32.xlu0 %v715, 96
        %v884 = vpop.permute.xlu0 %883
        %885 = vrot.lane.b32.xlu0 %v717, 96
        %v886 = vpop.permute.xlu0 %885
        %887 = vrot.lane.b32.xlu0 %v719, 96
        %v888 = vpop.permute.xlu0 %887
        %v891 = vunpack.c.l.s4 1983009808
        %v892 = vunpack.c.0.s8 %v891
        %v893 = vlaneseq
        %v894 = vshrl.u32 %v893, 7
        %v895 = vsub.s32 %v892, %v894
        %v896 = vrot.slane %v882, %v895
        %v899 = vunpack.c.l.s4 1983009808
        %v900 = vunpack.c.0.s8 %v899
        %v901 = vlaneseq
        %v902 = vshrl.u32 %v901, 7
        %v903 = vsub.s32 %v900, %v902
        %v904 = vrot.slane %v886, %v903
        %v905 = vcombine.low %v896, %v904
        %v906 = vcombine.high %v896, %v904
        %v908 = vunpack.c.l.s4 1934713408
        %v909 = vunpack.c.0.s8 %v908
        %v910 = vlaneseq
        %v911 = vshrl.u32 %v910, 7
        %v912 = vsub.s32 %v909, %v911
        %v913 = vrot.slane %v905, %v912
        %v915 = vunpack.c.l.s4 1934713408
        %v916 = vunpack.c.0.s8 %v915
        %v917 = vlaneseq
        %v918 = vshrl.u32 %v917, 7
        %v919 = vsub.s32 %v916, %v918
        %v920 = vrot.slane %v906, %v919
        %v921 = vcombine.high %v913, 0
        %v922 = vcombine.high %v920, 0
        %v925 = vunpack.c.l.s4 1983009808
        %v926 = vunpack.c.0.s8 %v925
        %v927 = vlaneseq
        %v928 = vshrl.u32 %v927, 7
        %v929 = vsub.s32 %v926, %v928
        %v930 = vrot.slane %v884, %v929
        %v933 = vunpack.c.l.s4 1983009808
        %v934 = vunpack.c.0.s8 %v933
        %v935 = vlaneseq
        %v936 = vshrl.u32 %v935, 7
        %v937 = vsub.s32 %v934, %v936
        %v938 = vrot.slane %v888, %v937
        %v939 = vcombine.low %v930, %v938
        %v940 = vcombine.high %v930, %v938
        %v942 = vunpack.c.l.s4 1934713408
        %v943 = vunpack.c.0.s8 %v942
        %v944 = vlaneseq
        %v945 = vshrl.u32 %v944, 7
        %v946 = vsub.s32 %v943, %v945
        %v947 = vrot.slane %v939, %v946
        %v949 = vunpack.c.l.s4 1934713408
        %v950 = vunpack.c.0.s8 %v949
        %v951 = vlaneseq
        %v952 = vshrl.u32 %v951, 7
        %v953 = vsub.s32 %v950, %v952
        %v954 = vrot.slane %v940, %v953
        %v955 = vcombine.high %v947, 0
        %v956 = vcombine.high %v954, 0
        %v959 = vpack.i.b16 %v947, %v913
        %v961 = vshrl.u32 %v913, 16
        %v962 = vshrl.u32 %v947, 16
        %v963 = vpack.i.b16 %v962, %v961
        %v967 = vpack.i.b16 %v955, %v921
        %v969 = vshrl.u32 %v921, 16
        %v970 = vshrl.u32 %v955, 16
        %v971 = vpack.i.b16 %v970, %v969
        %v975 = vpack.i.b16 %v954, %v920
        %v977 = vshrl.u32 %v920, 16
        %v978 = vshrl.u32 %v954, 16
        %v979 = vpack.i.b16 %v978, %v977
        %v983 = vpack.i.b16 %v956, %v922
        %v985 = vshrl.u32 %v922, 16
        %v986 = vshrl.u32 %v956, 16
        %v987 = vpack.i.b16 %v986, %v985
        %v989 = vcombine.low %v959, %v975
        %v991 = vunpack.c.l.s4 1983009808
        %v992 = vunpack.c.0.s8 %v991
        %v993 = vlaneseq
        %v994 = vshrl.u32 %v993, 7
        %v995 = vsub.s32 %v992, %v994
        %v996 = vrot.slane %v989, %v995
        %v997 = vcombine.low %v967, %v983
        %v999 = vunpack.c.l.s4 1983009808
        %v1000 = vunpack.c.0.s8 %v999
        %v1001 = vlaneseq
        %v1002 = vshrl.u32 %v1001, 7
        %v1003 = vsub.s32 %v1000, %v1002
        %v1004 = vrot.slane %v997, %v1003
        %v1005 = vcombine.low %v996, %v1004
        %v1007 = vunpack.c.l.s4 1934713408
        %v1008 = vunpack.c.0.s8 %v1007
        %v1009 = vlaneseq
        %v1010 = vshrl.u32 %v1009, 7
        %v1011 = vsub.s32 %v1008, %v1010
        %v1012 = vrot.slane %v1005, %v1011
        %v1013 = vcombine.high %v1012, 0
        %v1014 = vcombine.low %v963, %v979
        %v1016 = vunpack.c.l.s4 1983009808
        %v1017 = vunpack.c.0.s8 %v1016
        %v1018 = vlaneseq
        %v1019 = vshrl.u32 %v1018, 7
        %v1020 = vsub.s32 %v1017, %v1019
        %v1021 = vrot.slane %v1014, %v1020
        %v1022 = vcombine.low %v971, %v987
        %v1024 = vunpack.c.l.s4 1983009808
        %v1025 = vunpack.c.0.s8 %v1024
        %v1026 = vlaneseq
        %v1027 = vshrl.u32 %v1026, 7
        %v1028 = vsub.s32 %v1025, %v1027
        %v1029 = vrot.slane %v1022, %v1028
        %v1030 = vcombine.low %v1021, %v1029
        %v1032 = vunpack.c.l.s4 1934713408
        %v1033 = vunpack.c.0.s8 %v1032
        %v1034 = vlaneseq
        %v1035 = vshrl.u32 %v1034, 7
        %v1036 = vsub.s32 %v1033, %v1035
        %v1037 = vrot.slane %v1030, %v1036
        %v1038 = vcombine.high %v1037, 0
        %v1041 = vpack.i.b16 %v1037, %v1012
        %v1042 = vshrl.u32 %v1012, 16
        %v1043 = vshrl.u32 %v1037, 16
        %v1044 = vpack.i.b16 %v1043, %v1042
        %v1047 = vpack.i.b16 %v1038, %v1013
        %v1048 = vshrl.u32 %v1013, 16
        %v1049 = vshrl.u32 %v1038, 16
        %v1050 = vpack.i.b16 %v1049, %v1048
        %1051 = vrot.lane.b32.xlu0 %v712, 64
        %v1052 = vpop.permute.xlu0 %1051
        %1053 = vrot.lane.b32.xlu0 %v715, 64
        %v1054 = vpop.permute.xlu0 %1053
        %1055 = vrot.lane.b32.xlu0 %v717, 64
        %v1056 = vpop.permute.xlu0 %1055
        %1057 = vrot.lane.b32.xlu0 %v719, 64
        %v1058 = vpop.permute.xlu0 %1057
        %v1061 = vunpack.c.l.s4 1983009808
        %v1062 = vunpack.c.0.s8 %v1061
        %v1063 = vlaneseq
        %v1064 = vshrl.u32 %v1063, 7
        %v1065 = vsub.s32 %v1062, %v1064
        %v1066 = vrot.slane %v1052, %v1065
        %v1069 = vunpack.c.l.s4 1983009808
        %v1070 = vunpack.c.0.s8 %v1069
        %v1071 = vlaneseq
        %v1072 = vshrl.u32 %v1071, 7
        %v1073 = vsub.s32 %v1070, %v1072
        %v1074 = vrot.slane %v1056, %v1073
        %v1075 = vcombine.low %v1066, %v1074
        %v1076 = vcombine.high %v1066, %v1074
        %v1078 = vunpack.c.l.s4 1934713408
        %v1079 = vunpack.c.0.s8 %v1078
        %v1080 = vlaneseq
        %v1081 = vshrl.u32 %v1080, 7
        %v1082 = vsub.s32 %v1079, %v1081
        %v1083 = vrot.slane %v1075, %v1082
        %v1085 = vunpack.c.l.s4 1934713408
        %v1086 = vunpack.c.0.s8 %v1085
        %v1087 = vlaneseq
        %v1088 = vshrl.u32 %v1087, 7
        %v1089 = vsub.s32 %v1086, %v1088
        %v1090 = vrot.slane %v1076, %v1089
        %v1091 = vcombine.high %v1083, 0
        %v1092 = vcombine.high %v1090, 0
        %v1095 = vunpack.c.l.s4 1983009808
        %v1096 = vunpack.c.0.s8 %v1095
        %v1097 = vlaneseq
        %v1098 = vshrl.u32 %v1097, 7
        %v1099 = vsub.s32 %v1096, %v1098
        %v1100 = vrot.slane %v1054, %v1099
        %v1103 = vunpack.c.l.s4 1983009808
        %v1104 = vunpack.c.0.s8 %v1103
        %v1105 = vlaneseq
        %v1106 = vshrl.u32 %v1105, 7
        %v1107 = vsub.s32 %v1104, %v1106
        %v1108 = vrot.slane %v1058, %v1107
        %v1109 = vcombine.low %v1100, %v1108
        %v1110 = vcombine.high %v1100, %v1108
        %v1112 = vunpack.c.l.s4 1934713408
        %v1113 = vunpack.c.0.s8 %v1112
        %v1114 = vlaneseq
        %v1115 = vshrl.u32 %v1114, 7
        %v1116 = vsub.s32 %v1113, %v1115
        %v1117 = vrot.slane %v1109, %v1116
        %v1119 = vunpack.c.l.s4 1934713408
        %v1120 = vunpack.c.0.s8 %v1119
        %v1121 = vlaneseq
        %v1122 = vshrl.u32 %v1121, 7
        %v1123 = vsub.s32 %v1120, %v1122
        %v1124 = vrot.slane %v1110, %v1123
        %v1125 = vcombine.high %v1117, 0
        %v1126 = vcombine.high %v1124, 0
        %v1129 = vpack.i.b16 %v1117, %v1083
        %v1131 = vshrl.u32 %v1083, 16
        %v1132 = vshrl.u32 %v1117, 16
        %v1133 = vpack.i.b16 %v1132, %v1131
        %v1137 = vpack.i.b16 %v1125, %v1091
        %v1139 = vshrl.u32 %v1091, 16
        %v1140 = vshrl.u32 %v1125, 16
        %v1141 = vpack.i.b16 %v1140, %v1139
        %v1145 = vpack.i.b16 %v1124, %v1090
        %v1147 = vshrl.u32 %v1090, 16
        %v1148 = vshrl.u32 %v1124, 16
        %v1149 = vpack.i.b16 %v1148, %v1147
        %v1153 = vpack.i.b16 %v1126, %v1092
        %v1155 = vshrl.u32 %v1092, 16
        %v1156 = vshrl.u32 %v1126, 16
        %v1157 = vpack.i.b16 %v1156, %v1155
        %v1159 = vcombine.low %v1129, %v1145
        %v1161 = vunpack.c.l.s4 1983009808
        %v1162 = vunpack.c.0.s8 %v1161
        %v1163 = vlaneseq
        %v1164 = vshrl.u32 %v1163, 7
        %v1165 = vsub.s32 %v1162, %v1164
        %v1166 = vrot.slane %v1159, %v1165
        %v1167 = vcombine.low %v1137, %v1153
        %v1169 = vunpack.c.l.s4 1983009808
        %v1170 = vunpack.c.0.s8 %v1169
        %v1171 = vlaneseq
        %v1172 = vshrl.u32 %v1171, 7
        %v1173 = vsub.s32 %v1170, %v1172
        %v1174 = vrot.slane %v1167, %v1173
        %v1175 = vcombine.low %v1166, %v1174
        %v1177 = vunpack.c.l.s4 1934713408
        %v1178 = vunpack.c.0.s8 %v1177
        %v1179 = vlaneseq
        %v1180 = vshrl.u32 %v1179, 7
        %v1181 = vsub.s32 %v1178, %v1180
        %v1182 = vrot.slane %v1175, %v1181
        %v1183 = vcombine.high %v1182, 0
        %v1184 = vcombine.low %v1133, %v1149
        %v1186 = vunpack.c.l.s4 1983009808
        %v1187 = vunpack.c.0.s8 %v1186
        %v1188 = vlaneseq
        %v1189 = vshrl.u32 %v1188, 7
        %v1190 = vsub.s32 %v1187, %v1189
        %v1191 = vrot.slane %v1184, %v1190
        %v1192 = vcombine.low %v1141, %v1157
        %v1194 = vunpack.c.l.s4 1983009808
        %v1195 = vunpack.c.0.s8 %v1194
        %v1196 = vlaneseq
        %v1197 = vshrl.u32 %v1196, 7
        %v1198 = vsub.s32 %v1195, %v1197
        %v1199 = vrot.slane %v1192, %v1198
        %v1200 = vcombine.low %v1191, %v1199
        %v1202 = vunpack.c.l.s4 1934713408
        %v1203 = vunpack.c.0.s8 %v1202
        %v1204 = vlaneseq
        %v1205 = vshrl.u32 %v1204, 7
        %v1206 = vsub.s32 %v1203, %v1205
        %v1207 = vrot.slane %v1200, %v1206
        %v1208 = vcombine.high %v1207, 0
        %v1211 = vpack.i.b16 %v1207, %v1182
        %v1212 = vshrl.u32 %v1182, 16
        %v1213 = vshrl.u32 %v1207, 16
        %v1214 = vpack.i.b16 %v1213, %v1212
        %v1217 = vpack.i.b16 %v1208, %v1183
        %v1218 = vshrl.u32 %v1183, 16
        %v1219 = vshrl.u32 %v1208, 16
        %v1220 = vpack.i.b16 %v1219, %v1218
        %vm1221 = vcmask 64512
        %v1223 = vsel %vm1221, %v871, 0
        %v1226 = vsel %vm1221, %v1041, 0
        %1228 = vmatprep.subr.bf16.mxu0 0
        %1229 = vmatpush1.bf16.xpose.msra.mxu0 %v1226
        %1230 = vmatprep.subr.bf16.mxu0 0
        %1231 = vmatpush1.bf16.xpose.msra.mxu0 0
        %1232 = vmatprep.subr.bf16.mxu0 0
        %1233 = vmatpush1.bf16.xpose.msra.mxu0 0
        %1234 = vmatprep.subr.bf16.mxu0 0
        %1235 = vmatpush1.bf16.xpose.msra.mxu0 0
        %1236 = vmatprep.subr.bf16.mxu0 0
        %1237 = vmatpush1.bf16.xpose.msra.mxu0 0
        %1238 = vmatprep.subr.bf16.mxu0 0
        %1239 = vmatpush1.bf16.xpose.msra.mxu0 0
        %1240 = vmatprep.subr.bf16.mxu0 0
        %1241 = vmatpush1.bf16.xpose.msra.mxu0 0
        %1242 = vmatprep.subr.bf16.mxu0 0
        %1243 = vmatpush1.bf16.xpose.msra.mxu0 0
        %1244 = vmatprep.subr.bf16.mxu0 0
        %1245 = vmatpush1.bf16.xpose.msra.mxu0 0
        %1246 = vmatprep.subr.bf16.mxu0 0
        %1247 = vmatpush1.bf16.xpose.msra.mxu0 0
        %1248 = vmatprep.subr.bf16.mxu0 0
        %1249 = vmatpush1.bf16.xpose.msra.mxu0 0
        %1250 = vmatprep.subr.bf16.mxu0 0
        %1251 = vmatpush1.bf16.xpose.msra.mxu0 0
        %1252 = vmatprep.subr.bf16.mxu0 0
        %1253 = vmatpush1.bf16.xpose.msra.mxu0 0
        %1254 = vmatprep.subr.bf16.mxu0 0
        %1255 = vmatpush1.bf16.xpose.msra.mxu0 0
        %1256 = vmatprep.subr.bf16.mxu0 0
        %1257 = vmatpush1.bf16.xpose.msra.mxu0 0
        %1258 = vmatprep.subr.bf16.mxu0 0
        %1259 = vmatpush1.bf16.xpose.msra.mxu0 0
        %1260 = vmatprep.mubr.bf16.mxu0 0
        %1261 = vmatmul.mubr.bf16.gmra.mrb[0].mxu0 %v1223
        %v1262 = vpop.f32.mrb[0].mxu0
        %v1263 = vadd.f32 %v586, %v1262
        %v1264 = vpop.f32.mrb[0].mxu0
        %v1265 = vpop.f32.mrb[0].mxu0
        %v1266 = vpop.f32.mrb[0].mxu0
        %1267 = vdwg.mxu0
        %v1269 = vsel %vm1221, %v874, 0
        %v1272 = vsel %vm1221, %v1044, 0
        %1274 = vmatprep.subr.bf16.mxu0 0
        %1275 = vmatpush1.bf16.xpose.msra.mxu0 %v1272
        %1276 = vmatprep.subr.bf16.mxu0 0
        %1277 = vmatpush1.bf16.xpose.msra.mxu0 0
        %1278 = vmatprep.subr.bf16.mxu0 0
        %1279 = vmatpush1.bf16.xpose.msra.mxu0 0
        %1280 = vmatprep.subr.bf16.mxu0 0
        %1281 = vmatpush1.bf16.xpose.msra.mxu0 0
        %1282 = vmatprep.subr.bf16.mxu0 0
        %1283 = vmatpush1.bf16.xpose.msra.mxu0 0
        %1284 = vmatprep.subr.bf16.mxu0 0
        %1285 = vmatpush1.bf16.xpose.msra.mxu0 0
        %1286 = vmatprep.subr.bf16.mxu0 0
        %1287 = vmatpush1.bf16.xpose.msra.mxu0 0
        %1288 = vmatprep.subr.bf16.mxu0 0
        %1289 = vmatpush1.bf16.xpose.msra.mxu0 0
        %1290 = vmatprep.subr.bf16.mxu0 0
        %1291 = vmatpush1.bf16.xpose.msra.mxu0 0
        %1292 = vmatprep.subr.bf16.mxu0 0
        %1293 = vmatpush1.bf16.xpose.msra.mxu0 0
        %1294 = vmatprep.subr.bf16.mxu0 0
        %1295 = vmatpush1.bf16.xpose.msra.mxu0 0
        %1296 = vmatprep.subr.bf16.mxu0 0
        %1297 = vmatpush1.bf16.xpose.msra.mxu0 0
        %1298 = vmatprep.subr.bf16.mxu0 0
        %1299 = vmatpush1.bf16.xpose.msra.mxu0 0
        %1300 = vmatprep.subr.bf16.mxu0 0
        %1301 = vmatpush1.bf16.xpose.msra.mxu0 0
        %1302 = vmatprep.subr.bf16.mxu0 0
        %1303 = vmatpush1.bf16.xpose.msra.mxu0 0
        %1304 = vmatprep.subr.bf16.mxu0 0
        %1305 = vmatpush1.bf16.xpose.msra.mxu0 0
        %1306 = vmatprep.mubr.bf16.mxu0 0
        %1307 = vmatmul.mubr.bf16.gmra.mrb[0].mxu0 %v1269
        %v1308 = vpop.f32.mrb[0].mxu0
        %v1309 = vadd.f32 %v586, %v1308
        %v1310 = vpop.f32.mrb[0].mxu0
        %v1311 = vpop.f32.mrb[0].mxu0
        %v1312 = vpop.f32.mrb[0].mxu0
        %1313 = vdwg.mxu0
        %v1315 = vsel %vm1221, %v877, 0
        %v1318 = vsel %vm1221, %v1047, 0
        %1320 = vmatprep.subr.bf16.mxu0 0
        %1321 = vmatpush1.bf16.xpose.msra.mxu0 %v1318
        %1322 = vmatprep.subr.bf16.mxu0 0
        %1323 = vmatpush1.bf16.xpose.msra.mxu0 0
        %1324 = vmatprep.subr.bf16.mxu0 0
        %1325 = vmatpush1.bf16.xpose.msra.mxu0 0
        %1326 = vmatprep.subr.bf16.mxu0 0
        %1327 = vmatpush1.bf16.xpose.msra.mxu0 0
        %1328 = vmatprep.subr.bf16.mxu0 0
        %1329 = vmatpush1.bf16.xpose.msra.mxu0 0
        %1330 = vmatprep.subr.bf16.mxu0 0
        %1331 = vmatpush1.bf16.xpose.msra.mxu0 0
        %1332 = vmatprep.subr.bf16.mxu0 0
        %1333 = vmatpush1.bf16.xpose.msra.mxu0 0
        %1334 = vmatprep.subr.bf16.mxu0 0
        %1335 = vmatpush1.bf16.xpose.msra.mxu0 0
        %1336 = vmatprep.subr.bf16.mxu0 0
        %1337 = vmatpush1.bf16.xpose.msra.mxu0 0
        %1338 = vmatprep.subr.bf16.mxu0 0
        %1339 = vmatpush1.bf16.xpose.msra.mxu0 0
        %1340 = vmatprep.subr.bf16.mxu0 0
        %1341 = vmatpush1.bf16.xpose.msra.mxu0 0
        %1342 = vmatprep.subr.bf16.mxu0 0
        %1343 = vmatpush1.bf16.xpose.msra.mxu0 0
        %1344 = vmatprep.subr.bf16.mxu0 0
        %1345 = vmatpush1.bf16.xpose.msra.mxu0 0
        %1346 = vmatprep.subr.bf16.mxu0 0
        %1347 = vmatpush1.bf16.xpose.msra.mxu0 0
        %1348 = vmatprep.subr.bf16.mxu0 0
        %1349 = vmatpush1.bf16.xpose.msra.mxu0 0
        %1350 = vmatprep.subr.bf16.mxu0 0
        %1351 = vmatpush1.bf16.xpose.msra.mxu0 0
        %1352 = vmatprep.mubr.bf16.mxu0 0
        %1353 = vmatmul.mubr.bf16.gmra.mrb[0].mxu0 %v1315
        %v1354 = vpop.f32.mrb[0].mxu0
        %v1355 = vadd.f32 %v586, %v1354
        %v1356 = vpop.f32.mrb[0].mxu0
        %v1357 = vpop.f32.mrb[0].mxu0
        %v1358 = vpop.f32.mrb[0].mxu0
        %1359 = vdwg.mxu0
        %v1361 = vsel %vm1221, %v880, 0
        %v1364 = vsel %vm1221, %v1050, 0
        %1366 = vmatprep.subr.bf16.mxu0 0
        %1367 = vmatpush1.bf16.xpose.msra.mxu0 %v1364
        %1368 = vmatprep.subr.bf16.mxu0 0
        %1369 = vmatpush1.bf16.xpose.msra.mxu0 0
        %1370 = vmatprep.subr.bf16.mxu0 0
        %1371 = vmatpush1.bf16.xpose.msra.mxu0 0
        %1372 = vmatprep.subr.bf16.mxu0 0
        %1373 = vmatpush1.bf16.xpose.msra.mxu0 0
        %1374 = vmatprep.subr.bf16.mxu0 0
        %1375 = vmatpush1.bf16.xpose.msra.mxu0 0
        %1376 = vmatprep.subr.bf16.mxu0 0
        %1377 = vmatpush1.bf16.xpose.msra.mxu0 0
        %1378 = vmatprep.subr.bf16.mxu0 0
        %1379 = vmatpush1.bf16.xpose.msra.mxu0 0
        %1380 = vmatprep.subr.bf16.mxu0 0
        %1381 = vmatpush1.bf16.xpose.msra.mxu0 0
        %1382 = vmatprep.subr.bf16.mxu0 0
        %1383 = vmatpush1.bf16.xpose.msra.mxu0 0
        %1384 = vmatprep.subr.bf16.mxu0 0
        %1385 = vmatpush1.bf16.xpose.msra.mxu0 0
        %1386 = vmatprep.subr.bf16.mxu0 0
        %1387 = vmatpush1.bf16.xpose.msra.mxu0 0
        %1388 = vmatprep.subr.bf16.mxu0 0
        %1389 = vmatpush1.bf16.xpose.msra.mxu0 0
        %1390 = vmatprep.subr.bf16.mxu0 0
        %1391 = vmatpush1.bf16.xpose.msra.mxu0 0
        %1392 = vmatprep.subr.bf16.mxu0 0
        %1393 = vmatpush1.bf16.xpose.msra.mxu0 0
        %1394 = vmatprep.subr.bf16.mxu0 0
        %1395 = vmatpush1.bf16.xpose.msra.mxu0 0
        %1396 = vmatprep.subr.bf16.mxu0 0
        %1397 = vmatpush1.bf16.xpose.msra.mxu0 0
        %1398 = vmatprep.mubr.bf16.mxu0 0
        %1399 = vmatmul.mubr.bf16.gmra.mrb[0].mxu0 %v1361
        %v1400 = vpop.f32.mrb[0].mxu0
        %v1401 = vadd.f32 %v586, %v1400
        %v1402 = vpop.f32.mrb[0].mxu0
        %v1403 = vpop.f32.mrb[0].mxu0
        %v1404 = vpop.f32.mrb[0].mxu0
        %1405 = vdwg.mxu0
        %v1406 = vsel %vm1221, %v1263, -inf
        %1407 = vmax.xlane.f32.xlu0 %v1406
        %v1408 = vpop.xlane.xlu0 %1407
        %v1409 = vsel %vm1221, %v1309, -inf
        %1410 = vmax.xlane.f32.xlu0 %v1409
        %v1411 = vpop.xlane.xlu0 %1410
        %v1412 = vsel %vm1221, %v1355, -inf
        %1413 = vmax.xlane.f32.xlu0 %v1412
        %v1414 = vpop.xlane.xlu0 %1413
        %v1415 = vsel %vm1221, %v1401, -inf
        %1416 = vmax.xlane.f32.xlu0 %v1415
        %v1417 = vpop.xlane.xlu0 %1416
        %v1418 = vsub.f32 %v1263, %v1408
        %v1419 = vsub.f32 %v1309, %v1411
        %v1420 = vsub.f32 %v1355, %v1414
        %v1421 = vsub.f32 %v1401, %v1417
        %v1422 = vmul.f32 %v1418, 1.442695
        %v1423 = vpow.pop %v1422
        %v1424 = vmul.f32 %v1419, 1.442695
        %v1425 = vpow.pop %v1424
        %v1426 = vmul.f32 %v1420, 1.442695
        %v1427 = vpow.pop %v1426
        %v1428 = vmul.f32 %v1421, 1.442695
        %v1429 = vpow.pop %v1428
        %v1430 = vsel %vm1221, %v1423, 0.0
        %1431 = vadd.xlane.f32.xlu0 %v1430
        %v1432 = vpop.xlane.xlu0 %1431
        %v1433 = vsel %vm1221, %v1425, 0.0
        %1434 = vadd.xlane.f32.xlu0 %v1433
        %v1435 = vpop.xlane.xlu0 %1434
        %v1436 = vsel %vm1221, %v1427, 0.0
        %1437 = vadd.xlane.f32.xlu0 %v1436
        %v1438 = vpop.xlane.xlu0 %1437
        %v1439 = vsel %vm1221, %v1429, 0.0
        %1440 = vadd.xlane.f32.xlu0 %v1439
        %v1441 = vpop.xlane.xlu0 %1440
        %v1442 = vrcp.pop %v1432
        %v1443 = vrcp.pop %v1435
        %v1444 = vrcp.pop %v1438
        %v1445 = vrcp.pop %v1441
        %v1446 = vmul.f32 %v1423, %v1442
        %v1447 = vmul.f32 %v1425, %v1443
        %v1448 = vmul.f32 %v1427, %v1444
        %v1449 = vmul.f32 %v1429, %v1445
        %v1450 = vpack.c.bf16 %v1446, %v1446
        %v1451 = vpack.c.bf16 %v1447, %v1447
        %v1452 = vpack.c.bf16 %v1448, %v1448
        %v1453 = vpack.c.bf16 %v1449, %v1449
        %v1455 = vsel %vm1221, %v1450, 0
        %vm1457 = vcmask 1043456
        %v1459 = vsel %vm1457, %v1211, 0
        %1461 = vmatprep.subr.bf16.mxu0 0
        %1462 = vmatpush1.bf16.msra.mxu0 %v1459
        %1463 = vmatprep.subr.bf16.mxu0 0
        %1464 = vmatpush1.bf16.msra.mxu0 0
        %1465 = vmatprep.subr.bf16.mxu0 0
        %1466 = vmatpush1.bf16.msra.mxu0 0
        %1467 = vmatprep.subr.bf16.mxu0 0
        %1468 = vmatpush1.bf16.msra.mxu0 0
        %1469 = vmatprep.subr.bf16.mxu0 0
        %1470 = vmatpush1.bf16.msra.mxu0 0
        %1471 = vmatprep.subr.bf16.mxu0 0
        %1472 = vmatpush1.bf16.msra.mxu0 0
        %1473 = vmatprep.subr.bf16.mxu0 0
        %1474 = vmatpush1.bf16.msra.mxu0 0
        %1475 = vmatprep.subr.bf16.mxu0 0
        %1476 = vmatpush1.bf16.msra.mxu0 0
        %1477 = vmatprep.subr.bf16.mxu0 0
        %1478 = vmatpush1.bf16.msra.mxu0 0
        %1479 = vmatprep.subr.bf16.mxu0 0
        %1480 = vmatpush1.bf16.msra.mxu0 0
        %1481 = vmatprep.subr.bf16.mxu0 0
        %1482 = vmatpush1.bf16.msra.mxu0 0
        %1483 = vmatprep.subr.bf16.mxu0 0
        %1484 = vmatpush1.bf16.msra.mxu0 0
        %1485 = vmatprep.subr.bf16.mxu0 0
        %1486 = vmatpush1.bf16.msra.mxu0 0
        %1487 = vmatprep.subr.bf16.mxu0 0
        %1488 = vmatpush1.bf16.msra.mxu0 0
        %1489 = vmatprep.subr.bf16.mxu0 0
        %1490 = vmatpush1.bf16.msra.mxu0 0
        %1491 = vmatprep.subr.bf16.mxu0 0
        %1492 = vmatpush1.bf16.msra.mxu0 0
        %1493 = vmatprep.mubr.bf16.mxu0 0
        %1494 = vmatmul.mubr.bf16.gmra.mrb[0].mxu0 %v1455
        %v1495 = vpop.f32.mrb[0].mxu0
        %v1496 = vadd.f32 0.0, %v1495
        %v1497 = vpop.f32.mrb[0].mxu0
        %v1498 = vpop.f32.mrb[0].mxu0
        %v1499 = vpop.f32.mrb[0].mxu0
        %1500 = vdwg.mxu0
        %v1502 = vsel %vm1221, %v1451, 0
        %v1505 = vsel %vm1457, %v1214, 0
        %1507 = vmatprep.subr.bf16.mxu0 0
        %1508 = vmatpush1.bf16.msra.mxu0 %v1505
        %1509 = vmatprep.subr.bf16.mxu0 0
        %1510 = vmatpush1.bf16.msra.mxu0 0
        %1511 = vmatprep.subr.bf16.mxu0 0
        %1512 = vmatpush1.bf16.msra.mxu0 0
        %1513 = vmatprep.subr.bf16.mxu0 0
        %1514 = vmatpush1.bf16.msra.mxu0 0
        %1515 = vmatprep.subr.bf16.mxu0 0
        %1516 = vmatpush1.bf16.msra.mxu0 0
        %1517 = vmatprep.subr.bf16.mxu0 0
        %1518 = vmatpush1.bf16.msra.mxu0 0
        %1519 = vmatprep.subr.bf16.mxu0 0
        %1520 = vmatpush1.bf16.msra.mxu0 0
        %1521 = vmatprep.subr.bf16.mxu0 0
        %1522 = vmatpush1.bf16.msra.mxu0 0
        %1523 = vmatprep.subr.bf16.mxu0 0
        %1524 = vmatpush1.bf16.msra.mxu0 0
        %1525 = vmatprep.subr.bf16.mxu0 0
        %1526 = vmatpush1.bf16.msra.mxu0 0
        %1527 = vmatprep.subr.bf16.mxu0 0
        %1528 = vmatpush1.bf16.msra.mxu0 0
        %1529 = vmatprep.subr.bf16.mxu0 0
        %1530 = vmatpush1.bf16.msra.mxu0 0
        %1531 = vmatprep.subr.bf16.mxu0 0
        %1532 = vmatpush1.bf16.msra.mxu0 0
        %1533 = vmatprep.subr.bf16.mxu0 0
        %1534 = vmatpush1.bf16.msra.mxu0 0
        %1535 = vmatprep.subr.bf16.mxu0 0
        %1536 = vmatpush1.bf16.msra.mxu0 0
        %1537 = vmatprep.subr.bf16.mxu0 0
        %1538 = vmatpush1.bf16.msra.mxu0 0
        %1539 = vmatprep.mubr.bf16.mxu0 0
        %1540 = vmatmul.mubr.bf16.gmra.mrb[0].mxu0 %v1502
        %v1541 = vpop.f32.mrb[0].mxu0
        %v1542 = vadd.f32 0.0, %v1541
        %v1543 = vpop.f32.mrb[0].mxu0
        %v1544 = vpop.f32.mrb[0].mxu0
        %v1545 = vpop.f32.mrb[0].mxu0
        %1546 = vdwg.mxu0
        %v1548 = vsel %vm1221, %v1452, 0
        %v1551 = vsel %vm1457, %v1217, 0
        %1553 = vmatprep.subr.bf16.mxu0 0
        %1554 = vmatpush1.bf16.msra.mxu0 %v1551
        %1555 = vmatprep.subr.bf16.mxu0 0
        %1556 = vmatpush1.bf16.msra.mxu0 0
        %1557 = vmatprep.subr.bf16.mxu0 0
        %1558 = vmatpush1.bf16.msra.mxu0 0
        %1559 = vmatprep.subr.bf16.mxu0 0
        %1560 = vmatpush1.bf16.msra.mxu0 0
        %1561 = vmatprep.subr.bf16.mxu0 0
        %1562 = vmatpush1.bf16.msra.mxu0 0
        %1563 = vmatprep.subr.bf16.mxu0 0
        %1564 = vmatpush1.bf16.msra.mxu0 0
        %1565 = vmatprep.subr.bf16.mxu0 0
        %1566 = vmatpush1.bf16.msra.mxu0 0
        %1567 = vmatprep.subr.bf16.mxu0 0
        %1568 = vmatpush1.bf16.msra.mxu0 0
        %1569 = vmatprep.subr.bf16.mxu0 0
        %1570 = vmatpush1.bf16.msra.mxu0 0
        %1571 = vmatprep.subr.bf16.mxu0 0
        %1572 = vmatpush1.bf16.msra.mxu0 0
        %1573 = vmatprep.subr.bf16.mxu0 0
        %1574 = vmatpush1.bf16.msra.mxu0 0
        %1575 = vmatprep.subr.bf16.mxu0 0
        %1576 = vmatpush1.bf16.msra.mxu0 0
        %1577 = vmatprep.subr.bf16.mxu0 0
        %1578 = vmatpush1.bf16.msra.mxu0 0
        %1579 = vmatprep.subr.bf16.mxu0 0
        %1580 = vmatpush1.bf16.msra.mxu0 0
        %1581 = vmatprep.subr.bf16.mxu0 0
        %1582 = vmatpush1.bf16.msra.mxu0 0
        %1583 = vmatprep.subr.bf16.mxu0 0
        %1584 = vmatpush1.bf16.msra.mxu0 0
        %1585 = vmatprep.mubr.bf16.mxu0 0
        %1586 = vmatmul.mubr.bf16.gmra.mrb[0].mxu0 %v1548
        %v1587 = vpop.f32.mrb[0].mxu0
        %v1588 = vadd.f32 0.0, %v1587
        %v1589 = vpop.f32.mrb[0].mxu0
        %v1590 = vpop.f32.mrb[0].mxu0
        %v1591 = vpop.f32.mrb[0].mxu0
        %1592 = vdwg.mxu0
        %v1594 = vsel %vm1221, %v1453, 0
        %v1597 = vsel %vm1457, %v1220, 0
        %1599 = vmatprep.subr.bf16.mxu0 0
        %1600 = vmatpush1.bf16.msra.mxu0 %v1597
        %1601 = vmatprep.subr.bf16.mxu0 0
        %1602 = vmatpush1.bf16.msra.mxu0 0
        %1603 = vmatprep.subr.bf16.mxu0 0
        %1604 = vmatpush1.bf16.msra.mxu0 0
        %1605 = vmatprep.subr.bf16.mxu0 0
        %1606 = vmatpush1.bf16.msra.mxu0 0
        %1607 = vmatprep.subr.bf16.mxu0 0
        %1608 = vmatpush1.bf16.msra.mxu0 0
        %1609 = vmatprep.subr.bf16.mxu0 0
        %1610 = vmatpush1.bf16.msra.mxu0 0
        %1611 = vmatprep.subr.bf16.mxu0 0
        %1612 = vmatpush1.bf16.msra.mxu0 0
        %1613 = vmatprep.subr.bf16.mxu0 0
        %1614 = vmatpush1.bf16.msra.mxu0 0
        %1615 = vmatprep.subr.bf16.mxu0 0
        %1616 = vmatpush1.bf16.msra.mxu0 0
        %1617 = vmatprep.subr.bf16.mxu0 0
        %1618 = vmatpush1.bf16.msra.mxu0 0
        %1619 = vmatprep.subr.bf16.mxu0 0
        %1620 = vmatpush1.bf16.msra.mxu0 0
        %1621 = vmatprep.subr.bf16.mxu0 0
        %1622 = vmatpush1.bf16.msra.mxu0 0
        %1623 = vmatprep.subr.bf16.mxu0 0
        %1624 = vmatpush1.bf16.msra.mxu0 0
        %1625 = vmatprep.subr.bf16.mxu0 0
        %1626 = vmatpush1.bf16.msra.mxu0 0
        %1627 = vmatprep.subr.bf16.mxu0 0
        %1628 = vmatpush1.bf16.msra.mxu0 0
        %1629 = vmatprep.subr.bf16.mxu0 0
        %1630 = vmatpush1.bf16.msra.mxu0 0
        %1631 = vmatprep.mubr.bf16.mxu0 0
        %1632 = vmatmul.mubr.bf16.gmra.mrb[0].mxu0 %v1594
        %v1633 = vpop.f32.mrb[0].mxu0
        %v1634 = vadd.f32 0.0, %v1633
        %v1635 = vpop.f32.mrb[0].mxu0
        %v1636 = vpop.f32.mrb[0].mxu0
        %v1637 = vpop.f32.mrb[0].mxu0
        %1638 = vdwg.mxu0
        %v1639 = vcombine.low %v1496, %v1588
        %v1640 = vcombine.high %v1496, %v1588
        %v1642 = vunpack.c.l.s4 1983009808
        %v1643 = vunpack.c.0.s8 %v1642
        %v1644 = vlaneseq
        %v1645 = vshrl.u32 %v1644, 7
        %v1646 = vsub.s32 %v1643, %v1645
        %v1647 = vrot.slane %v1639, %v1646
        %v1649 = vunpack.c.l.s4 1983009808
        %v1650 = vunpack.c.0.s8 %v1649
        %v1651 = vlaneseq
        %v1652 = vshrl.u32 %v1651, 7
        %v1653 = vsub.s32 %v1650, %v1652
        %v1654 = vrot.slane %v1640, %v1653
        %v1655 = vcombine.low %v1542, %v1634
        %v1656 = vcombine.high %v1542, %v1634
        %v1658 = vunpack.c.l.s4 1983009808
        %v1659 = vunpack.c.0.s8 %v1658
        %v1660 = vlaneseq
        %v1661 = vshrl.u32 %v1660, 7
        %v1662 = vsub.s32 %v1659, %v1661
        %v1663 = vrot.slane %v1655, %v1662
        %v1665 = vunpack.c.l.s4 1983009808
        %v1666 = vunpack.c.0.s8 %v1665
        %v1667 = vlaneseq
        %v1668 = vshrl.u32 %v1667, 7
        %v1669 = vsub.s32 %v1666, %v1668
        %v1670 = vrot.slane %v1656, %v1669
        %v1671 = vcombine.low %v1647, %v1663
        %v1672 = vcombine.high %v1647, %v1663
        %v1674 = vunpack.c.l.s4 1934713408
        %v1675 = vunpack.c.0.s8 %v1674
        %v1676 = vlaneseq
        %v1677 = vshrl.u32 %v1676, 7
        %v1678 = vsub.s32 %v1675, %v1677
        %v1679 = vrot.slane %v1671, %v1678
        %v1681 = vunpack.c.l.s4 1934713408
        %v1682 = vunpack.c.0.s8 %v1681
        %v1683 = vlaneseq
        %v1684 = vshrl.u32 %v1683, 7
        %v1685 = vsub.s32 %v1682, %v1684
        %v1686 = vrot.slane %v1672, %v1685
        %v1687 = vcombine.low %v1654, %v1670
        %v1688 = vcombine.high %v1654, %v1670
        %v1690 = vunpack.c.l.s4 1934713408
        %v1691 = vunpack.c.0.s8 %v1690
        %v1692 = vlaneseq
        %v1693 = vshrl.u32 %v1692, 7
        %v1694 = vsub.s32 %v1691, %v1693
        %v1695 = vrot.slane %v1687, %v1694
        %v1697 = vunpack.c.l.s4 1934713408
        %v1698 = vunpack.c.0.s8 %v1697
        %v1699 = vlaneseq
        %v1700 = vshrl.u32 %v1699, 7
        %v1701 = vsub.s32 %v1698, %v1700
        %v1702 = vrot.slane %v1688, %v1701
        %v1703 = vcombine.high %v1679, 0.0
        %v1704 = vcombine.high %v1686, 0.0
        %v1705 = vcombine.high %v1695, 0.0
        %v1706 = vcombine.high %v1702, 0.0
        %v1707 = vcombine.low %v1679, %v1686
        %v1709 = vunpack.c.l.s4 1983009808
        %v1710 = vunpack.c.0.s8 %v1709
        %v1711 = vlaneseq
        %v1712 = vshrl.u32 %v1711, 7
        %v1713 = vsub.s32 %v1710, %v1712
        %v1714 = vrot.slane %v1707, %v1713
        %v1715 = vcombine.low %v1703, %v1704
        %v1717 = vunpack.c.l.s4 1983009808
        %v1718 = vunpack.c.0.s8 %v1717
        %v1719 = vlaneseq
        %v1720 = vshrl.u32 %v1719, 7
        %v1721 = vsub.s32 %v1718, %v1720
        %v1722 = vrot.slane %v1715, %v1721
        %v1723 = vcombine.low %v1695, %v1702
        %v1725 = vunpack.c.l.s4 1983009808
        %v1726 = vunpack.c.0.s8 %v1725
        %v1727 = vlaneseq
        %v1728 = vshrl.u32 %v1727, 7
        %v1729 = vsub.s32 %v1726, %v1728
        %v1730 = vrot.slane %v1723, %v1729
        %v1731 = vcombine.low %v1705, %v1706
        %v1733 = vunpack.c.l.s4 1983009808
        %v1734 = vunpack.c.0.s8 %v1733
        %v1735 = vlaneseq
        %v1736 = vshrl.u32 %v1735, 7
        %v1737 = vsub.s32 %v1734, %v1736
        %v1738 = vrot.slane %v1731, %v1737
        %v1739 = vcombine.low %v1714, %v1722
        %v1740 = vcombine.high %v1714, %v1722
        %v1742 = vunpack.c.l.s4 1934713408
        %v1743 = vunpack.c.0.s8 %v1742
        %v1744 = vlaneseq
        %v1745 = vshrl.u32 %v1744, 7
        %v1746 = vsub.s32 %v1743, %v1745
        %v1747 = vrot.slane %v1739, %v1746
        %v1749 = vunpack.c.l.s4 1934713408
        %v1750 = vunpack.c.0.s8 %v1749
        %v1751 = vlaneseq
        %v1752 = vshrl.u32 %v1751, 7
        %v1753 = vsub.s32 %v1750, %v1752
        %v1754 = vrot.slane %v1740, %v1753
        %v1755 = vcombine.low %v1730, %v1738
        %v1756 = vcombine.high %v1730, %v1738
        %v1758 = vunpack.c.l.s4 1934713408
        %v1759 = vunpack.c.0.s8 %v1758
        %v1760 = vlaneseq
        %v1761 = vshrl.u32 %v1760, 7
        %v1762 = vsub.s32 %v1759, %v1761
        %v1763 = vrot.slane %v1755, %v1762
        %v1765 = vunpack.c.l.s4 1934713408
        %v1766 = vunpack.c.0.s8 %v1765
        %v1767 = vlaneseq
        %v1768 = vshrl.u32 %v1767, 7
        %v1769 = vsub.s32 %v1766, %v1768
        %v1770 = vrot.slane %v1756, %v1769
        %v1771 = vcombine.low %v1747, %v1763
        %v1772 = vcombine.high %v1747, %v1763
        %v1773 = vcombine.low %v1754, %v1770
        %v1774 = vcombine.high %v1754, %v1770
        %1776 = vrot.lane.b32.xlu0 %v1772, 8
        %v1777 = vpop.permute.xlu0 %1776
        %1780 = vrot.lane.b32.xlu0 %v1773, 16
        %v1781 = vpop.permute.xlu0 %1780
        %1784 = vrot.lane.b32.xlu0 %v1774, 24
        %v1785 = vpop.permute.xlu0 %1784
        %v1787 = vsel %vm1221, %v1771, %v1777
        %vm1788 = vcmask 130048
        %v1789 = vsel %vm1788, %v1787, %v1781
        %vm1790 = vcmask 195584
        %v1791 = vsel %vm1790, %v1789, %v1785
        %v1792 = vpack.c.bf16 %v1791, %v1791
        %v1793 = vlaneseq
        %v1794 = vshrl.u32 %v1793, 7
        %v1795 = vsub.s32 6, %v1794
        %v1796 = vrot.slane %v584, %v1795
        %v1801 = vunpack.c.l.b16 %v592
        %v1802 = vunpack.c.l.b16 %v593
        %v1803 = vunpack.c.l.b16 %v594
        %v1804 = vunpack.c.l.b16 %v595
        %v1805 = vpack.c.b16 %v1802, %v1801
        %v1806 = vpack.c.b16 %v1804, %v1803
        %v1810 = vsel %vm625, %v1792, 0
        %1812 = vmatprep.subr.bf16.mxu0 0
        %1813 = vmatpush1.bf16.msra.mxu0 %v1805
        %1814 = vmatprep.subr.bf16.mxu0 0
        %1815 = vmatpush1.bf16.msra.mxu0 %v1806
        %1816 = vmatprep.subr.bf16.mxu0 0
        %1817 = vmatpush1.bf16.msra.mxu0 0
        %1818 = vmatprep.subr.bf16.mxu0 0
        %1819 = vmatpush1.bf16.msra.mxu0 0
        %1820 = vmatprep.subr.bf16.mxu0 0
        %1821 = vmatpush1.bf16.msra.mxu0 0
        %1822 = vmatprep.subr.bf16.mxu0 0
        %1823 = vmatpush1.bf16.msra.mxu0 0
        %1824 = vmatprep.subr.bf16.mxu0 0
        %1825 = vmatpush1.bf16.msra.mxu0 0
        %1826 = vmatprep.subr.bf16.mxu0 0
        %1827 = vmatpush1.bf16.msra.mxu0 0
        %1828 = vmatprep.subr.bf16.mxu0 0
        %1829 = vmatpush1.bf16.msra.mxu0 0
        %1830 = vmatprep.subr.bf16.mxu0 0
        %1831 = vmatpush1.bf16.msra.mxu0 0
        %1832 = vmatprep.subr.bf16.mxu0 0
        %1833 = vmatpush1.bf16.msra.mxu0 0
        %1834 = vmatprep.subr.bf16.mxu0 0
        %1835 = vmatpush1.bf16.msra.mxu0 0
        %1836 = vmatprep.subr.bf16.mxu0 0
        %1837 = vmatpush1.bf16.msra.mxu0 0
        %1838 = vmatprep.subr.bf16.mxu0 0
        %1839 = vmatpush1.bf16.msra.mxu0 0
        %1840 = vmatprep.subr.bf16.mxu0 0
        %1841 = vmatpush1.bf16.msra.mxu0 0
        %1842 = vmatprep.subr.bf16.mxu0 0
        %1843 = vmatpush1.bf16.msra.mxu0 0
        %1844 = vmatprep.mubr.bf16.mxu0 0
        %1845 = vmatmul.mubr.bf16.gmra.mrb[0].mxu0 %v1810
        %v1846 = vpop.f32.mrb[0].mxu0
        %v1847 = vadd.f32 %v1796, %v1846
        %v1848 = vpop.f32.mrb[0].mxu0
        %v1849 = vpop.f32.mrb[0].mxu0
        %v1850 = vpop.f32.mrb[0].mxu0
        %1851 = vdwg.mxu0
        %v1852 = vadd.f32 %v622, %v1847
        %v1853 = vsel %vm625, %v1852, 0.0
        %1854 = vadd.xlane.f32.xlu0 %v1853
        %v1855 = vpop.xlane.xlu0 %1854
        %v1856 = vmul.f32 %v1855, %v629
        %v1857 = vsub.f32 %v1852, %v1856
        %v1858 = vmul.f32 %v1857, %v1857
        %v1859 = vsel %vm625, %v1858, 0.0
        %1860 = vadd.xlane.f32.xlu0 %v1859
        %v1861 = vpop.xlane.xlu0 %1860
        %v1862 = vmul.f32 %v1861, %v629
        %v1863 = vadd.f32 %v1862, 1e-05
        %v1864 = vrsqrt.pop %v1863
        %v1865 = vmul.f32 %v1857, %v1864
        %v1866 = vlaneseq
        %v1867 = vshrl.u32 %v1866, 7
        %v1868 = vsub.s32 2, %v1867
        %v1869 = vrot.slane %v584, %v1868
        %v1870 = vmul.f32 %v1865, %v1869
        %v1871 = vlaneseq
        %v1872 = vshrl.u32 %v1871, 7
        %v1873 = vsub.s32 3, %v1872
        %v1874 = vrot.slane %v584, %v1873
        %v1875 = vadd.f32 %v1870, %v1874
        %v1876 = vpack.c.bf16 %v1875, %v1875
        %v1878 = vlaneseq
        %v1879 = vshrl.u32 %v1878, 7
        %v1880 = vsub.s32 0, %v1879
        %v1881 = vrot.slane %v604, %v1880
        %v1887 = vunpack.c.l.b16 %v596
        %v1888 = vunpack.c.l.b16 %v597
        %v1889 = vunpack.c.l.b16 %v598
        %v1890 = vunpack.c.l.b16 %v599
        %v1891 = vpack.c.b16 %v1888, %v1887
        %v1892 = vpack.c.b16 %v1890, %v1889
        %v1896 = vsel %vm625, %v1876, 0
        %1898 = vmatprep.subr.bf16.mxu0 0
        %1899 = vmatpush1.bf16.msra.mxu0 %v1891
        %1900 = vmatprep.subr.bf16.mxu0 0
        %1901 = vmatpush1.bf16.msra.mxu0 %v1892
        %1902 = vmatprep.subr.bf16.mxu0 0
        %1903 = vmatpush1.bf16.msra.mxu0 0
        %1904 = vmatprep.subr.bf16.mxu0 0
        %1905 = vmatpush1.bf16.msra.mxu0 0
        %1906 = vmatprep.subr.bf16.mxu0 0
        %1907 = vmatpush1.bf16.msra.mxu0 0
        %1908 = vmatprep.subr.bf16.mxu0 0
        %1909 = vmatpush1.bf16.msra.mxu0 0
        %1910 = vmatprep.subr.bf16.mxu0 0
        %1911 = vmatpush1.bf16.msra.mxu0 0
        %1912 = vmatprep.subr.bf16.mxu0 0
        %1913 = vmatpush1.bf16.msra.mxu0 0
        %1914 = vmatprep.subr.bf16.mxu0 0
        %1915 = vmatpush1.bf16.msra.mxu0 0
        %1916 = vmatprep.subr.bf16.mxu0 0
        %1917 = vmatpush1.bf16.msra.mxu0 0
        %1918 = vmatprep.subr.bf16.mxu0 0
        %1919 = vmatpush1.bf16.msra.mxu0 0
        %1920 = vmatprep.subr.bf16.mxu0 0
        %1921 = vmatpush1.bf16.msra.mxu0 0
        %1922 = vmatprep.subr.bf16.mxu0 0
        %1923 = vmatpush1.bf16.msra.mxu0 0
        %1924 = vmatprep.subr.bf16.mxu0 0
        %1925 = vmatpush1.bf16.msra.mxu0 0
        %1926 = vmatprep.subr.bf16.mxu0 0
        %1927 = vmatpush1.bf16.msra.mxu0 0
        %1928 = vmatprep.subr.bf16.mxu0 0
        %1929 = vmatpush1.bf16.msra.mxu0 0
        %1930 = vmatprep.mubr.bf16.mxu0 0
        %1931 = vmatmul.mubr.bf16.gmra.mrb[0].mxu0 %v1896
        %v1932 = vpop.f32.mrb[0].mxu0
        %v1933 = vadd.f32 %v1881, %v1932
        %v1934 = vpop.f32.mrb[0].mxu0
        %v1935 = vpop.f32.mrb[0].mxu0
        %v1936 = vpop.f32.mrb[0].mxu0
        %1937 = vdwg.mxu0
        %v1938 = vpack.c.bf16 %v624, %v623
        %v1943 = vunpack.c.l.b16 %v600
        %v1944 = vunpack.c.l.b16 %v601
        %v1945 = vunpack.c.l.b16 %v602
        %v1946 = vunpack.c.l.b16 %v603
        %v1947 = vpack.c.b16 %v1944, %v1943
        %v1948 = vpack.c.b16 %v1946, %v1945
        %1951 = vrot.lane.b32.xlu0 %v1881, 96
        %v1952 = vpop.permute.xlu0 %1951
        %v1955 = vsel %vm625, %v1938, 0
        %1957 = vmatprep.subr.bf16.mxu0 0
        %1958 = vmatpush1.bf16.msra.mxu0 %v1947
        %1959 = vmatprep.subr.bf16.mxu0 0
        %1960 = vmatpush1.bf16.msra.mxu0 %v1948
        %1961 = vmatprep.subr.bf16.mxu0 0
        %1962 = vmatpush1.bf16.msra.mxu0 0
        %1963 = vmatprep.subr.bf16.mxu0 0
        %1964 = vmatpush1.bf16.msra.mxu0 0
        %1965 = vmatprep.subr.bf16.mxu0 0
        %1966 = vmatpush1.bf16.msra.mxu0 0
        %1967 = vmatprep.subr.bf16.mxu0 0
        %1968 = vmatpush1.bf16.msra.mxu0 0
        %1969 = vmatprep.subr.bf16.mxu0 0
        %1970 = vmatpush1.bf16.msra.mxu0 0
        %1971 = vmatprep.subr.bf16.mxu0 0
        %1972 = vmatpush1.bf16.msra.mxu0 0
        %1973 = vmatprep.subr.bf16.mxu0 0
        %1974 = vmatpush1.bf16.msra.mxu0 0
        %1975 = vmatprep.subr.bf16.mxu0 0
        %1976 = vmatpush1.bf16.msra.mxu0 0
        %1977 = vmatprep.subr.bf16.mxu0 0
        %1978 = vmatpush1.bf16.msra.mxu0 0
        %1979 = vmatprep.subr.bf16.mxu0 0
        %1980 = vmatpush1.bf16.msra.mxu0 0
        %1981 = vmatprep.subr.bf16.mxu0 0
        %1982 = vmatpush1.bf16.msra.mxu0 0
        %1983 = vmatprep.subr.bf16.mxu0 0
        %1984 = vmatpush1.bf16.msra.mxu0 0
        %1985 = vmatprep.subr.bf16.mxu0 0
        %1986 = vmatpush1.bf16.msra.mxu0 0
        %1987 = vmatprep.subr.bf16.mxu0 0
        %1988 = vmatpush1.bf16.msra.mxu0 0
        %1989 = vmatprep.mubr.bf16.mxu0 0
        %1990 = vmatmul.mubr.bf16.gmra.mrb[0].mxu0 %v1955
        %v1991 = vpop.f32.mrb[0].mxu0
        %v1992 = vadd.f32 %v1952, %v1991
        %v1993 = vpop.f32.mrb[0].mxu0
        %v1994 = vpop.f32.mrb[0].mxu0
        %v1995 = vadd.f32 %v1952, %v1994
        %v1996 = vpop.f32.mrb[0].mxu0
        %1997 = vdwg.mxu0
        %v1998 = vpack.c.bf16 %v1933, %v1933
        %2000 = vrot.lane.b32.xlu0 %v1998, 120
        %v2001 = vpop.permute.xlu0 %2000
        %2002 = vrot.lane.b32.xlu0 %v1998, 112
        %v2003 = vpop.permute.xlu0 %2002
        %2004 = vrot.lane.b32.xlu0 %v1998, 104
        %v2005 = vpop.permute.xlu0 %2004
        %v2007 = vunpack.c.l.s4 1983009808
        %v2008 = vunpack.c.0.s8 %v2007
        %v2009 = vlaneseq
        %v2010 = vshrl.u32 %v2009, 7
        %v2011 = vsub.s32 %v2008, %v2010
        %v2012 = vrot.slane %v1998, %v2011
        %v2015 = vunpack.c.l.s4 1983009808
        %v2016 = vunpack.c.0.s8 %v2015
        %v2017 = vlaneseq
        %v2018 = vshrl.u32 %v2017, 7
        %v2019 = vsub.s32 %v2016, %v2018
        %v2020 = vrot.slane %v2003, %v2019
        %v2021 = vcombine.low %v2012, %v2020
        %v2022 = vcombine.high %v2012, %v2020
        %v2024 = vunpack.c.l.s4 1934713408
        %v2025 = vunpack.c.0.s8 %v2024
        %v2026 = vlaneseq
        %v2027 = vshrl.u32 %v2026, 7
        %v2028 = vsub.s32 %v2025, %v2027
        %v2029 = vrot.slane %v2021, %v2028
        %v2031 = vunpack.c.l.s4 1934713408
        %v2032 = vunpack.c.0.s8 %v2031
        %v2033 = vlaneseq
        %v2034 = vshrl.u32 %v2033, 7
        %v2035 = vsub.s32 %v2032, %v2034
        %v2036 = vrot.slane %v2022, %v2035
        %v2037 = vcombine.high %v2029, 0
        %v2038 = vcombine.high %v2036, 0
        %v2041 = vunpack.c.l.s4 1983009808
        %v2042 = vunpack.c.0.s8 %v2041
        %v2043 = vlaneseq
        %v2044 = vshrl.u32 %v2043, 7
        %v2045 = vsub.s32 %v2042, %v2044
        %v2046 = vrot.slane %v2001, %v2045
        %v2049 = vunpack.c.l.s4 1983009808
        %v2050 = vunpack.c.0.s8 %v2049
        %v2051 = vlaneseq
        %v2052 = vshrl.u32 %v2051, 7
        %v2053 = vsub.s32 %v2050, %v2052
        %v2054 = vrot.slane %v2005, %v2053
        %v2055 = vcombine.low %v2046, %v2054
        %v2056 = vcombine.high %v2046, %v2054
        %v2058 = vunpack.c.l.s4 1934713408
        %v2059 = vunpack.c.0.s8 %v2058
        %v2060 = vlaneseq
        %v2061 = vshrl.u32 %v2060, 7
        %v2062 = vsub.s32 %v2059, %v2061
        %v2063 = vrot.slane %v2055, %v2062
        %v2065 = vunpack.c.l.s4 1934713408
        %v2066 = vunpack.c.0.s8 %v2065
        %v2067 = vlaneseq
        %v2068 = vshrl.u32 %v2067, 7
        %v2069 = vsub.s32 %v2066, %v2068
        %v2070 = vrot.slane %v2056, %v2069
        %v2071 = vcombine.high %v2063, 0
        %v2072 = vcombine.high %v2070, 0
        %v2075 = vpack.i.b16 %v2063, %v2029
        %v2077 = vshrl.u32 %v2029, 16
        %v2078 = vshrl.u32 %v2063, 16
        %v2079 = vpack.i.b16 %v2078, %v2077
        %v2083 = vpack.i.b16 %v2071, %v2037
        %v2085 = vshrl.u32 %v2037, 16
        %v2086 = vshrl.u32 %v2071, 16
        %v2087 = vpack.i.b16 %v2086, %v2085
        %v2091 = vpack.i.b16 %v2070, %v2036
        %v2093 = vshrl.u32 %v2036, 16
        %v2094 = vshrl.u32 %v2070, 16
        %v2095 = vpack.i.b16 %v2094, %v2093
        %v2099 = vpack.i.b16 %v2072, %v2038
        %v2101 = vshrl.u32 %v2038, 16
        %v2102 = vshrl.u32 %v2072, 16
        %v2103 = vpack.i.b16 %v2102, %v2101
        %v2105 = vcombine.low %v2075, %v2091
        %v2107 = vunpack.c.l.s4 1983009808
        %v2108 = vunpack.c.0.s8 %v2107
        %v2109 = vlaneseq
        %v2110 = vshrl.u32 %v2109, 7
        %v2111 = vsub.s32 %v2108, %v2110
        %v2112 = vrot.slane %v2105, %v2111
        %v2113 = vcombine.low %v2083, %v2099
        %v2115 = vunpack.c.l.s4 1983009808
        %v2116 = vunpack.c.0.s8 %v2115
        %v2117 = vlaneseq
        %v2118 = vshrl.u32 %v2117, 7
        %v2119 = vsub.s32 %v2116, %v2118
        %v2120 = vrot.slane %v2113, %v2119
        %v2121 = vcombine.low %v2112, %v2120
        %v2123 = vunpack.c.l.s4 1934713408
        %v2124 = vunpack.c.0.s8 %v2123
        %v2125 = vlaneseq
        %v2126 = vshrl.u32 %v2125, 7
        %v2127 = vsub.s32 %v2124, %v2126
        %v2128 = vrot.slane %v2121, %v2127
        %v2129 = vcombine.high %v2128, 0
        %v2130 = vcombine.low %v2079, %v2095
        %v2132 = vunpack.c.l.s4 1983009808
        %v2133 = vunpack.c.0.s8 %v2132
        %v2134 = vlaneseq
        %v2135 = vshrl.u32 %v2134, 7
        %v2136 = vsub.s32 %v2133, %v2135
        %v2137 = vrot.slane %v2130, %v2136
        %v2138 = vcombine.low %v2087, %v2103
        %v2140 = vunpack.c.l.s4 1983009808
        %v2141 = vunpack.c.0.s8 %v2140
        %v2142 = vlaneseq
        %v2143 = vshrl.u32 %v2142, 7
        %v2144 = vsub.s32 %v2141, %v2143
        %v2145 = vrot.slane %v2138, %v2144
        %v2146 = vcombine.low %v2137, %v2145
        %v2148 = vunpack.c.l.s4 1934713408
        %v2149 = vunpack.c.0.s8 %v2148
        %v2150 = vlaneseq
        %v2151 = vshrl.u32 %v2150, 7
        %v2152 = vsub.s32 %v2149, %v2151
        %v2153 = vrot.slane %v2146, %v2152
        %v2154 = vcombine.high %v2153, 0
        %v2157 = vpack.i.b16 %v2153, %v2128
        %v2158 = vshrl.u32 %v2128, 16
        %v2159 = vshrl.u32 %v2153, 16
        %v2160 = vpack.i.b16 %v2159, %v2158
        %v2163 = vpack.i.b16 %v2154, %v2129
        %v2164 = vshrl.u32 %v2129, 16
        %v2165 = vshrl.u32 %v2154, 16
        %v2166 = vpack.i.b16 %v2165, %v2164
        %v2167 = vpack.c.bf16 %v1995, %v1992
        %2169 = vrot.lane.b32.xlu0 %v2167, 120
        %v2170 = vpop.permute.xlu0 %2169
        %2171 = vrot.lane.b32.xlu0 %v2167, 112
        %v2172 = vpop.permute.xlu0 %2171
        %2173 = vrot.lane.b32.xlu0 %v2167, 104
        %v2174 = vpop.permute.xlu0 %2173
        %v2177 = vpack.i.b16 %v2170, %v2167
        %v2179 = vshrl.u32 %v2167, 16
        %v2180 = vshrl.u32 %v2170, 16
        %v2181 = vpack.i.b16 %v2180, %v2179
        %v2185 = vpack.i.b16 %v2174, %v2172
        %v2187 = vshrl.u32 %v2172, 16
        %v2188 = vshrl.u32 %v2174, 16
        %v2189 = vpack.i.b16 %v2188, %v2187
        %v2192 = vpack.i.b16 0, 0
        %v2194 = vshrl.u32 0, 16
        %v2195 = vpack.i.b16 %v2194, %v2194
        %v2197 = vcombine.high %v2177, %v2192
        %v2199 = vunpack.c.l.s4 1983009808
        %v2200 = vunpack.c.0.s8 %v2199
        %v2201 = vlaneseq
        %v2202 = vshrl.u32 %v2201, 7
        %v2203 = vsub.s32 %v2200, %v2202
        %v2204 = vrot.slane %v2177, %v2203
        %v2206 = vunpack.c.l.s4 1983009808
        %v2207 = vunpack.c.0.s8 %v2206
        %v2208 = vlaneseq
        %v2209 = vshrl.u32 %v2208, 7
        %v2210 = vsub.s32 %v2207, %v2209
        %v2211 = vrot.slane %v2197, %v2210
        %v2212 = vcombine.high %v2185, %v2192
        %v2214 = vunpack.c.l.s4 1983009808
        %v2215 = vunpack.c.0.s8 %v2214
        %v2216 = vlaneseq
        %v2217 = vshrl.u32 %v2216, 7
        %v2218 = vsub.s32 %v2215, %v2217
        %v2219 = vrot.slane %v2185, %v2218
        %v2221 = vunpack.c.l.s4 1983009808
        %v2222 = vunpack.c.0.s8 %v2221
        %v2223 = vlaneseq
        %v2224 = vshrl.u32 %v2223, 7
        %v2225 = vsub.s32 %v2222, %v2224
        %v2226 = vrot.slane %v2212, %v2225
        %v2227 = vcombine.low %v2204, %v2219
        %v2228 = vcombine.high %v2204, %v2219
        %v2230 = vunpack.c.l.s4 1934713408
        %v2231 = vunpack.c.0.s8 %v2230
        %v2232 = vlaneseq
        %v2233 = vshrl.u32 %v2232, 7
        %v2234 = vsub.s32 %v2231, %v2233
        %v2235 = vrot.slane %v2227, %v2234
        %v2237 = vunpack.c.l.s4 1934713408
        %v2238 = vunpack.c.0.s8 %v2237
        %v2239 = vlaneseq
        %v2240 = vshrl.u32 %v2239, 7
        %v2241 = vsub.s32 %v2238, %v2240
        %v2242 = vrot.slane %v2228, %v2241
        %v2243 = vcombine.low %v2211, %v2226
        %v2244 = vcombine.high %v2211, %v2226
        %v2246 = vunpack.c.l.s4 1934713408
        %v2247 = vunpack.c.0.s8 %v2246
        %v2248 = vlaneseq
        %v2249 = vshrl.u32 %v2248, 7
        %v2250 = vsub.s32 %v2247, %v2249
        %v2251 = vrot.slane %v2243, %v2250
        %v2253 = vunpack.c.l.s4 1934713408
        %v2254 = vunpack.c.0.s8 %v2253
        %v2255 = vlaneseq
        %v2256 = vshrl.u32 %v2255, 7
        %v2257 = vsub.s32 %v2254, %v2256
        %v2258 = vrot.slane %v2244, %v2257
        %v2259 = vcombine.high %v2235, 0
        %v2260 = vcombine.high %v2242, 0
        %v2261 = vcombine.high %v2251, 0
        %v2262 = vcombine.high %v2258, 0
        %v2263 = vcombine.high %v2181, %v2195
        %v2265 = vunpack.c.l.s4 1983009808
        %v2266 = vunpack.c.0.s8 %v2265
        %v2267 = vlaneseq
        %v2268 = vshrl.u32 %v2267, 7
        %v2269 = vsub.s32 %v2266, %v2268
        %v2270 = vrot.slane %v2181, %v2269
        %v2272 = vunpack.c.l.s4 1983009808
        %v2273 = vunpack.c.0.s8 %v2272
        %v2274 = vlaneseq
        %v2275 = vshrl.u32 %v2274, 7
        %v2276 = vsub.s32 %v2273, %v2275
        %v2277 = vrot.slane %v2263, %v2276
        %v2278 = vcombine.high %v2189, %v2195
        %v2280 = vunpack.c.l.s4 1983009808
        %v2281 = vunpack.c.0.s8 %v2280
        %v2282 = vlaneseq
        %v2283 = vshrl.u32 %v2282, 7
        %v2284 = vsub.s32 %v2281, %v2283
        %v2285 = vrot.slane %v2189, %v2284
        %v2287 = vunpack.c.l.s4 1983009808
        %v2288 = vunpack.c.0.s8 %v2287
        %v2289 = vlaneseq
        %v2290 = vshrl.u32 %v2289, 7
        %v2291 = vsub.s32 %v2288, %v2290
        %v2292 = vrot.slane %v2278, %v2291
        %v2293 = vcombine.low %v2270, %v2285
        %v2294 = vcombine.high %v2270, %v2285
        %v2296 = vunpack.c.l.s4 1934713408
        %v2297 = vunpack.c.0.s8 %v2296
        %v2298 = vlaneseq
        %v2299 = vshrl.u32 %v2298, 7
        %v2300 = vsub.s32 %v2297, %v2299
        %v2301 = vrot.slane %v2293, %v2300
        %v2303 = vunpack.c.l.s4 1934713408
        %v2304 = vunpack.c.0.s8 %v2303
        %v2305 = vlaneseq
        %v2306 = vshrl.u32 %v2305, 7
        %v2307 = vsub.s32 %v2304, %v2306
        %v2308 = vrot.slane %v2294, %v2307
        %v2309 = vcombine.low %v2277, %v2292
        %v2310 = vcombine.high %v2277, %v2292
        %v2312 = vunpack.c.l.s4 1934713408
        %v2313 = vunpack.c.0.s8 %v2312
        %v2314 = vlaneseq
        %v2315 = vshrl.u32 %v2314, 7
        %v2316 = vsub.s32 %v2313, %v2315
        %v2317 = vrot.slane %v2309, %v2316
        %v2319 = vunpack.c.l.s4 1934713408
        %v2320 = vunpack.c.0.s8 %v2319
        %v2321 = vlaneseq
        %v2322 = vshrl.u32 %v2321, 7
        %v2323 = vsub.s32 %v2320, %v2322
        %v2324 = vrot.slane %v2310, %v2323
        %v2325 = vcombine.high %v2301, 0
        %v2326 = vcombine.high %v2308, 0
        %v2327 = vcombine.high %v2317, 0
        %v2328 = vcombine.high %v2324, 0
        %v2329 = vcombine.low %v2235, %v2242
        %v2331 = vunpack.c.l.s4 1983009808
        %v2332 = vunpack.c.0.s8 %v2331
        %v2333 = vlaneseq
        %v2334 = vshrl.u32 %v2333, 7
        %v2335 = vsub.s32 %v2332, %v2334
        %v2336 = vrot.slane %v2329, %v2335
        %v2337 = vcombine.low %v2259, %v2260
        %v2339 = vunpack.c.l.s4 1983009808
        %v2340 = vunpack.c.0.s8 %v2339
        %v2341 = vlaneseq
        %v2342 = vshrl.u32 %v2341, 7
        %v2343 = vsub.s32 %v2340, %v2342
        %v2344 = vrot.slane %v2337, %v2343
        %v2345 = vcombine.low %v2251, %v2258
        %v2347 = vunpack.c.l.s4 1983009808
        %v2348 = vunpack.c.0.s8 %v2347
        %v2349 = vlaneseq
        %v2350 = vshrl.u32 %v2349, 7
        %v2351 = vsub.s32 %v2348, %v2350
        %v2352 = vrot.slane %v2345, %v2351
        %v2353 = vcombine.low %v2261, %v2262
        %v2355 = vunpack.c.l.s4 1983009808
        %v2356 = vunpack.c.0.s8 %v2355
        %v2357 = vlaneseq
        %v2358 = vshrl.u32 %v2357, 7
        %v2359 = vsub.s32 %v2356, %v2358
        %v2360 = vrot.slane %v2353, %v2359
        %v2361 = vcombine.low %v2336, %v2344
        %v2363 = vunpack.c.l.s4 1934713408
        %v2364 = vunpack.c.0.s8 %v2363
        %v2365 = vlaneseq
        %v2366 = vshrl.u32 %v2365, 7
        %v2367 = vsub.s32 %v2364, %v2366
        %v2368 = vrot.slane %v2361, %v2367
        %v2369 = vcombine.low %v2352, %v2360
        %v2371 = vunpack.c.l.s4 1934713408
        %v2372 = vunpack.c.0.s8 %v2371
        %v2373 = vlaneseq
        %v2374 = vshrl.u32 %v2373, 7
        %v2375 = vsub.s32 %v2372, %v2374
        %v2376 = vrot.slane %v2369, %v2375
        %v2377 = vcombine.low %v2368, %v2376
        %v2378 = vcombine.high %v2368, %v2376
        %v2379 = vcombine.low %v2301, %v2308
        %v2381 = vunpack.c.l.s4 1983009808
        %v2382 = vunpack.c.0.s8 %v2381
        %v2383 = vlaneseq
        %v2384 = vshrl.u32 %v2383, 7
        %v2385 = vsub.s32 %v2382, %v2384
        %v2386 = vrot.slane %v2379, %v2385
        %v2387 = vcombine.low %v2325, %v2326
        %v2389 = vunpack.c.l.s4 1983009808
        %v2390 = vunpack.c.0.s8 %v2389
        %v2391 = vlaneseq
        %v2392 = vshrl.u32 %v2391, 7
        %v2393 = vsub.s32 %v2390, %v2392
        %v2394 = vrot.slane %v2387, %v2393
        %v2395 = vcombine.low %v2317, %v2324
        %v2397 = vunpack.c.l.s4 1983009808
        %v2398 = vunpack.c.0.s8 %v2397
        %v2399 = vlaneseq
        %v2400 = vshrl.u32 %v2399, 7
        %v2401 = vsub.s32 %v2398, %v2400
        %v2402 = vrot.slane %v2395, %v2401
        %v2403 = vcombine.low %v2327, %v2328
        %v2405 = vunpack.c.l.s4 1983009808
        %v2406 = vunpack.c.0.s8 %v2405
        %v2407 = vlaneseq
        %v2408 = vshrl.u32 %v2407, 7
        %v2409 = vsub.s32 %v2406, %v2408
        %v2410 = vrot.slane %v2403, %v2409
        %v2411 = vcombine.low %v2386, %v2394
        %v2413 = vunpack.c.l.s4 1934713408
        %v2414 = vunpack.c.0.s8 %v2413
        %v2415 = vlaneseq
        %v2416 = vshrl.u32 %v2415, 7
        %v2417 = vsub.s32 %v2414, %v2416
        %v2418 = vrot.slane %v2411, %v2417
        %v2419 = vcombine.low %v2402, %v2410
        %v2421 = vunpack.c.l.s4 1934713408
        %v2422 = vunpack.c.0.s8 %v2421
        %v2423 = vlaneseq
        %v2424 = vshrl.u32 %v2423, 7
        %v2425 = vsub.s32 %v2422, %v2424
        %v2426 = vrot.slane %v2419, %v2425
        %v2427 = vcombine.low %v2418, %v2426
        %v2428 = vcombine.high %v2418, %v2426
        %v2431 = vpack.i.b16 %v2427, %v2377
        %v2432 = vshrl.u32 %v2377, 16
        %v2433 = vshrl.u32 %v2427, 16
        %v2434 = vpack.i.b16 %v2433, %v2432
        %v2437 = vpack.i.b16 %v2428, %v2378
        %v2438 = vshrl.u32 %v2378, 16
        %v2439 = vshrl.u32 %v2428, 16
        %v2440 = vpack.i.b16 %v2439, %v2438
        %2441 = vrot.lane.b32.xlu0 %v2167, 96
        %v2442 = vpop.permute.xlu0 %2441
        %2443 = vrot.lane.b32.xlu0 %v2170, 96
        %v2444 = vpop.permute.xlu0 %2443
        %2445 = vrot.lane.b32.xlu0 %v2172, 96
        %v2446 = vpop.permute.xlu0 %2445
        %2447 = vrot.lane.b32.xlu0 %v2174, 96
        %v2448 = vpop.permute.xlu0 %2447
        %v2451 = vpack.i.b16 %v2444, %v2442
        %v2453 = vshrl.u32 %v2442, 16
        %v2454 = vshrl.u32 %v2444, 16
        %v2455 = vpack.i.b16 %v2454, %v2453
        %v2459 = vpack.i.b16 %v2448, %v2446
        %v2461 = vshrl.u32 %v2446, 16
        %v2462 = vshrl.u32 %v2448, 16
        %v2463 = vpack.i.b16 %v2462, %v2461
        %v2465 = vcombine.high %v2451, %v2192
        %v2467 = vunpack.c.l.s4 1983009808
        %v2468 = vunpack.c.0.s8 %v2467
        %v2469 = vlaneseq
        %v2470 = vshrl.u32 %v2469, 7
        %v2471 = vsub.s32 %v2468, %v2470
        %v2472 = vrot.slane %v2451, %v2471
        %v2474 = vunpack.c.l.s4 1983009808
        %v2475 = vunpack.c.0.s8 %v2474
        %v2476 = vlaneseq
        %v2477 = vshrl.u32 %v2476, 7
        %v2478 = vsub.s32 %v2475, %v2477
        %v2479 = vrot.slane %v2465, %v2478
        %v2480 = vcombine.high %v2459, %v2192
        %v2482 = vunpack.c.l.s4 1983009808
        %v2483 = vunpack.c.0.s8 %v2482
        %v2484 = vlaneseq
        %v2485 = vshrl.u32 %v2484, 7
        %v2486 = vsub.s32 %v2483, %v2485
        %v2487 = vrot.slane %v2459, %v2486
        %v2489 = vunpack.c.l.s4 1983009808
        %v2490 = vunpack.c.0.s8 %v2489
        %v2491 = vlaneseq
        %v2492 = vshrl.u32 %v2491, 7
        %v2493 = vsub.s32 %v2490, %v2492
        %v2494 = vrot.slane %v2480, %v2493
        %v2495 = vcombine.low %v2472, %v2487
        %v2496 = vcombine.high %v2472, %v2487
        %v2498 = vunpack.c.l.s4 1934713408
        %v2499 = vunpack.c.0.s8 %v2498
        %v2500 = vlaneseq
        %v2501 = vshrl.u32 %v2500, 7
        %v2502 = vsub.s32 %v2499, %v2501
        %v2503 = vrot.slane %v2495, %v2502
        %v2505 = vunpack.c.l.s4 1934713408
        %v2506 = vunpack.c.0.s8 %v2505
        %v2507 = vlaneseq
        %v2508 = vshrl.u32 %v2507, 7
        %v2509 = vsub.s32 %v2506, %v2508
        %v2510 = vrot.slane %v2496, %v2509
        %v2511 = vcombine.low %v2479, %v2494
        %v2512 = vcombine.high %v2479, %v2494
        %v2514 = vunpack.c.l.s4 1934713408
        %v2515 = vunpack.c.0.s8 %v2514
        %v2516 = vlaneseq
        %v2517 = vshrl.u32 %v2516, 7
        %v2518 = vsub.s32 %v2515, %v2517
        %v2519 = vrot.slane %v2511, %v2518
        %v2521 = vunpack.c.l.s4 1934713408
        %v2522 = vunpack.c.0.s8 %v2521
        %v2523 = vlaneseq
        %v2524 = vshrl.u32 %v2523, 7
        %v2525 = vsub.s32 %v2522, %v2524
        %v2526 = vrot.slane %v2512, %v2525
        %v2527 = vcombine.high %v2503, 0
        %v2528 = vcombine.high %v2510, 0
        %v2529 = vcombine.high %v2519, 0
        %v2530 = vcombine.high %v2526, 0
        %v2531 = vcombine.high %v2455, %v2195
        %v2533 = vunpack.c.l.s4 1983009808
        %v2534 = vunpack.c.0.s8 %v2533
        %v2535 = vlaneseq
        %v2536 = vshrl.u32 %v2535, 7
        %v2537 = vsub.s32 %v2534, %v2536
        %v2538 = vrot.slane %v2455, %v2537
        %v2540 = vunpack.c.l.s4 1983009808
        %v2541 = vunpack.c.0.s8 %v2540
        %v2542 = vlaneseq
        %v2543 = vshrl.u32 %v2542, 7
        %v2544 = vsub.s32 %v2541, %v2543
        %v2545 = vrot.slane %v2531, %v2544
        %v2546 = vcombine.high %v2463, %v2195
        %v2548 = vunpack.c.l.s4 1983009808
        %v2549 = vunpack.c.0.s8 %v2548
        %v2550 = vlaneseq
        %v2551 = vshrl.u32 %v2550, 7
        %v2552 = vsub.s32 %v2549, %v2551
        %v2553 = vrot.slane %v2463, %v2552
        %v2555 = vunpack.c.l.s4 1983009808
        %v2556 = vunpack.c.0.s8 %v2555
        %v2557 = vlaneseq
        %v2558 = vshrl.u32 %v2557, 7
        %v2559 = vsub.s32 %v2556, %v2558
        %v2560 = vrot.slane %v2546, %v2559
        %v2561 = vcombine.low %v2538, %v2553
        %v2562 = vcombine.high %v2538, %v2553
        %v2564 = vunpack.c.l.s4 1934713408
        %v2565 = vunpack.c.0.s8 %v2564
        %v2566 = vlaneseq
        %v2567 = vshrl.u32 %v2566, 7
        %v2568 = vsub.s32 %v2565, %v2567
        %v2569 = vrot.slane %v2561, %v2568
        %v2571 = vunpack.c.l.s4 1934713408
        %v2572 = vunpack.c.0.s8 %v2571
        %v2573 = vlaneseq
        %v2574 = vshrl.u32 %v2573, 7
        %v2575 = vsub.s32 %v2572, %v2574
        %v2576 = vrot.slane %v2562, %v2575
        %v2577 = vcombine.low %v2545, %v2560
        %v2578 = vcombine.high %v2545, %v2560
        %v2580 = vunpack.c.l.s4 1934713408
        %v2581 = vunpack.c.0.s8 %v2580
        %v2582 = vlaneseq
        %v2583 = vshrl.u32 %v2582, 7
        %v2584 = vsub.s32 %v2581, %v2583
        %v2585 = vrot.slane %v2577, %v2584
        %v2587 = vunpack.c.l.s4 1934713408
        %v2588 = vunpack.c.0.s8 %v2587
        %v2589 = vlaneseq
        %v2590 = vshrl.u32 %v2589, 7
        %v2591 = vsub.s32 %v2588, %v2590
        %v2592 = vrot.slane %v2578, %v2591
        %v2593 = vcombine.high %v2569, 0
        %v2594 = vcombine.high %v2576, 0
        %v2595 = vcombine.high %v2585, 0
        %v2596 = vcombine.high %v2592, 0
        %v2597 = vcombine.low %v2503, %v2510
        %v2599 = vunpack.c.l.s4 1983009808
        %v2600 = vunpack.c.0.s8 %v2599
        %v2601 = vlaneseq
        %v2602 = vshrl.u32 %v2601, 7
        %v2603 = vsub.s32 %v2600, %v2602
        %v2604 = vrot.slane %v2597, %v2603
        %v2605 = vcombine.low %v2527, %v2528
        %v2607 = vunpack.c.l.s4 1983009808
        %v2608 = vunpack.c.0.s8 %v2607
        %v2609 = vlaneseq
        %v2610 = vshrl.u32 %v2609, 7
        %v2611 = vsub.s32 %v2608, %v2610
        %v2612 = vrot.slane %v2605, %v2611
        %v2613 = vcombine.low %v2519, %v2526
        %v2615 = vunpack.c.l.s4 1983009808
        %v2616 = vunpack.c.0.s8 %v2615
        %v2617 = vlaneseq
        %v2618 = vshrl.u32 %v2617, 7
        %v2619 = vsub.s32 %v2616, %v2618
        %v2620 = vrot.slane %v2613, %v2619
        %v2621 = vcombine.low %v2529, %v2530
        %v2623 = vunpack.c.l.s4 1983009808
        %v2624 = vunpack.c.0.s8 %v2623
        %v2625 = vlaneseq
        %v2626 = vshrl.u32 %v2625, 7
        %v2627 = vsub.s32 %v2624, %v2626
        %v2628 = vrot.slane %v2621, %v2627
        %v2629 = vcombine.low %v2604, %v2612
        %v2631 = vunpack.c.l.s4 1934713408
        %v2632 = vunpack.c.0.s8 %v2631
        %v2633 = vlaneseq
        %v2634 = vshrl.u32 %v2633, 7
        %v2635 = vsub.s32 %v2632, %v2634
        %v2636 = vrot.slane %v2629, %v2635
        %v2637 = vcombine.low %v2620, %v2628
        %v2639 = vunpack.c.l.s4 1934713408
        %v2640 = vunpack.c.0.s8 %v2639
        %v2641 = vlaneseq
        %v2642 = vshrl.u32 %v2641, 7
        %v2643 = vsub.s32 %v2640, %v2642
        %v2644 = vrot.slane %v2637, %v2643
        %v2645 = vcombine.low %v2636, %v2644
        %v2646 = vcombine.high %v2636, %v2644
        %v2647 = vcombine.low %v2569, %v2576
        %v2649 = vunpack.c.l.s4 1983009808
        %v2650 = vunpack.c.0.s8 %v2649
        %v2651 = vlaneseq
        %v2652 = vshrl.u32 %v2651, 7
        %v2653 = vsub.s32 %v2650, %v2652
        %v2654 = vrot.slane %v2647, %v2653
        %v2655 = vcombine.low %v2593, %v2594
        %v2657 = vunpack.c.l.s4 1983009808
        %v2658 = vunpack.c.0.s8 %v2657
        %v2659 = vlaneseq
        %v2660 = vshrl.u32 %v2659, 7
        %v2661 = vsub.s32 %v2658, %v2660
        %v2662 = vrot.slane %v2655, %v2661
        %v2663 = vcombine.low %v2585, %v2592
        %v2665 = vunpack.c.l.s4 1983009808
        %v2666 = vunpack.c.0.s8 %v2665
        %v2667 = vlaneseq
        %v2668 = vshrl.u32 %v2667, 7
        %v2669 = vsub.s32 %v2666, %v2668
        %v2670 = vrot.slane %v2663, %v2669
        %v2671 = vcombine.low %v2595, %v2596
        %v2673 = vunpack.c.l.s4 1983009808
        %v2674 = vunpack.c.0.s8 %v2673
        %v2675 = vlaneseq
        %v2676 = vshrl.u32 %v2675, 7
        %v2677 = vsub.s32 %v2674, %v2676
        %v2678 = vrot.slane %v2671, %v2677
        %v2679 = vcombine.low %v2654, %v2662
        %v2681 = vunpack.c.l.s4 1934713408
        %v2682 = vunpack.c.0.s8 %v2681
        %v2683 = vlaneseq
        %v2684 = vshrl.u32 %v2683, 7
        %v2685 = vsub.s32 %v2682, %v2684
        %v2686 = vrot.slane %v2679, %v2685
        %v2687 = vcombine.low %v2670, %v2678
        %v2689 = vunpack.c.l.s4 1934713408
        %v2690 = vunpack.c.0.s8 %v2689
        %v2691 = vlaneseq
        %v2692 = vshrl.u32 %v2691, 7
        %v2693 = vsub.s32 %v2690, %v2692
        %v2694 = vrot.slane %v2687, %v2693
        %v2695 = vcombine.low %v2686, %v2694
        %v2696 = vcombine.high %v2686, %v2694
        %v2699 = vpack.i.b16 %v2695, %v2645
        %v2701 = vshrl.u32 %v2645, 16
        %v2702 = vshrl.u32 %v2695, 16
        %v2703 = vpack.i.b16 %v2702, %v2701
        %v2707 = vpack.i.b16 %v2696, %v2646
        %v2709 = vshrl.u32 %v2646, 16
        %v2710 = vshrl.u32 %v2696, 16
        %v2711 = vpack.i.b16 %v2710, %v2709
        %v2714 = vsel %vm1221, %v2157, 0
        %v2717 = vsel %vm1221, %v2431, 0
        %2719 = vmatprep.subr.bf16.mxu0 0
        %2720 = vmatpush1.bf16.xpose.msra.mxu0 %v2717
        %2721 = vmatprep.subr.bf16.mxu0 0
        %2722 = vmatpush1.bf16.xpose.msra.mxu0 0
        %2723 = vmatprep.subr.bf16.mxu0 0
        %2724 = vmatpush1.bf16.xpose.msra.mxu0 0
        %2725 = vmatprep.subr.bf16.mxu0 0
        %2726 = vmatpush1.bf16.xpose.msra.mxu0 0
        %2727 = vmatprep.subr.bf16.mxu0 0
        %2728 = vmatpush1.bf16.xpose.msra.mxu0 0
        %2729 = vmatprep.subr.bf16.mxu0 0
        %2730 = vmatpush1.bf16.xpose.msra.mxu0 0
        %2731 = vmatprep.subr.bf16.mxu0 0
        %2732 = vmatpush1.bf16.xpose.msra.mxu0 0
        %2733 = vmatprep.subr.bf16.mxu0 0
        %2734 = vmatpush1.bf16.xpose.msra.mxu0 0
        %2735 = vmatprep.subr.bf16.mxu0 0
        %2736 = vmatpush1.bf16.xpose.msra.mxu0 0
        %2737 = vmatprep.subr.bf16.mxu0 0
        %2738 = vmatpush1.bf16.xpose.msra.mxu0 0
        %2739 = vmatprep.subr.bf16.mxu0 0
        %2740 = vmatpush1.bf16.xpose.msra.mxu0 0
        %2741 = vmatprep.subr.bf16.mxu0 0
        %2742 = vmatpush1.bf16.xpose.msra.mxu0 0
        %2743 = vmatprep.subr.bf16.mxu0 0
        %2744 = vmatpush1.bf16.xpose.msra.mxu0 0
        %2745 = vmatprep.subr.bf16.mxu0 0
        %2746 = vmatpush1.bf16.xpose.msra.mxu0 0
        %2747 = vmatprep.subr.bf16.mxu0 0
        %2748 = vmatpush1.bf16.xpose.msra.mxu0 0
        %2749 = vmatprep.subr.bf16.mxu0 0
        %2750 = vmatpush1.bf16.xpose.msra.mxu0 0
        %2751 = vmatprep.mubr.bf16.mxu0 0
        %2752 = vmatmul.mubr.bf16.gmra.mrb[0].mxu0 %v2714
        %v2753 = vpop.f32.mrb[0].mxu0
        %v2754 = vadd.f32 0.0, %v2753
        %v2755 = vpop.f32.mrb[0].mxu0
        %v2756 = vpop.f32.mrb[0].mxu0
        %v2757 = vpop.f32.mrb[0].mxu0
        %2758 = vdwg.mxu0
        %v2760 = vsel %vm1221, %v2160, 0
        %v2763 = vsel %vm1221, %v2434, 0
        %2765 = vmatprep.subr.bf16.mxu0 0
        %2766 = vmatpush1.bf16.xpose.msra.mxu0 %v2763
        %2767 = vmatprep.subr.bf16.mxu0 0
        %2768 = vmatpush1.bf16.xpose.msra.mxu0 0
        %2769 = vmatprep.subr.bf16.mxu0 0
        %2770 = vmatpush1.bf16.xpose.msra.mxu0 0
        %2771 = vmatprep.subr.bf16.mxu0 0
        %2772 = vmatpush1.bf16.xpose.msra.mxu0 0
        %2773 = vmatprep.subr.bf16.mxu0 0
        %2774 = vmatpush1.bf16.xpose.msra.mxu0 0
        %2775 = vmatprep.subr.bf16.mxu0 0
        %2776 = vmatpush1.bf16.xpose.msra.mxu0 0
        %2777 = vmatprep.subr.bf16.mxu0 0
        %2778 = vmatpush1.bf16.xpose.msra.mxu0 0
        %2779 = vmatprep.subr.bf16.mxu0 0
        %2780 = vmatpush1.bf16.xpose.msra.mxu0 0
        %2781 = vmatprep.subr.bf16.mxu0 0
        %2782 = vmatpush1.bf16.xpose.msra.mxu0 0
        %2783 = vmatprep.subr.bf16.mxu0 0
        %2784 = vmatpush1.bf16.xpose.msra.mxu0 0
        %2785 = vmatprep.subr.bf16.mxu0 0
        %2786 = vmatpush1.bf16.xpose.msra.mxu0 0
        %2787 = vmatprep.subr.bf16.mxu0 0
        %2788 = vmatpush1.bf16.xpose.msra.mxu0 0
        %2789 = vmatprep.subr.bf16.mxu0 0
        %2790 = vmatpush1.bf16.xpose.msra.mxu0 0
        %2791 = vmatprep.subr.bf16.mxu0 0
        %2792 = vmatpush1.bf16.xpose.msra.mxu0 0
        %2793 = vmatprep.subr.bf16.mxu0 0
        %2794 = vmatpush1.bf16.xpose.msra.mxu0 0
        %2795 = vmatprep.subr.bf16.mxu0 0
        %2796 = vmatpush1.bf16.xpose.msra.mxu0 0
        %2797 = vmatprep.mubr.bf16.mxu0 0
        %2798 = vmatmul.mubr.bf16.gmra.mrb[0].mxu0 %v2760
        %v2799 = vpop.f32.mrb[0].mxu0
        %v2800 = vadd.f32 0.0, %v2799
        %v2801 = vpop.f32.mrb[0].mxu0
        %v2802 = vpop.f32.mrb[0].mxu0
        %v2803 = vpop.f32.mrb[0].mxu0
        %2804 = vdwg.mxu0
        %v2806 = vsel %vm1221, %v2163, 0
        %v2809 = vsel %vm1221, %v2437, 0
        %2811 = vmatprep.subr.bf16.mxu0 0
        %2812 = vmatpush1.bf16.xpose.msra.mxu0 %v2809
        %2813 = vmatprep.subr.bf16.mxu0 0
        %2814 = vmatpush1.bf16.xpose.msra.mxu0 0
        %2815 = vmatprep.subr.bf16.mxu0 0
        %2816 = vmatpush1.bf16.xpose.msra.mxu0 0
        %2817 = vmatprep.subr.bf16.mxu0 0
        %2818 = vmatpush1.bf16.xpose.msra.mxu0 0
        %2819 = vmatprep.subr.bf16.mxu0 0
        %2820 = vmatpush1.bf16.xpose.msra.mxu0 0
        %2821 = vmatprep.subr.bf16.mxu0 0
        %2822 = vmatpush1.bf16.xpose.msra.mxu0 0
        %2823 = vmatprep.subr.bf16.mxu0 0
        %2824 = vmatpush1.bf16.xpose.msra.mxu0 0
        %2825 = vmatprep.subr.bf16.mxu0 0
        %2826 = vmatpush1.bf16.xpose.msra.mxu0 0
        %2827 = vmatprep.subr.bf16.mxu0 0
        %2828 = vmatpush1.bf16.xpose.msra.mxu0 0
        %2829 = vmatprep.subr.bf16.mxu0 0
        %2830 = vmatpush1.bf16.xpose.msra.mxu0 0
        %2831 = vmatprep.subr.bf16.mxu0 0
        %2832 = vmatpush1.bf16.xpose.msra.mxu0 0
        %2833 = vmatprep.subr.bf16.mxu0 0
        %2834 = vmatpush1.bf16.xpose.msra.mxu0 0
        %2835 = vmatprep.subr.bf16.mxu0 0
        %2836 = vmatpush1.bf16.xpose.msra.mxu0 0
        %2837 = vmatprep.subr.bf16.mxu0 0
        %2838 = vmatpush1.bf16.xpose.msra.mxu0 0
        %2839 = vmatprep.subr.bf16.mxu0 0
        %2840 = vmatpush1.bf16.xpose.msra.mxu0 0
        %2841 = vmatprep.subr.bf16.mxu0 0
        %2842 = vmatpush1.bf16.xpose.msra.mxu0 0
        %2843 = vmatprep.mubr.bf16.mxu0 0
        %2844 = vmatmul.mubr.bf16.gmra.mrb[0].mxu0 %v2806
        %v2845 = vpop.f32.mrb[0].mxu0
        %v2846 = vadd.f32 0.0, %v2845
        %v2847 = vpop.f32.mrb[0].mxu0
        %v2848 = vpop.f32.mrb[0].mxu0
        %v2849 = vpop.f32.mrb[0].mxu0
        %2850 = vdwg.mxu0
        %v2852 = vsel %vm1221, %v2166, 0
        %v2855 = vsel %vm1221, %v2440, 0
        %2857 = vmatprep.subr.bf16.mxu0 0
        %2858 = vmatpush1.bf16.xpose.msra.mxu0 %v2855
        %2859 = vmatprep.subr.bf16.mxu0 0
        %2860 = vmatpush1.bf16.xpose.msra.mxu0 0
        %2861 = vmatprep.subr.bf16.mxu0 0
        %2862 = vmatpush1.bf16.xpose.msra.mxu0 0
        %2863 = vmatprep.subr.bf16.mxu0 0
        %2864 = vmatpush1.bf16.xpose.msra.mxu0 0
        %2865 = vmatprep.subr.bf16.mxu0 0
        %2866 = vmatpush1.bf16.xpose.msra.mxu0 0
        %2867 = vmatprep.subr.bf16.mxu0 0
        %2868 = vmatpush1.bf16.xpose.msra.mxu0 0
        %2869 = vmatprep.subr.bf16.mxu0 0
        %2870 = vmatpush1.bf16.xpose.msra.mxu0 0
        %2871 = vmatprep.subr.bf16.mxu0 0
        %2872 = vmatpush1.bf16.xpose.msra.mxu0 0
        %2873 = vmatprep.subr.bf16.mxu0 0
        %2874 = vmatpush1.bf16.xpose.msra.mxu0 0
        %2875 = vmatprep.subr.bf16.mxu0 0
        %2876 = vmatpush1.bf16.xpose.msra.mxu0 0
        %2877 = vmatprep.subr.bf16.mxu0 0
        %2878 = vmatpush1.bf16.xpose.msra.mxu0 0
        %2879 = vmatprep.subr.bf16.mxu0 0
        %2880 = vmatpush1.bf16.xpose.msra.mxu0 0
        %2881 = vmatprep.subr.bf16.mxu0 0
        %2882 = vmatpush1.bf16.xpose.msra.mxu0 0
        %2883 = vmatprep.subr.bf16.mxu0 0
        %2884 = vmatpush1.bf16.xpose.msra.mxu0 0
        %2885 = vmatprep.subr.bf16.mxu0 0
        %2886 = vmatpush1.bf16.xpose.msra.mxu0 0
        %2887 = vmatprep.subr.bf16.mxu0 0
        %2888 = vmatpush1.bf16.xpose.msra.mxu0 0
        %2889 = vmatprep.mubr.bf16.mxu0 0
        %2890 = vmatmul.mubr.bf16.gmra.mrb[0].mxu0 %v2852
        %v2891 = vpop.f32.mrb[0].mxu0
        %v2892 = vadd.f32 0.0, %v2891
        %v2893 = vpop.f32.mrb[0].mxu0
        %v2894 = vpop.f32.mrb[0].mxu0
        %v2895 = vpop.f32.mrb[0].mxu0
        %2896 = vdwg.mxu0
        %v2897 = vsel %vm1788, %v2754, -inf
        %2898 = vmax.xlane.f32.xlu0 %v2897
        %v2899 = vpop.xlane.xlu0 %2898
        %v2900 = vsel %vm1788, %v2800, -inf
        %2901 = vmax.xlane.f32.xlu0 %v2900
        %v2902 = vpop.xlane.xlu0 %2901
        %v2903 = vsel %vm1788, %v2846, -inf
        %2904 = vmax.xlane.f32.xlu0 %v2903
        %v2905 = vpop.xlane.xlu0 %2904
        %v2906 = vsel %vm1788, %v2892, -inf
        %2907 = vmax.xlane.f32.xlu0 %v2906
        %v2908 = vpop.xlane.xlu0 %2907
        %v2909 = vsub.f32 %v2754, %v2899
        %v2910 = vsub.f32 %v2800, %v2902
        %v2911 = vsub.f32 %v2846, %v2905
        %v2912 = vsub.f32 %v2892, %v2908
        %v2913 = vmul.f32 %v2909, 1.442695
        %v2914 = vpow.pop %v2913
        %v2915 = vmul.f32 %v2910, 1.442695
        %v2916 = vpow.pop %v2915
        %v2917 = vmul.f32 %v2911, 1.442695
        %v2918 = vpow.pop %v2917
        %v2919 = vmul.f32 %v2912, 1.442695
        %v2920 = vpow.pop %v2919
        %v2921 = vsel %vm1788, %v2914, 0.0
        %2922 = vadd.xlane.f32.xlu0 %v2921
        %v2923 = vpop.xlane.xlu0 %2922
        %v2924 = vsel %vm1788, %v2916, 0.0
        %2925 = vadd.xlane.f32.xlu0 %v2924
        %v2926 = vpop.xlane.xlu0 %2925
        %v2927 = vsel %vm1788, %v2918, 0.0
        %2928 = vadd.xlane.f32.xlu0 %v2927
        %v2929 = vpop.xlane.xlu0 %2928
        %v2930 = vsel %vm1788, %v2920, 0.0
        %2931 = vadd.xlane.f32.xlu0 %v2930
        %v2932 = vpop.xlane.xlu0 %2931
        %v2933 = vrcp.pop %v2923
        %v2934 = vrcp.pop %v2926
        %v2935 = vrcp.pop %v2929
        %v2936 = vrcp.pop %v2932
        %v2937 = vmul.f32 %v2914, %v2933
        %v2938 = vmul.f32 %v2916, %v2934
        %v2939 = vmul.f32 %v2918, %v2935
        %v2940 = vmul.f32 %v2920, %v2936
        %v2941 = vpack.c.bf16 %v2937, %v2937
        %v2942 = vpack.c.bf16 %v2938, %v2938
        %v2943 = vpack.c.bf16 %v2939, %v2939
        %v2944 = vpack.c.bf16 %v2940, %v2940
        %v2946 = vsel %vm1788, %v2941, 0
        %2948 = vmatprep.subr.bf16.mxu0 0
        %2949 = vmatpush1.bf16.msra.mxu0 %v2699
        %2950 = vmatprep.subr.bf16.mxu0 0
        %2951 = vmatpush1.bf16.msra.mxu0 0
        %2952 = vmatprep.subr.bf16.mxu0 0
        %2953 = vmatpush1.bf16.msra.mxu0 0
        %2954 = vmatprep.subr.bf16.mxu0 0
        %2955 = vmatpush1.bf16.msra.mxu0 0
        %2956 = vmatprep.subr.bf16.mxu0 0
        %2957 = vmatpush1.bf16.msra.mxu0 0
        %2958 = vmatprep.subr.bf16.mxu0 0
        %2959 = vmatpush1.bf16.msra.mxu0 0
        %2960 = vmatprep.subr.bf16.mxu0 0
        %2961 = vmatpush1.bf16.msra.mxu0 0
        %2962 = vmatprep.subr.bf16.mxu0 0
        %2963 = vmatpush1.bf16.msra.mxu0 0
        %2964 = vmatprep.subr.bf16.mxu0 0
        %2965 = vmatpush1.bf16.msra.mxu0 0
        %2966 = vmatprep.subr.bf16.mxu0 0
        %2967 = vmatpush1.bf16.msra.mxu0 0
        %2968 = vmatprep.subr.bf16.mxu0 0
        %2969 = vmatpush1.bf16.msra.mxu0 0
        %2970 = vmatprep.subr.bf16.mxu0 0
        %2971 = vmatpush1.bf16.msra.mxu0 0
        %2972 = vmatprep.subr.bf16.mxu0 0
        %2973 = vmatpush1.bf16.msra.mxu0 0
        %2974 = vmatprep.subr.bf16.mxu0 0
        %2975 = vmatpush1.bf16.msra.mxu0 0
        %2976 = vmatprep.subr.bf16.mxu0 0
        %2977 = vmatpush1.bf16.msra.mxu0 0
        %2978 = vmatprep.subr.bf16.mxu0 0
        %2979 = vmatpush1.bf16.msra.mxu0 0
        %2980 = vmatprep.mubr.bf16.mxu0 0
        %2981 = vmatmul.mubr.bf16.gmra.mrb[0].mxu0 %v2946
        %v2982 = vpop.f32.mrb[0].mxu0
        %v2983 = vadd.f32 0.0, %v2982
        %v2984 = vpop.f32.mrb[0].mxu0
        %v2985 = vpop.f32.mrb[0].mxu0
        %v2986 = vpop.f32.mrb[0].mxu0
        %2987 = vdwg.mxu0
        %v2989 = vsel %vm1788, %v2942, 0
        %2991 = vmatprep.subr.bf16.mxu0 0
        %2992 = vmatpush1.bf16.msra.mxu0 %v2703
        %2993 = vmatprep.subr.bf16.mxu0 0
        %2994 = vmatpush1.bf16.msra.mxu0 0
        %2995 = vmatprep.subr.bf16.mxu0 0
        %2996 = vmatpush1.bf16.msra.mxu0 0
        %2997 = vmatprep.subr.bf16.mxu0 0
        %2998 = vmatpush1.bf16.msra.mxu0 0
        %2999 = vmatprep.subr.bf16.mxu0 0
        %3000 = vmatpush1.bf16.msra.mxu0 0
        %3001 = vmatprep.subr.bf16.mxu0 0
        %3002 = vmatpush1.bf16.msra.mxu0 0
        %3003 = vmatprep.subr.bf16.mxu0 0
        %3004 = vmatpush1.bf16.msra.mxu0 0
        %3005 = vmatprep.subr.bf16.mxu0 0
        %3006 = vmatpush1.bf16.msra.mxu0 0
        %3007 = vmatprep.subr.bf16.mxu0 0
        %3008 = vmatpush1.bf16.msra.mxu0 0
        %3009 = vmatprep.subr.bf16.mxu0 0
        %3010 = vmatpush1.bf16.msra.mxu0 0
        %3011 = vmatprep.subr.bf16.mxu0 0
        %3012 = vmatpush1.bf16.msra.mxu0 0
        %3013 = vmatprep.subr.bf16.mxu0 0
        %3014 = vmatpush1.bf16.msra.mxu0 0
        %3015 = vmatprep.subr.bf16.mxu0 0
        %3016 = vmatpush1.bf16.msra.mxu0 0
        %3017 = vmatprep.subr.bf16.mxu0 0
        %3018 = vmatpush1.bf16.msra.mxu0 0
        %3019 = vmatprep.subr.bf16.mxu0 0
        %3020 = vmatpush1.bf16.msra.mxu0 0
        %3021 = vmatprep.subr.bf16.mxu0 0
        %3022 = vmatpush1.bf16.msra.mxu0 0
        %3023 = vmatprep.mubr.bf16.mxu0 0
        %3024 = vmatmul.mubr.bf16.gmra.mrb[0].mxu0 %v2989
        %v3025 = vpop.f32.mrb[0].mxu0
        %v3026 = vadd.f32 0.0, %v3025
        %v3027 = vpop.f32.mrb[0].mxu0
        %v3028 = vpop.f32.mrb[0].mxu0
        %v3029 = vpop.f32.mrb[0].mxu0
        %3030 = vdwg.mxu0
        %v3032 = vsel %vm1788, %v2943, 0
        %3034 = vmatprep.subr.bf16.mxu0 0
        %3035 = vmatpush1.bf16.msra.mxu0 %v2707
        %3036 = vmatprep.subr.bf16.mxu0 0
        %3037 = vmatpush1.bf16.msra.mxu0 0
        %3038 = vmatprep.subr.bf16.mxu0 0
        %3039 = vmatpush1.bf16.msra.mxu0 0
        %3040 = vmatprep.subr.bf16.mxu0 0
        %3041 = vmatpush1.bf16.msra.mxu0 0
        %3042 = vmatprep.subr.bf16.mxu0 0
        %3043 = vmatpush1.bf16.msra.mxu0 0
        %3044 = vmatprep.subr.bf16.mxu0 0
        %3045 = vmatpush1.bf16.msra.mxu0 0
        %3046 = vmatprep.subr.bf16.mxu0 0
        %3047 = vmatpush1.bf16.msra.mxu0 0
        %3048 = vmatprep.subr.bf16.mxu0 0
        %3049 = vmatpush1.bf16.msra.mxu0 0
        %3050 = vmatprep.subr.bf16.mxu0 0
        %3051 = vmatpush1.bf16.msra.mxu0 0
        %3052 = vmatprep.subr.bf16.mxu0 0
        %3053 = vmatpush1.bf16.msra.mxu0 0
        %3054 = vmatprep.subr.bf16.mxu0 0
        %3055 = vmatpush1.bf16.msra.mxu0 0
        %3056 = vmatprep.subr.bf16.mxu0 0
        %3057 = vmatpush1.bf16.msra.mxu0 0
        %3058 = vmatprep.subr.bf16.mxu0 0
        %3059 = vmatpush1.bf16.msra.mxu0 0
        %3060 = vmatprep.subr.bf16.mxu0 0
        %3061 = vmatpush1.bf16.msra.mxu0 0
        %3062 = vmatprep.subr.bf16.mxu0 0
        %3063 = vmatpush1.bf16.msra.mxu0 0
        %3064 = vmatprep.subr.bf16.mxu0 0
        %3065 = vmatpush1.bf16.msra.mxu0 0
        %3066 = vmatprep.mubr.bf16.mxu0 0
        %3067 = vmatmul.mubr.bf16.gmra.mrb[0].mxu0 %v3032
        %v3068 = vpop.f32.mrb[0].mxu0
        %v3069 = vadd.f32 0.0, %v3068
        %v3070 = vpop.f32.mrb[0].mxu0
        %v3071 = vpop.f32.mrb[0].mxu0
        %v3072 = vpop.f32.mrb[0].mxu0
        %3073 = vdwg.mxu0
        %v3075 = vsel %vm1788, %v2944, 0
        %3077 = vmatprep.subr.bf16.mxu0 0
        %3078 = vmatpush1.bf16.msra.mxu0 %v2711
        %3079 = vmatprep.subr.bf16.mxu0 0
        %3080 = vmatpush1.bf16.msra.mxu0 0
        %3081 = vmatprep.subr.bf16.mxu0 0
        %3082 = vmatpush1.bf16.msra.mxu0 0
        %3083 = vmatprep.subr.bf16.mxu0 0
        %3084 = vmatpush1.bf16.msra.mxu0 0
        %3085 = vmatprep.subr.bf16.mxu0 0
        %3086 = vmatpush1.bf16.msra.mxu0 0
        %3087 = vmatprep.subr.bf16.mxu0 0
        %3088 = vmatpush1.bf16.msra.mxu0 0
        %3089 = vmatprep.subr.bf16.mxu0 0
        %3090 = vmatpush1.bf16.msra.mxu0 0
        %3091 = vmatprep.subr.bf16.mxu0 0
        %3092 = vmatpush1.bf16.msra.mxu0 0
        %3093 = vmatprep.subr.bf16.mxu0 0
        %3094 = vmatpush1.bf16.msra.mxu0 0
        %3095 = vmatprep.subr.bf16.mxu0 0
        %3096 = vmatpush1.bf16.msra.mxu0 0
        %3097 = vmatprep.subr.bf16.mxu0 0
        %3098 = vmatpush1.bf16.msra.mxu0 0
        %3099 = vmatprep.subr.bf16.mxu0 0
        %3100 = vmatpush1.bf16.msra.mxu0 0
        %3101 = vmatprep.subr.bf16.mxu0 0
        %3102 = vmatpush1.bf16.msra.mxu0 0
        %3103 = vmatprep.subr.bf16.mxu0 0
        %3104 = vmatpush1.bf16.msra.mxu0 0
        %3105 = vmatprep.subr.bf16.mxu0 0
        %3106 = vmatpush1.bf16.msra.mxu0 0
        %3107 = vmatprep.subr.bf16.mxu0 0
        %3108 = vmatpush1.bf16.msra.mxu0 0
        %3109 = vmatprep.mubr.bf16.mxu0 0
        %3110 = vmatmul.mubr.bf16.gmra.mrb[0].mxu0 %v3075
        %v3111 = vpop.f32.mrb[0].mxu0
        %v3112 = vadd.f32 0.0, %v3111
        %v3113 = vpop.f32.mrb[0].mxu0
        %v3114 = vpop.f32.mrb[0].mxu0
        %v3115 = vpop.f32.mrb[0].mxu0
        %3116 = vdwg.mxu0
        %v3117 = vcombine.low %v2983, %v3069
        %v3118 = vcombine.high %v2983, %v3069
        %v3120 = vunpack.c.l.s4 1983009808
        %v3121 = vunpack.c.0.s8 %v3120
        %v3122 = vlaneseq
        %v3123 = vshrl.u32 %v3122, 7
        %v3124 = vsub.s32 %v3121, %v3123
        %v3125 = vrot.slane %v3117, %v3124
        %v3127 = vunpack.c.l.s4 1983009808
        %v3128 = vunpack.c.0.s8 %v3127
        %v3129 = vlaneseq
        %v3130 = vshrl.u32 %v3129, 7
        %v3131 = vsub.s32 %v3128, %v3130
        %v3132 = vrot.slane %v3118, %v3131
        %v3133 = vcombine.low %v3026, %v3112
        %v3134 = vcombine.high %v3026, %v3112
        %v3136 = vunpack.c.l.s4 1983009808
        %v3137 = vunpack.c.0.s8 %v3136
        %v3138 = vlaneseq
        %v3139 = vshrl.u32 %v3138, 7
        %v3140 = vsub.s32 %v3137, %v3139
        %v3141 = vrot.slane %v3133, %v3140
        %v3143 = vunpack.c.l.s4 1983009808
        %v3144 = vunpack.c.0.s8 %v3143
        %v3145 = vlaneseq
        %v3146 = vshrl.u32 %v3145, 7
        %v3147 = vsub.s32 %v3144, %v3146
        %v3148 = vrot.slane %v3134, %v3147
        %v3149 = vcombine.low %v3125, %v3141
        %v3150 = vcombine.high %v3125, %v3141
        %v3152 = vunpack.c.l.s4 1934713408
        %v3153 = vunpack.c.0.s8 %v3152
        %v3154 = vlaneseq
        %v3155 = vshrl.u32 %v3154, 7
        %v3156 = vsub.s32 %v3153, %v3155
        %v3157 = vrot.slane %v3149, %v3156
        %v3159 = vunpack.c.l.s4 1934713408
        %v3160 = vunpack.c.0.s8 %v3159
        %v3161 = vlaneseq
        %v3162 = vshrl.u32 %v3161, 7
        %v3163 = vsub.s32 %v3160, %v3162
        %v3164 = vrot.slane %v3150, %v3163
        %v3165 = vcombine.low %v3132, %v3148
        %v3166 = vcombine.high %v3132, %v3148
        %v3168 = vunpack.c.l.s4 1934713408
        %v3169 = vunpack.c.0.s8 %v3168
        %v3170 = vlaneseq
        %v3171 = vshrl.u32 %v3170, 7
        %v3172 = vsub.s32 %v3169, %v3171
        %v3173 = vrot.slane %v3165, %v3172
        %v3175 = vunpack.c.l.s4 1934713408
        %v3176 = vunpack.c.0.s8 %v3175
        %v3177 = vlaneseq
        %v3178 = vshrl.u32 %v3177, 7
        %v3179 = vsub.s32 %v3176, %v3178
        %v3180 = vrot.slane %v3166, %v3179
        %v3181 = vcombine.high %v3157, 0.0
        %v3182 = vcombine.high %v3164, 0.0
        %v3183 = vcombine.high %v3173, 0.0
        %v3184 = vcombine.high %v3180, 0.0
        %v3185 = vcombine.low %v3157, %v3164
        %v3187 = vunpack.c.l.s4 1983009808
        %v3188 = vunpack.c.0.s8 %v3187
        %v3189 = vlaneseq
        %v3190 = vshrl.u32 %v3189, 7
        %v3191 = vsub.s32 %v3188, %v3190
        %v3192 = vrot.slane %v3185, %v3191
        %v3193 = vcombine.low %v3181, %v3182
        %v3195 = vunpack.c.l.s4 1983009808
        %v3196 = vunpack.c.0.s8 %v3195
        %v3197 = vlaneseq
        %v3198 = vshrl.u32 %v3197, 7
        %v3199 = vsub.s32 %v3196, %v3198
        %v3200 = vrot.slane %v3193, %v3199
        %v3201 = vcombine.low %v3173, %v3180
        %v3203 = vunpack.c.l.s4 1983009808
        %v3204 = vunpack.c.0.s8 %v3203
        %v3205 = vlaneseq
        %v3206 = vshrl.u32 %v3205, 7
        %v3207 = vsub.s32 %v3204, %v3206
        %v3208 = vrot.slane %v3201, %v3207
        %v3209 = vcombine.low %v3183, %v3184
        %v3211 = vunpack.c.l.s4 1983009808
        %v3212 = vunpack.c.0.s8 %v3211
        %v3213 = vlaneseq
        %v3214 = vshrl.u32 %v3213, 7
        %v3215 = vsub.s32 %v3212, %v3214
        %v3216 = vrot.slane %v3209, %v3215
        %v3217 = vcombine.low %v3192, %v3200
        %v3218 = vcombine.high %v3192, %v3200
        %v3220 = vunpack.c.l.s4 1934713408
        %v3221 = vunpack.c.0.s8 %v3220
        %v3222 = vlaneseq
        %v3223 = vshrl.u32 %v3222, 7
        %v3224 = vsub.s32 %v3221, %v3223
        %v3225 = vrot.slane %v3217, %v3224
        %v3227 = vunpack.c.l.s4 1934713408
        %v3228 = vunpack.c.0.s8 %v3227
        %v3229 = vlaneseq
        %v3230 = vshrl.u32 %v3229, 7
        %v3231 = vsub.s32 %v3228, %v3230
        %v3232 = vrot.slane %v3218, %v3231
        %v3233 = vcombine.low %v3208, %v3216
        %v3234 = vcombine.high %v3208, %v3216
        %v3236 = vunpack.c.l.s4 1934713408
        %v3237 = vunpack.c.0.s8 %v3236
        %v3238 = vlaneseq
        %v3239 = vshrl.u32 %v3238, 7
        %v3240 = vsub.s32 %v3237, %v3239
        %v3241 = vrot.slane %v3233, %v3240
        %v3243 = vunpack.c.l.s4 1934713408
        %v3244 = vunpack.c.0.s8 %v3243
        %v3245 = vlaneseq
        %v3246 = vshrl.u32 %v3245, 7
        %v3247 = vsub.s32 %v3244, %v3246
        %v3248 = vrot.slane %v3234, %v3247
        %v3249 = vcombine.low %v3225, %v3241
        %v3250 = vcombine.high %v3225, %v3241
        %v3251 = vcombine.low %v3232, %v3248
        %v3252 = vcombine.high %v3232, %v3248
        %3254 = vrot.lane.b32.xlu0 %v3250, 8
        %v3255 = vpop.permute.xlu0 %3254
        %3258 = vrot.lane.b32.xlu0 %v3251, 16
        %v3259 = vpop.permute.xlu0 %3258
        %3262 = vrot.lane.b32.xlu0 %v3252, 24
        %v3263 = vpop.permute.xlu0 %3262
        %v3265 = vsel %vm1221, %v3249, %v3255
        %v3266 = vsel %vm1788, %v3265, %v3259
        %v3267 = vsel %vm1790, %v3266, %v3263
        %v3268 = vpack.c.bf16 %v3267, %v3267
        %v3269 = vlaneseq
        %v3270 = vshrl.u32 %v3269, 7
        %v3271 = vsub.s32 7, %v3270
        %v3272 = vrot.slane %v584, %v3271
        %v3277 = vunpack.c.l.b16 %v605
        %v3278 = vunpack.c.l.b16 %v606
        %v3279 = vunpack.c.l.b16 %v607
        %v3280 = vunpack.c.l.b16 %v608
        %v3281 = vpack.c.b16 %v3278, %v3277
        %v3282 = vpack.c.b16 %v3280, %v3279
        %v3286 = vsel %vm625, %v3268, 0
        %3288 = vmatprep.subr.bf16.mxu0 0
        %3289 = vmatpush1.bf16.msra.mxu0 %v3281
        %3290 = vmatprep.subr.bf16.mxu0 0
        %3291 = vmatpush1.bf16.msra.mxu0 %v3282
        %3292 = vmatprep.subr.bf16.mxu0 0
        %3293 = vmatpush1.bf16.msra.mxu0 0
        %3294 = vmatprep.subr.bf16.mxu0 0
        %3295 = vmatpush1.bf16.msra.mxu0 0
        %3296 = vmatprep.subr.bf16.mxu0 0
        %3297 = vmatpush1.bf16.msra.mxu0 0
        %3298 = vmatprep.subr.bf16.mxu0 0
        %3299 = vmatpush1.bf16.msra.mxu0 0
        %3300 = vmatprep.subr.bf16.mxu0 0
        %3301 = vmatpush1.bf16.msra.mxu0 0
        %3302 = vmatprep.subr.bf16.mxu0 0
        %3303 = vmatpush1.bf16.msra.mxu0 0
        %3304 = vmatprep.subr.bf16.mxu0 0
        %3305 = vmatpush1.bf16.msra.mxu0 0
        %3306 = vmatprep.subr.bf16.mxu0 0
        %3307 = vmatpush1.bf16.msra.mxu0 0
        %3308 = vmatprep.subr.bf16.mxu0 0
        %3309 = vmatpush1.bf16.msra.mxu0 0
        %3310 = vmatprep.subr.bf16.mxu0 0
        %3311 = vmatpush1.bf16.msra.mxu0 0
        %3312 = vmatprep.subr.bf16.mxu0 0
        %3313 = vmatpush1.bf16.msra.mxu0 0
        %3314 = vmatprep.subr.bf16.mxu0 0
        %3315 = vmatpush1.bf16.msra.mxu0 0
        %3316 = vmatprep.subr.bf16.mxu0 0
        %3317 = vmatpush1.bf16.msra.mxu0 0
        %3318 = vmatprep.subr.bf16.mxu0 0
        %3319 = vmatpush1.bf16.msra.mxu0 0
        %3320 = vmatprep.mubr.bf16.mxu0 0
        %3321 = vmatmul.mubr.bf16.gmra.mrb[0].mxu0 %v3286
        %v3322 = vpop.f32.mrb[0].mxu0
        %v3323 = vadd.f32 %v3272, %v3322
        %v3324 = vpop.f32.mrb[0].mxu0
        %v3325 = vpop.f32.mrb[0].mxu0
        %v3326 = vpop.f32.mrb[0].mxu0
        %3327 = vdwg.mxu0
        %v3328 = vadd.f32 %v1852, %v3323
        %v3329 = vsel %vm625, %v3328, 0.0
        %3330 = vadd.xlane.f32.xlu0 %v3329
        %v3331 = vpop.xlane.xlu0 %3330
        %v3332 = vmul.f32 %v3331, %v629
        %v3333 = vsub.f32 %v3328, %v3332
        %v3334 = vmul.f32 %v3333, %v3333
        %v3335 = vsel %vm625, %v3334, 0.0
        %3336 = vadd.xlane.f32.xlu0 %v3335
        %v3337 = vpop.xlane.xlu0 %3336
        %v3338 = vmul.f32 %v3337, %v629
        %v3339 = vadd.f32 %v3338, 1e-05
        %v3340 = vrsqrt.pop %v3339
        %v3341 = vmul.f32 %v3333, %v3340
        %v3342 = vlaneseq
        %v3343 = vshrl.u32 %v3342, 7
        %v3344 = vsub.s32 4, %v3343
        %v3345 = vrot.slane %v584, %v3344
        %v3346 = vmul.f32 %v3341, %v3345
        %v3347 = vlaneseq
        %v3348 = vshrl.u32 %v3347, 7
        %v3349 = vsub.s32 5, %v3348
        %v3350 = vrot.slane %v584, %v3349
        %v3351 = vadd.f32 %v3346, %v3350
        %v3352 = vpack.c.bf16 %v3351, %v3351
        %v3354 = vlaneseq
        %v3355 = vshrl.u32 %v3354, 7
        %v3356 = vsub.s32 0, %v3355
        %v3357 = vrot.slane %v613, %v3356
        %v3363 = vunpack.c.l.b16 %v609
        %v3364 = vunpack.c.l.b16 %v610
        %v3365 = vunpack.c.l.b16 %v611
        %v3366 = vunpack.c.l.b16 %v612
        %v3367 = vpack.c.b16 %v3364, %v3363
        %v3368 = vpack.c.b16 %v3366, %v3365
        %v3372 = vsel %vm625, %v3352, 0
        %3374 = vmatprep.subr.bf16.mxu0 0
        %3375 = vmatpush1.bf16.msra.mxu0 %v3367
        %3376 = vmatprep.subr.bf16.mxu0 0
        %3377 = vmatpush1.bf16.msra.mxu0 %v3368
        %3378 = vmatprep.subr.bf16.mxu0 0
        %3379 = vmatpush1.bf16.msra.mxu0 0
        %3380 = vmatprep.subr.bf16.mxu0 0
        %3381 = vmatpush1.bf16.msra.mxu0 0
        %3382 = vmatprep.subr.bf16.mxu0 0
        %3383 = vmatpush1.bf16.msra.mxu0 0
        %3384 = vmatprep.subr.bf16.mxu0 0
        %3385 = vmatpush1.bf16.msra.mxu0 0
        %3386 = vmatprep.subr.bf16.mxu0 0
        %3387 = vmatpush1.bf16.msra.mxu0 0
        %3388 = vmatprep.subr.bf16.mxu0 0
        %3389 = vmatpush1.bf16.msra.mxu0 0
        %3390 = vmatprep.subr.bf16.mxu0 0
        %3391 = vmatpush1.bf16.msra.mxu0 0
        %3392 = vmatprep.subr.bf16.mxu0 0
        %3393 = vmatpush1.bf16.msra.mxu0 0
        %3394 = vmatprep.subr.bf16.mxu0 0
        %3395 = vmatpush1.bf16.msra.mxu0 0
        %3396 = vmatprep.subr.bf16.mxu0 0
        %3397 = vmatpush1.bf16.msra.mxu0 0
        %3398 = vmatprep.subr.bf16.mxu0 0
        %3399 = vmatpush1.bf16.msra.mxu0 0
        %3400 = vmatprep.subr.bf16.mxu0 0
        %3401 = vmatpush1.bf16.msra.mxu0 0
        %3402 = vmatprep.subr.bf16.mxu0 0
        %3403 = vmatpush1.bf16.msra.mxu0 0
        %3404 = vmatprep.subr.bf16.mxu0 0
        %3405 = vmatpush1.bf16.msra.mxu0 0
        %3406 = vmatprep.mubr.bf16.mxu0 0
        %3407 = vmatmul.mubr.bf16.gmra.mrb[0].mxu0 %v3372
        %v3408 = vpop.f32.mrb[0].mxu0
        %v3409 = vadd.f32 %v3357, %v3408
        %v3410 = vpop.f32.mrb[0].mxu0
        %v3411 = vpop.f32.mrb[0].mxu0
        %v3412 = vpop.f32.mrb[0].mxu0
        %3413 = vdwg.mxu0
        %v3414 = vmul.f32 %v3409, %v3409
        %v3415 = vmul.f32 %v3409, %v3414
        %v3416 = vmul.f32 %v3415, 0.044715
        %v3417 = vadd.f32 %v3409, %v3416
        %v3418 = vmul.f32 %v3417, 0.7978846
        %v3419 = vtanh.pop %v3418
        %v3420 = vadd.f32 %v3419, 1.0
        %v3421 = vmul.f32 %v3420, 0.5
        %v3422 = vmul.f32 %v3409, %v3421
        %v3423 = vpack.c.bf16 %v3422, %v3422
        %v3424 = vlaneseq
        %v3425 = vshrl.u32 %v3424, 7
        %v3426 = vsub.s32 0, %v3425
        %v3427 = vrot.slane %v585, %v3426
        %v3436 = vunpack.c.l.b16 %v614
        %v3437 = vunpack.c.l.b16 %v615
        %v3438 = vunpack.c.l.b16 %v616
        %v3439 = vunpack.c.l.b16 %v617
        %v3440 = vunpack.c.l.b16 %v618
        %v3441 = vunpack.c.l.b16 %v619
        %v3442 = vunpack.c.l.b16 %v620
        %v3443 = vunpack.c.l.b16 %v621
        %v3444 = vpack.c.b16 %v3437, %v3436
        %v3445 = vpack.c.b16 %v3439, %v3438
        %v3446 = vpack.c.b16 %v3441, %v3440
        %v3447 = vpack.c.b16 %v3443, %v3442
        %vm3452 = vcmask 523264
        %v3454 = vsel %vm3452, %v3423, 0
        %3456 = vmatprep.subr.bf16.mxu0 0
        %3457 = vmatpush1.bf16.msra.mxu0 %v3444
        %3458 = vmatprep.subr.bf16.mxu0 0
        %3459 = vmatpush1.bf16.msra.mxu0 %v3445
        %3460 = vmatprep.subr.bf16.mxu0 0
        %3461 = vmatpush1.bf16.msra.mxu0 %v3446
        %3462 = vmatprep.subr.bf16.mxu0 0
        %3463 = vmatpush1.bf16.msra.mxu0 %v3447
        %3464 = vmatprep.subr.bf16.mxu0 0
        %3465 = vmatpush1.bf16.msra.mxu0 0
        %3466 = vmatprep.subr.bf16.mxu0 0
        %3467 = vmatpush1.bf16.msra.mxu0 0
        %3468 = vmatprep.subr.bf16.mxu0 0
        %3469 = vmatpush1.bf16.msra.mxu0 0
        %3470 = vmatprep.subr.bf16.mxu0 0
        %3471 = vmatpush1.bf16.msra.mxu0 0
        %3472 = vmatprep.subr.bf16.mxu0 0
        %3473 = vmatpush1.bf16.msra.mxu0 0
        %3474 = vmatprep.subr.bf16.mxu0 0
        %3475 = vmatpush1.bf16.msra.mxu0 0
        %3476 = vmatprep.subr.bf16.mxu0 0
        %3477 = vmatpush1.bf16.msra.mxu0 0
        %3478 = vmatprep.subr.bf16.mxu0 0
        %3479 = vmatpush1.bf16.msra.mxu0 0
        %3480 = vmatprep.subr.bf16.mxu0 0
        %3481 = vmatpush1.bf16.msra.mxu0 0
        %3482 = vmatprep.subr.bf16.mxu0 0
        %3483 = vmatpush1.bf16.msra.mxu0 0
        %3484 = vmatprep.subr.bf16.mxu0 0
        %3485 = vmatpush1.bf16.msra.mxu0 0
        %3486 = vmatprep.subr.bf16.mxu0 0
        %3487 = vmatpush1.bf16.msra.mxu0 0
        %3488 = vmatprep.mubr.bf16.mxu0 0
        %3489 = vmatmul.mubr.bf16.gmra.mrb[0].mxu0 %v3454
        %v3490 = vpop.f32.mrb[0].mxu0
        %v3491 = vadd.f32 %v3427, %v3490
        %v3492 = vpop.f32.mrb[0].mxu0
        %v3493 = vpop.f32.mrb[0].mxu0
        %v3494 = vpop.f32.mrb[0].mxu0
        %3495 = vdwg.mxu0
        %v3496 = vadd.f32 %v3328, %v3491
        %3497 = vst.msk [vmem:[%s573] sm:$0xff] %vm625, %v3496
        %s3498 = sand.u32 %s344, 1
        %s3499 = scalar_lea.sflag [#allocation4], %s3498
        %s3500 = sand.u32 %s344, 1
        %s3501 = smul.addr %s3500, 8
        %s3502 = scalar_lea.vmem [#allocation14], %s3501
        // Predicated region
        $region105: #{tpu_custom_call.1} parent=75 // pred_check
          %p3503 = pneg %p354
        $region106: #{tpu_custom_call.1} parent=75 // pred_check_branch
          %3505 = sbr.rel (%p3503) target = $region108
        $region107: #{tpu_custom_call.1} parent=75 // pred_region
          %s3507 = ssub.s32 128, 128
          %3508 = vsyncadd %s3499, %s3507
          %s3509 = smul.addr %s32, 128
          %s3510 = scalar_lea.hbm %s14, %s3509
          %s3512 = sshll.u32 %s3502, 4
          %s3513 = int_to_ptr.vmem [resolvable:$true] %s3512
          %3515 = dma.vmem_to_hbm [thread:$0]  %s3513, 128, %s3510, %s3499
        $region108: #{tpu_custom_call.1} parent=75 // pred_fallthru
          _
      $region76: #{tpu_custom_call.1} parent=5 // pred_fallthru
        _
      %p3516 = scmp.le.s32.totalorder 2, %s27
      // Predicated region
      $region109: #{tpu_custom_call.1} parent=5 // pred_check
        %p3517 = pneg %p3516
      $region110: #{tpu_custom_call.1} parent=5 // pred_check_branch
        %3519 = sbr.rel (%p3517) target = $region112
      $region111: #{tpu_custom_call.1} parent=5 // pred_region
        %s3520 = ssub.s32 %s27, 2
        // Predicated region
        $region113: #{tpu_custom_call.1} parent=111 // pred_check
          %p3521 = pneg %p360
        $region114: #{tpu_custom_call.1} parent=111 // pred_check_branch
          %3523 = sbr.rel (%p3521) target = $region116
        $region115: #{tpu_custom_call.1} parent=111 // pred_region
          %s3524 = sand.u32 %s345, 1
          %s3525 = scalar_lea.sflag [#allocation4], %s3524
          %s3526 = sand.u32 %s345, 1
          %s3527 = smul.addr %s3526, 8
          %s3528 = scalar_lea.vmem [#allocation14], %s3527
          %3529 = dma.done %s3525, 128
        $region116: #{tpu_custom_call.1} parent=111 // pred_fallthru
          _
      $region112: #{tpu_custom_call.1} parent=5 // pred_fallthru
        _
    $region6: #{tpu_custom_call.1} parent=1 // loop_footer
      %s31 = sadd.s32 1, %s27
    $region7: #{tpu_custom_call.1} parent=1 // loop_footer_branch
      %26 = sbr.rel target = $region3
    $region8: #{tpu_custom_call.1} parent=1 // loop_exit
      _
    %3530 = vsyncpa [#allocation3], 1
    %s3531 = scalar_lea.sflag [#allocation3], 1
    %3532 = vsyncpa %s3531, 1
    %3533 = vsyncpa [#allocation6], 1
    %3534 = vsyncpa [#allocation9], 1
    %3535 = vsyncpa [#allocation12], 1
    %3536 = vsyncpa [#allocation4], 1
    %s3537 = scalar_lea.sflag [#allocation4], 1
    %3538 = vsyncpa %s3537, 1

</llo_original>
